<compile_context>
chip_gen: v7x
topology: tpu7x:2x2x1
jax: 0.10.0
libtpu: 0.0.40
codegen_flags: <defaults>
</compile_context>

<pallas_src>
import functools

import jax
import jax.numpy as jnp
from jax.experimental import pallas as pl
from jax.experimental.pallas import tpu as pltpu


def _vmem_limit_bytes():
    # v5e/v6e: 128 MiB physical -> 96 MiB scoped; v7x: 64 MiB physical -> 48 MiB.
    try:
        cap = pltpu.get_tpu_info().vmem_capacity_bytes
        return int(min(cap * 3 // 4, 96 * 1024 * 1024))
    except Exception:
        return 48 * 1024 * 1024


_VMEM_LIMIT_BYTES = _vmem_limit_bytes()

# Default tile caps (multiples of the native (8,128) vreg tile).  Weight-heavy
# calls override tm_cap per call (full-M for the LM head, 512 for the MLP).
_TM_CAP = 256    # activation rows (B*S)
_TN_CAP = 512    # output features (incl. padded vocab tiles for the lm head)
_TQ_CAP = 256    # attention query tile
_TK_CAP = 512    # attention key/value tile

_NEG_INF = -1e30  # mask fill / running-max init (f32-safe)


def _pick_tile(dim, cap, align=128):
    """Largest tile <= cap that divides `dim`, preferring `align`-multiples."""
    if dim <= cap:
        return dim
    t = (cap // align) * align
    while t >= align:
        if dim % t == 0:
            return t
        t -= align
    for t in range(cap, 0, -1):          # fallback: any sublane-aligned divisor
        if dim % t == 0 and t % 8 == 0:
            return t
    return dim


# ----------------------------------------------------------------------------
# Fused (LayerNorm?) -> matmul -> (+bias) -> (GELU?) -> (+residual?) kernel
# ----------------------------------------------------------------------------

def _fused_linear_kernel(*refs, has_ln, has_bias, has_res, act, eps):
    it = iter(refs)
    x_ref = next(it)
    w_ref = next(it)
    b_ref = next(it) if has_bias else None
    g_ref = next(it) if has_ln else None
    beta_ref = next(it) if has_ln else None
    r_ref = next(it) if has_res else None
    o_ref = next(it)

    if has_ln:                                               # fused LN prologue, f32 stats
        x = x_ref[...].astype(jnp.float32)                   # [tm, K]
        mu = jnp.mean(x, axis=-1, keepdims=True)
        var = jnp.mean(jnp.square(x - mu), axis=-1, keepdims=True)
        x = (x - mu) * jax.lax.rsqrt(var + eps)
        x = x * g_ref[...] + beta_ref[...]
        x_mx = x.astype(jnp.bfloat16)
    else:
        x_mx = x_ref[...].astype(jnp.bfloat16)

    # bf16 operands on the MXU, f32 accumulation.
    y = jnp.dot(x_mx, w_ref[...], preferred_element_type=jnp.float32)   # [tm, tn]
    if has_bias:
        y = y + b_ref[...]
    if act == "gelu":                                        # GPT-2 "gelu_new" (tanh)
        y = jax.nn.gelu(y, approximate=True)
    if has_res:                                              # fused residual-add epilogue
        y = y + r_ref[...].astype(jnp.float32)
    o_ref[...] = y.astype(o_ref.dtype)


def pallas_fused_linear(x, w, bias=None, ln=None, act=None, residual=None,
                        eps=1e-5, tm_cap=_TM_CAP, tn_cap=_TN_CAP,
                        out_dtype=jnp.bfloat16):
    """y = [LN](x) @ W (+b) [gelu] (+residual); W stored [in, out] (GPT-2 Conv1D)."""
    m, k = x.shape
    k2, n = w.shape
    assert k == k2, (x.shape, w.shape)

    # Pad odd N (e.g. real GPT-2 vocab 50257) up to a lane multiple so the
    # N-axis stays tileable; slice the logits back afterwards.
    n_pad = n
    if n > 128 and n % 128 != 0:
        n_pad = ((n + 127) // 128) * 128
        w = jnp.pad(w, ((0, 0), (0, n_pad - n)))
        if bias is not None:
            bias = jnp.pad(bias, (0, n_pad - n))

    tm = _pick_tile(m, tm_cap, 8)
    tn = _pick_tile(n_pad, tn_cap, 128)
    grid = (m // tm, n_pad // tn)

    in_specs = [
        pl.BlockSpec((tm, k), lambda i, j: (i, 0)),          # activations (K resident)
        pl.BlockSpec((k, tn), lambda i, j: (0, j)),          # weights streamed per N-tile
    ]
    inputs = [x.astype(jnp.bfloat16), w.astype(jnp.bfloat16)]
    if bias is not None:
        in_specs.append(pl.BlockSpec((1, tn), lambda i, j: (0, j)))
        inputs.append(bias.reshape(1, n_pad).astype(jnp.float32))
    if ln is not None:
        g, b2 = ln
        in_specs.append(pl.BlockSpec((1, k), lambda i, j: (0, 0)))
        in_specs.append(pl.BlockSpec((1, k), lambda i, j: (0, 0)))
        inputs.append(g.reshape(1, k).astype(jnp.float32))
        inputs.append(b2.reshape(1, k).astype(jnp.float32))
    if residual is not None:
        in_specs.append(pl.BlockSpec((tm, tn), lambda i, j: (i, j)))
        inputs.append(residual.astype(jnp.bfloat16))

    kern = functools.partial(
        _fused_linear_kernel,
        has_ln=ln is not None, has_bias=bias is not None,
        has_res=residual is not None, act=act, eps=eps)

    out = pl.pallas_call(
        kern,
        out_shape=jax.ShapeDtypeStruct((m, n_pad), out_dtype),
        grid=grid,
        in_specs=in_specs,
        out_specs=pl.BlockSpec((tm, tn), lambda i, j: (i, j)),
        compiler_params=pltpu.CompilerParams(
            dimension_semantics=("parallel", "parallel"),
            vmem_limit_bytes=_VMEM_LIMIT_BYTES),
    )(*inputs)
    if n_pad != n:
        out = out[:, :n]
    return out


# ----------------------------------------------------------------------------
# Standalone LayerNorm (used once before the LM head so the vocab-tiled matmul
# does not redo LN + cast per N-tile)
# ----------------------------------------------------------------------------

def _ln_kernel(x_ref, g_ref, b_ref, o_ref, *, eps):
    x = x_ref[...].astype(jnp.float32)
    mu = jnp.mean(x, axis=-1, keepdims=True)
    var = jnp.mean(jnp.square(x - mu), axis=-1, keepdims=True)
    y = (x - mu) * jax.lax.rsqrt(var + eps) * g_ref[...] + b_ref[...]
    o_ref[...] = y.astype(o_ref.dtype)


def pallas_layernorm(x, g, b, eps=1e-5, out_dtype=jnp.bfloat16):
    m, k = x.shape
    tm = _pick_tile(m, 512, 8)
    return pl.pallas_call(
        functools.partial(_ln_kernel, eps=eps),
        out_shape=jax.ShapeDtypeStruct((m, k), out_dtype),
        grid=(m // tm,),
        in_specs=[pl.BlockSpec((tm, k), lambda i: (i, 0)),
                  pl.BlockSpec((1, k), lambda i: (0, 0)),
                  pl.BlockSpec((1, k), lambda i: (0, 0))],
        out_specs=pl.BlockSpec((tm, k), lambda i: (i, 0)),
        compiler_params=pltpu.CompilerParams(
            dimension_semantics=("parallel",),
            vmem_limit_bytes=_VMEM_LIMIT_BYTES),
    )(x, g.reshape(1, k).astype(jnp.float32), b.reshape(1, k).astype(jnp.float32))


# ----------------------------------------------------------------------------
# Flash attention: q [B,S,D] + kv [B,S,2D] (bf16) -> out [B,S,D] (bf16)
# heads folded, lane-dense output; online softmax; causal tile early-exit.
# ----------------------------------------------------------------------------

def _flash_attn_kernel(q_ref, kv_ref, mask_ref, o_ref,
                       m_sc, l_sc, acc_sc, *, n_head, scale, tq, tk):
    qi = pl.program_id(1)
    ki = pl.program_id(2)

    @pl.when(ki == 0)
    def _():
        m_sc[...] = jnp.full_like(m_sc, _NEG_INF)
        l_sc[...] = jnp.zeros_like(l_sc)
        acc_sc[...] = jnp.zeros_like(acc_sc)

    D = o_ref.shape[-1]
    Dh = D // n_head
    q_off = qi * tq
    k_off = ki * tk

    # Causal early-exit: kv tiles entirely in the future contribute nothing.
    @pl.when(k_off <= q_off + tq - 1)
    def _():
        q_all = q_ref[...].reshape(tq, D)                     # bf16 [tq, D]
        kv_all = kv_ref[...].reshape(tk, 2 * D)               # bf16 [tk, 2D]
        pad = mask_ref[...].reshape(1, tk)                    # f32, 1=keep 0=pad

        rows = jax.lax.broadcasted_iota(jnp.int32, (tq, tk), 0) + q_off
        cols = jax.lax.broadcasted_iota(jnp.int32, (tq, tk), 1) + k_off
        keep = (rows >= cols) & (pad > 0.5)                   # causal + padding

        for h in range(n_head):                               # static unroll over heads
            # Fold 1/sqrt(Dh) into the (tq, Dh) Q operand (not the (tq, tk) scores).
            q = (q_all[:, h * Dh:(h + 1) * Dh].astype(jnp.float32)
                 * scale).astype(jnp.bfloat16)
            k = kv_all[:, h * Dh:(h + 1) * Dh]
            v = kv_all[:, D + h * Dh:D + (h + 1) * Dh]

            s = jax.lax.dot_general(q, k, (((1,), (1,)), ((), ())),
                                    preferred_element_type=jnp.float32)   # [tq, tk]

            m_prev = m_sc[h]                                   # [tq, 1]
            m_new = jnp.maximum(
                m_prev, jnp.max(jnp.where(keep, s, _NEG_INF), axis=-1, keepdims=True))
            alpha = jnp.exp(m_prev - m_new)
            # Masked entries contribute exactly 0 (also fixes fully-padded rows).
            p = jnp.where(keep, jnp.exp(s - m_new), 0.0)       # [tq, tk]

            l_sc[h] = alpha * l_sc[h] + jnp.sum(p, axis=-1, keepdims=True)
            acc_sc[h] = (alpha * acc_sc[h]
                         + jnp.dot(p.astype(jnp.bfloat16), v,
                                   preferred_element_type=jnp.float32))
            m_sc[h] = m_new

    @pl.when(ki == pl.num_programs(2) - 1)
    def _():
        outs = []
        for h in range(n_head):
            l = l_sc[h]                                        # [tq, 1]
            inv = pl.reciprocal(l, approx=True)                # EUP slot
            o_h = jnp.where(l > 0.0, acc_sc[h] * inv, 0.0)     # guard fully-masked rows
            outs.append(o_h)
        # Lane-dense, head-folded store: [1, tq, D] with D on the lane axis.
        o_ref[...] = jnp.concatenate(outs, axis=-1).reshape(1, tq, D).astype(o_ref.dtype)


def pallas_flash_attention(q, kv, pad_mask, n_head, scale):
    B, S, D = q.shape
    tq = _pick_tile(S, _TQ_CAP, 128)
    tk = _pick_tile(S, _TK_CAP, 128)
    Dh = D // n_head
    grid = (B, S // tq, S // tk)

    kern = functools.partial(_flash_attn_kernel,
                             n_head=n_head, scale=scale, tq=tq, tk=tk)
    return pl.pallas_call(
        kern,
        out_shape=jax.ShapeDtypeStruct((B, S, D), jnp.bfloat16),
        grid=grid,
        in_specs=[
            pl.BlockSpec((1, tq, D),     lambda b, qi, ki: (b, qi, 0)),   # Q rows (bf16)
            pl.BlockSpec((1, tk, 2 * D), lambda b, qi, ki: (b, ki, 0)),   # K/V rows (bf16)
            pl.BlockSpec((1, 1, tk),     lambda b, qi, ki: (b, 0, ki)),   # padding mask
        ],
        out_specs=pl.BlockSpec((1, tq, D), lambda b, qi, ki: (b, qi, 0)),
        scratch_shapes=[
            pltpu.VMEM((n_head, tq, 1), jnp.float32),    # running max m (head-major)
            pltpu.VMEM((n_head, tq, 1), jnp.float32),    # running sum l (head-major)
            pltpu.VMEM((n_head, tq, Dh), jnp.float32),   # output accumulator (head-major)
        ],
        compiler_params=pltpu.CompilerParams(
            dimension_semantics=("parallel", "parallel", "arbitrary"),
            vmem_limit_bytes=_VMEM_LIMIT_BYTES),
    )(q, kv, pad_mask)


# ----------------------------------------------------------------------------
# Model: deterministic parameter init + forward pass (glue in plain JAX)
# ----------------------------------------------------------------------------

def init_params(key, cfg):
    D = cfg["embed_dim"]
    V = cfg["vocab_size"]
    L = cfg["n_layer"]
    r = cfg["lora_r"]
    P = cfg["n_positions"]

    keys = iter(jax.random.split(key, 16 * L + 16))

    def nrm(shape, std=0.02, dtype=jnp.bfloat16):
        return (jax.random.normal(next(keys), shape, jnp.float32) * std).astype(dtype)

    params = {
        "wte": nrm((V, D)),
        "wpe": nrm((P, D)),
        "lnf_g": jnp.ones((D,), jnp.float32),
        "lnf_b": jnp.zeros((D,), jnp.float32),
        # nn.Linear(embed_dim, vocab_size, bias=False); stored [in, out] for x @ W
        "head_w": nrm((D, V)),
        "blocks": [],
    }
    for _ in range(L):
        blk = {
            "ln1_g": jnp.ones((D,), jnp.float32),
            "ln1_b": jnp.zeros((D,), jnp.float32),
            "c_attn_w": nrm((D, 3 * D)),
            "c_attn_b": jnp.zeros((3 * D,), jnp.float32),
            # LoRA adapter on c_attn (peft default target module for GPT-2); rank-r
            # factors kept in f32 (tiny).
            "lora_A": nrm((D, r), dtype=jnp.float32),
            "lora_B": nrm((r, 3 * D), dtype=jnp.float32),
            "attn_proj_w": nrm((D, D)),
            "attn_proj_b": jnp.zeros((D,), jnp.float32),
            "ln2_g": jnp.ones((D,), jnp.float32),
            "ln2_b": jnp.zeros((D,), jnp.float32),
            "mlp_fc_w": nrm((D, 4 * D)),
            "mlp_fc_b": jnp.zeros((4 * D,), jnp.float32),
            "mlp_proj_w": nrm((4 * D, D)),
            "mlp_proj_b": jnp.zeros((D,), jnp.float32),
        }
        params["blocks"].append(blk)
    return params


def chat_model_forward(params, input_ids, attention_mask, cfg):
    B, S = input_ids.shape
    D = cfg["embed_dim"]
    H = cfg["n_head"]
    V = cfg["vocab_size"]
    Dh = D // H
    lora_scale = cfg["lora_alpha"] / cfg["lora_r"]
    attn_scale = 1.0 / (Dh ** 0.5)
    M = B * S

    if attention_mask is None:
        attention_mask = jnp.ones((B, S), jnp.int32)

    # Embedding gather + position add: data-dependent gather left to XLA glue.
    x = params["wte"][input_ids] + params["wpe"][:S][None, :, :]        # bf16 [B, S, D]
    x2d = x.reshape(M, D).astype(jnp.bfloat16)

    pad_mask = attention_mask.astype(jnp.float32).reshape(B, 1, S)      # 1=keep, 0=pad

    for blk in params["blocks"]:
        # LoRA merged into the frozen c_attn weight: tiny rank-r bf16 delta
        # (eval mode => mathematically identical; lora_dropout is identity).
        delta = (lora_scale * (blk["lora_A"] @ blk["lora_B"])).astype(jnp.bfloat16)
        w_qkv = blk["c_attn_w"] + delta

        # ---- attention sub-block ----
        # ln_1 + c_attn(+LoRA) fused into one tiled matmul kernel (bf16 out).
        qkv = pallas_fused_linear(x2d, w_qkv, bias=blk["c_attn_b"],
                                  ln=(blk["ln1_g"], blk["ln1_b"]))      # bf16 [M, 3D]
        q = qkv[:, :D].reshape(B, S, D)                                 # Q only
        kv = qkv[:, D:].reshape(B, S, 2 * D)                            # K,V only
        attn = pallas_flash_attention(q, kv, pad_mask, H, attn_scale)   # bf16 [B, S, D]
        # c_proj with fused residual add.
        x2d = pallas_fused_linear(attn.reshape(M, D), blk["attn_proj_w"],
                                  bias=blk["attn_proj_b"], residual=x2d)

        # ---- MLP sub-block ----
        # ln_2 + c_fc + gelu fused; c_proj with fused residual.  Bigger M tiles
        # so the (weight-heavy) MLP matrices are streamed fewer times.
        h = pallas_fused_linear(x2d, blk["mlp_fc_w"], bias=blk["mlp_fc_b"],
                                ln=(blk["ln2_g"], blk["ln2_b"]), act="gelu",
                                tm_cap=512)
        x2d = pallas_fused_linear(h, blk["mlp_proj_w"], bias=blk["mlp_proj_b"],
                                  residual=x2d, tm_cap=512)

    # ln_f once (bf16), then the vocab-tiled lm head (no bias) with full-M tile
    # so the big head weight is streamed exactly once.
    xn = pallas_layernorm(x2d, params["lnf_g"], params["lnf_b"])
    logits = pallas_fused_linear(xn, params["head_w"], tm_cap=max(M, 8),
                                 out_dtype=jnp.float32)
    # self.dropout(logits) with p=0.1 -> identity in eval mode.
    # TODO(synk): train-mode dropout (pltpu.prng_*) not implemented.
    return logits.reshape(B, S, V)


# ----------------------------------------------------------------------------
# Driver
# ----------------------------------------------------------------------------

if __name__ == "__main__":
    cfg = dict(
        embed_dim=32,
        vocab_size=64,
        n_head=4,
        n_layer=2,
        n_positions=32,
        lora_r=4,
        lora_alpha=8,
        lora_dropout=0.1,  # identity in eval
    )
    B, S = 2, 8

    key = jax.random.PRNGKey(0)
    k_param, k_ids = jax.random.split(key)
    params = init_params(k_param, cfg)

    input_ids = jax.random.randint(k_ids, (B, S), 0, cfg["vocab_size"], dtype=jnp.int32)
    attention_mask = jnp.ones((B, S), dtype=jnp.int32)

    fwd = jax.jit(functools.partial(chat_model_forward, cfg=cfg))
    logits = fwd(params, input_ids, attention_mask)
    jax.block_until_ready(logits)

    assert logits.shape == (B, S, cfg["vocab_size"]), logits.shape
    assert bool(jnp.all(jnp.isfinite(logits)))
    print("KERNEL_OK")
</pallas_src>

<mosaic_0001>
module attributes {stable_mosaic.version = 11 : i64} {
  func.func @_fused_linear_kernel(%arg0: i32, %arg1: i32, %arg2: memref<16x32xbf16, #tpu.memory_space<vmem>>, %arg3: memref<32x96xbf16, #tpu.memory_space<vmem>>, %arg4: memref<1x96xf32, #tpu.memory_space<vmem>>, %arg5: memref<1x32xf32, #tpu.memory_space<vmem>>, %arg6: memref<1x32xf32, #tpu.memory_space<vmem>>, %arg7: memref<16x96xbf16, #tpu.memory_space<vmem>>) attributes {dimension_semantics = [#tpu.dimension_semantics<parallel>, #tpu.dimension_semantics<parallel>], iteration_bounds = array<i64: 1, 1>, scalar_prefetch = 0 : i64, scratch_operands = 0 : i64, tpu.core_type = #tpu.core_type<tc>, window_params = [{transform_indices = @transform_0, window_bounds = array<i64: 16, 32>}, {transform_indices = @transform_1, window_bounds = array<i64: 32, 96>}, {transform_indices = @transform_2, window_bounds = array<i64: 1, 96>}, {pipeline_mode = #tpu.pipeline_mode<synchronous>, transform_indices = @transform_3, window_bounds = array<i64: 1, 32>}, {pipeline_mode = #tpu.pipeline_mode<synchronous>, transform_indices = @transform_4, window_bounds = array<i64: 1, 32>}, {transform_indices = @transform_5, window_bounds = array<i64: 16, 96>}]} {
    %c0 = arith.constant 0 : index
    %c0_0 = arith.constant 0 : index
    %0 = vector.load %arg2[%c0, %c0_0] : memref<16x32xbf16, #tpu.memory_space<vmem>>, vector<16x32xbf16>
    %1 = arith.extf %0 : vector<16x32xbf16> to vector<16x32xf32>
    %cst = arith.constant dense<0.000000e+00> : vector<16xf32>
    %2 = vector.multi_reduction <add>, %1, %cst [1] : vector<16x32xf32> to vector<16xf32>
    %3 = vector.shape_cast %2 : vector<16xf32> to vector<16x1xf32>
    %cst_1 = arith.constant 3.200000e+01 : f32
    %4 = vector.broadcast %cst_1 : f32 to vector<16x1xf32>
    %5 = arith.divf %3, %4 : vector<16x1xf32>
    %6 = vector.broadcast %5 : vector<16x1xf32> to vector<16x32xf32>
    %7 = arith.subf %1, %6 : vector<16x32xf32>
    %8 = arith.mulf %7, %7 : vector<16x32xf32>
    %cst_2 = arith.constant dense<0.000000e+00> : vector<16xf32>
    %9 = vector.multi_reduction <add>, %8, %cst_2 [1] : vector<16x32xf32> to vector<16xf32>
    %10 = vector.shape_cast %9 : vector<16xf32> to vector<16x1xf32>
    %cst_3 = arith.constant 3.200000e+01 : f32
    %11 = vector.broadcast %cst_3 : f32 to vector<16x1xf32>
    %12 = arith.divf %10, %11 : vector<16x1xf32>
    %13 = vector.broadcast %5 : vector<16x1xf32> to vector<16x32xf32>
    %14 = arith.subf %1, %13 : vector<16x32xf32>
    %cst_4 = arith.constant 9.99999974E-6 : f32
    %15 = vector.broadcast %cst_4 : f32 to vector<16x1xf32>
    %16 = arith.addf %12, %15 : vector<16x1xf32>
    %17 = math.rsqrt %16 : vector<16x1xf32>
    %18 = vector.broadcast %17 : vector<16x1xf32> to vector<16x32xf32>
    %19 = arith.mulf %14, %18 : vector<16x32xf32>
    %c0_5 = arith.constant 0 : index
    %c0_6 = arith.constant 0 : index
    %20 = vector.load %arg5[%c0_5, %c0_6] : memref<1x32xf32, #tpu.memory_space<vmem>>, vector<1x32xf32>
    %21 = vector.broadcast %20 : vector<1x32xf32> to vector<16x32xf32>
    %22 = arith.mulf %19, %21 : vector<16x32xf32>
    %c0_7 = arith.constant 0 : index
    %c0_8 = arith.constant 0 : index
    %23 = vector.load %arg6[%c0_7, %c0_8] : memref<1x32xf32, #tpu.memory_space<vmem>>, vector<1x32xf32>
    %24 = vector.broadcast %23 : vector<1x32xf32> to vector<16x32xf32>
    %25 = arith.addf %22, %24 : vector<16x32xf32>
    %26 = arith.truncf %25 : vector<16x32xf32> to vector<16x32xbf16>
    %c0_9 = arith.constant 0 : index
    %c0_10 = arith.constant 0 : index
    %27 = vector.load %arg3[%c0_9, %c0_10] : memref<32x96xbf16, #tpu.memory_space<vmem>>, vector<32x96xbf16>
    %cst_11 = arith.constant dense<0.000000e+00> : vector<16x96xf32>
    %28 = tpu.matmul %26, %27, %cst_11 {dimension_numbers = #tpu.dot_dimension_numbers<[1], [0], [0], [1], [0, 0, 1, 1], [], []>} : vector<16x32xbf16>, vector<32x96xbf16>, vector<16x96xf32> -> vector<16x96xf32>
    %c0_12 = arith.constant 0 : index
    %c0_13 = arith.constant 0 : index
    %29 = vector.load %arg4[%c0_12, %c0_13] : memref<1x96xf32, #tpu.memory_space<vmem>>, vector<1x96xf32>
    %30 = vector.broadcast %29 : vector<1x96xf32> to vector<16x96xf32>
    %31 = arith.addf %28, %30 : vector<16x96xf32>
    %32 = arith.truncf %31 : vector<16x96xf32> to vector<16x96xbf16>
    %c0_14 = arith.constant 0 : index
    %c0_15 = arith.constant 0 : index
    %33 = vector.load %arg7[%c0_14, %c0_15] : memref<16x96xbf16, #tpu.memory_space<vmem>>, vector<16x96xbf16>
    tpu.vector_store %arg7[%c0_14, %c0_15], %32 {strides = array<i32>} : memref<16x96xbf16, #tpu.memory_space<vmem>>, vector<16x96xbf16>,
    return
  }
  func.func @transform_0(%arg0: i32, %arg1: i32) -> (i32, i32) {
    %c0_i32 = arith.constant 0 : i32
    %c0_i32_0 = arith.constant 0 : i32
    return %arg0, %c0_i32 : i32, i32
  }
  func.func @transform_1(%arg0: i32, %arg1: i32) -> (i32, i32) {
    %c0_i32 = arith.constant 0 : i32
    %c0_i32_0 = arith.constant 0 : i32
    return %c0_i32, %arg1 : i32, i32
  }
  func.func @transform_2(%arg0: i32, %arg1: i32) -> (i32, i32) {
    %c0_i32 = arith.constant 0 : i32
    %c0_i32_0 = arith.constant 0 : i32
    return %c0_i32, %arg1 : i32, i32
  }
  func.func @transform_3(%arg0: i32, %arg1: i32) -> (i32, i32) {
    %c0_i32 = arith.constant 0 : i32
    %c0_i32_0 = arith.constant 0 : i32
    %c0_i32_1 = arith.constant 0 : i32
    return %c0_i32, %c0_i32_0 : i32, i32
  }
  func.func @transform_4(%arg0: i32, %arg1: i32) -> (i32, i32) {
    %c0_i32 = arith.constant 0 : i32
    %c0_i32_0 = arith.constant 0 : i32
    %c0_i32_1 = arith.constant 0 : i32
    return %c0_i32, %c0_i32_0 : i32, i32
  }
  func.func @transform_5(%arg0: i32, %arg1: i32) -> (i32, i32) {
    %c0_i32 = arith.constant 0 : i32
    return %arg0, %arg1 : i32, i32
  }
}

module attributes {stable_mosaic.version = 11 : i64} {
  func.func @_fused_linear_kernel(%arg0: i32, %arg1: i32, %arg2: memref<16x32xbf16, #tpu.memory_space<vmem>>, %arg3: memref<32x32xbf16, #tpu.memory_space<vmem>>, %arg4: memref<1x32xf32, #tpu.memory_space<vmem>>, %arg5: memref<16x32xbf16, #tpu.memory_space<vmem>>, %arg6: memref<16x32xbf16, #tpu.memory_space<vmem>>) attributes {dimension_semantics = [#tpu.dimension_semantics<parallel>, #tpu.dimension_semantics<parallel>], iteration_bounds = array<i64: 1, 1>, scalar_prefetch = 0 : i64, scratch_operands = 0 : i64, tpu.core_type = #tpu.core_type<tc>, window_params = [{transform_indices = @transform_0, window_bounds = array<i64: 16, 32>}, {transform_indices = @transform_1, window_bounds = array<i64: 32, 32>}, {transform_indices = @transform_2, window_bounds = array<i64: 1, 32>}, {transform_indices = @transform_3, window_bounds = array<i64: 16, 32>}, {transform_indices = @transform_4, window_bounds = array<i64: 16, 32>}]} {
    %c0 = arith.constant 0 : index
    %c0_0 = arith.constant 0 : index
    %0 = vector.load %arg2[%c0, %c0_0] : memref<16x32xbf16, #tpu.memory_space<vmem>>, vector<16x32xbf16>
    %c0_1 = arith.constant 0 : index
    %c0_2 = arith.constant 0 : index
    %1 = vector.load %arg3[%c0_1, %c0_2] : memref<32x32xbf16, #tpu.memory_space<vmem>>, vector<32x32xbf16>
    %cst = arith.constant dense<0.000000e+00> : vector<16x32xf32>
    %2 = tpu.matmul %0, %1, %cst {dimension_numbers = #tpu.dot_dimension_numbers<[1], [0], [0], [1], [0, 0, 1, 1], [], []>} : vector<16x32xbf16>, vector<32x32xbf16>, vector<16x32xf32> -> vector<16x32xf32>
    %c0_3 = arith.constant 0 : index
    %c0_4 = arith.constant 0 : index
    %3 = vector.load %arg4[%c0_3, %c0_4] : memref<1x32xf32, #tpu.memory_space<vmem>>, vector<1x32xf32>
    %4 = vector.broadcast %3 : vector<1x32xf32> to vector<16x32xf32>
    %5 = arith.addf %2, %4 : vector<16x32xf32>
    %c0_5 = arith.constant 0 : index
    %c0_6 = arith.constant 0 : index
    %6 = vector.load %arg5[%c0_5, %c0_6] : memref<16x32xbf16, #tpu.memory_space<vmem>>, vector<16x32xbf16>
    %7 = arith.extf %6 : vector<16x32xbf16> to vector<16x32xf32>
    %8 = arith.addf %5, %7 : vector<16x32xf32>
    %9 = arith.truncf %8 : vector<16x32xf32> to vector<16x32xbf16>
    %c0_7 = arith.constant 0 : index
    %c0_8 = arith.constant 0 : index
    %10 = vector.load %arg6[%c0_7, %c0_8] : memref<16x32xbf16, #tpu.memory_space<vmem>>, vector<16x32xbf16>
    tpu.vector_store %arg6[%c0_7, %c0_8], %9 {strides = array<i32>} : memref<16x32xbf16, #tpu.memory_space<vmem>>, vector<16x32xbf16>,
    return
  }
  func.func @transform_0(%arg0: i32, %arg1: i32) -> (i32, i32) {
    %c0_i32 = arith.constant 0 : i32
    %c0_i32_0 = arith.constant 0 : i32
    return %arg0, %c0_i32 : i32, i32
  }
  func.func @transform_1(%arg0: i32, %arg1: i32) -> (i32, i32) {
    %c0_i32 = arith.constant 0 : i32
    %c0_i32_0 = arith.constant 0 : i32
    return %c0_i32, %arg1 : i32, i32
  }
  func.func @transform_2(%arg0: i32, %arg1: i32) -> (i32, i32) {
    %c0_i32 = arith.constant 0 : i32
    %c0_i32_0 = arith.constant 0 : i32
    return %c0_i32, %arg1 : i32, i32
  }
  func.func @transform_3(%arg0: i32, %arg1: i32) -> (i32, i32) {
    %c0_i32 = arith.constant 0 : i32
    return %arg0, %arg1 : i32, i32
  }
  func.func @transform_4(%arg0: i32, %arg1: i32) -> (i32, i32) {
    %c0_i32 = arith.constant 0 : i32
    return %arg0, %arg1 : i32, i32
  }
}

module attributes {stable_mosaic.version = 11 : i64} {
  func.func @_fused_linear_kernel(%arg0: i32, %arg1: i32, %arg2: memref<16x32xbf16, #tpu.memory_space<vmem>>, %arg3: memref<32x128xbf16, #tpu.memory_space<vmem>>, %arg4: memref<1x128xf32, #tpu.memory_space<vmem>>, %arg5: memref<1x32xf32, #tpu.memory_space<vmem>>, %arg6: memref<1x32xf32, #tpu.memory_space<vmem>>, %arg7: memref<16x128xbf16, #tpu.memory_space<vmem>>) attributes {dimension_semantics = [#tpu.dimension_semantics<parallel>, #tpu.dimension_semantics<parallel>], iteration_bounds = array<i64: 1, 1>, scalar_prefetch = 0 : i64, scratch_operands = 0 : i64, tpu.core_type = #tpu.core_type<tc>, window_params = [{transform_indices = @transform_0, window_bounds = array<i64: 16, 32>}, {transform_indices = @transform_1, window_bounds = array<i64: 32, 128>}, {transform_indices = @transform_2, window_bounds = array<i64: 1, 128>}, {pipeline_mode = #tpu.pipeline_mode<synchronous>, transform_indices = @transform_3, window_bounds = array<i64: 1, 32>}, {pipeline_mode = #tpu.pipeline_mode<synchronous>, transform_indices = @transform_4, window_bounds = array<i64: 1, 32>}, {transform_indices = @transform_5, window_bounds = array<i64: 16, 128>}]} {
    %c0 = arith.constant 0 : index
    %c0_0 = arith.constant 0 : index
    %0 = vector.load %arg2[%c0, %c0_0] : memref<16x32xbf16, #tpu.memory_space<vmem>>, vector<16x32xbf16>
    %1 = arith.extf %0 : vector<16x32xbf16> to vector<16x32xf32>
    %cst = arith.constant dense<0.000000e+00> : vector<16xf32>
    %2 = vector.multi_reduction <add>, %1, %cst [1] : vector<16x32xf32> to vector<16xf32>
    %3 = vector.shape_cast %2 : vector<16xf32> to vector<16x1xf32>
    %cst_1 = arith.constant 3.200000e+01 : f32
    %4 = vector.broadcast %cst_1 : f32 to vector<16x1xf32>
    %5 = arith.divf %3, %4 : vector<16x1xf32>
    %6 = vector.broadcast %5 : vector<16x1xf32> to vector<16x32xf32>
    %7 = arith.subf %1, %6 : vector<16x32xf32>
    %8 = arith.mulf %7, %7 : vector<16x32xf32>
    %cst_2 = arith.constant dense<0.000000e+00> : vector<16xf32>
    %9 = vector.multi_reduction <add>, %8, %cst_2 [1] : vector<16x32xf32> to vector<16xf32>
    %10 = vector.shape_cast %9 : vector<16xf32> to vector<16x1xf32>
    %cst_3 = arith.constant 3.200000e+01 : f32
    %11 = vector.broadcast %cst_3 : f32 to vector<16x1xf32>
    %12 = arith.divf %10, %11 : vector<16x1xf32>
    %13 = vector.broadcast %5 : vector<16x1xf32> to vector<16x32xf32>
    %14 = arith.subf %1, %13 : vector<16x32xf32>
    %cst_4 = arith.constant 9.99999974E-6 : f32
    %15 = vector.broadcast %cst_4 : f32 to vector<16x1xf32>
    %16 = arith.addf %12, %15 : vector<16x1xf32>
    %17 = math.rsqrt %16 : vector<16x1xf32>
    %18 = vector.broadcast %17 : vector<16x1xf32> to vector<16x32xf32>
    %19 = arith.mulf %14, %18 : vector<16x32xf32>
    %c0_5 = arith.constant 0 : index
    %c0_6 = arith.constant 0 : index
    %20 = vector.load %arg5[%c0_5, %c0_6] : memref<1x32xf32, #tpu.memory_space<vmem>>, vector<1x32xf32>
    %21 = vector.broadcast %20 : vector<1x32xf32> to vector<16x32xf32>
    %22 = arith.mulf %19, %21 : vector<16x32xf32>
    %c0_7 = arith.constant 0 : index
    %c0_8 = arith.constant 0 : index
    %23 = vector.load %arg6[%c0_7, %c0_8] : memref<1x32xf32, #tpu.memory_space<vmem>>, vector<1x32xf32>
    %24 = vector.broadcast %23 : vector<1x32xf32> to vector<16x32xf32>
    %25 = arith.addf %22, %24 : vector<16x32xf32>
    %26 = arith.truncf %25 : vector<16x32xf32> to vector<16x32xbf16>
    %c0_9 = arith.constant 0 : index
    %c0_10 = arith.constant 0 : index
    %27 = vector.load %arg3[%c0_9, %c0_10] : memref<32x128xbf16, #tpu.memory_space<vmem>>, vector<32x128xbf16>
    %cst_11 = arith.constant dense<0.000000e+00> : vector<16x128xf32>
    %28 = tpu.matmul %26, %27, %cst_11 {dimension_numbers = #tpu.dot_dimension_numbers<[1], [0], [0], [1], [0, 0, 1, 1], [], []>} : vector<16x32xbf16>, vector<32x128xbf16>, vector<16x128xf32> -> vector<16x128xf32>
    %c0_12 = arith.constant 0 : index
    %c0_13 = arith.constant 0 : index
    %29 = vector.load %arg4[%c0_12, %c0_13] : memref<1x128xf32, #tpu.memory_space<vmem>>, vector<1x128xf32>
    %30 = vector.broadcast %29 : vector<1x128xf32> to vector<16x128xf32>
    %31 = arith.addf %28, %30 : vector<16x128xf32>
    %32 = arith.mulf %31, %31 : vector<16x128xf32>
    %33 = arith.mulf %31, %32 : vector<16x128xf32>
    %cst_14 = arith.constant 4.471500e-02 : f32
    %34 = vector.broadcast %cst_14 : f32 to vector<16x128xf32>
    %35 = arith.mulf %34, %33 : vector<16x128xf32>
    %36 = arith.addf %31, %35 : vector<16x128xf32>
    %cst_15 = arith.constant 0.797884583 : f32
    %37 = vector.broadcast %cst_15 : f32 to vector<16x128xf32>
    %38 = arith.mulf %37, %36 : vector<16x128xf32>
    %39 = math.tanh %38 : vector<16x128xf32>
    %cst_16 = arith.constant 1.000000e+00 : f32
    %40 = vector.broadcast %cst_16 : f32 to vector<16x128xf32>
    %41 = arith.addf %40, %39 : vector<16x128xf32>
    %cst_17 = arith.constant 5.000000e-01 : f32
    %42 = vector.broadcast %cst_17 : f32 to vector<16x128xf32>
    %43 = arith.mulf %42, %41 : vector<16x128xf32>
    %44 = arith.mulf %31, %43 : vector<16x128xf32>
    %45 = arith.truncf %44 : vector<16x128xf32> to vector<16x128xbf16>
    %c0_18 = arith.constant 0 : index
    %c0_19 = arith.constant 0 : index
    %46 = vector.load %arg7[%c0_18, %c0_19] : memref<16x128xbf16, #tpu.memory_space<vmem>>, vector<16x128xbf16>
    tpu.vector_store %arg7[%c0_18, %c0_19], %45 {strides = array<i32>} : memref<16x128xbf16, #tpu.memory_space<vmem>>, vector<16x128xbf16>,
    return
  }
  func.func @transform_0(%arg0: i32, %arg1: i32) -> (i32, i32) {
    %c0_i32 = arith.constant 0 : i32
    %c0_i32_0 = arith.constant 0 : i32
    return %arg0, %c0_i32 : i32, i32
  }
  func.func @transform_1(%arg0: i32, %arg1: i32) -> (i32, i32) {
    %c0_i32 = arith.constant 0 : i32
    %c0_i32_0 = arith.constant 0 : i32
    return %c0_i32, %arg1 : i32, i32
  }
  func.func @transform_2(%arg0: i32, %arg1: i32) -> (i32, i32) {
    %c0_i32 = arith.constant 0 : i32
    %c0_i32_0 = arith.constant 0 : i32
    return %c0_i32, %arg1 : i32, i32
  }
  func.func @transform_3(%arg0: i32, %arg1: i32) -> (i32, i32) {
    %c0_i32 = arith.constant 0 : i32
    %c0_i32_0 = arith.constant 0 : i32
    %c0_i32_1 = arith.constant 0 : i32
    return %c0_i32, %c0_i32_0 : i32, i32
  }
  func.func @transform_4(%arg0: i32, %arg1: i32) -> (i32, i32) {
    %c0_i32 = arith.constant 0 : i32
    %c0_i32_0 = arith.constant 0 : i32
    %c0_i32_1 = arith.constant 0 : i32
    return %c0_i32, %c0_i32_0 : i32, i32
  }
  func.func @transform_5(%arg0: i32, %arg1: i32) -> (i32, i32) {
    %c0_i32 = arith.constant 0 : i32
    return %arg0, %arg1 : i32, i32
  }
}

module attributes {stable_mosaic.version = 11 : i64} {
  func.func @_flash_attn_kernel(%arg0: i32, %arg1: i32, %arg2: i32, %arg3: memref<1x8x32xbf16, #tpu.memory_space<vmem>>, %arg4: memref<1x8x64xbf16, #tpu.memory_space<vmem>>, %arg5: memref<1x1x8xf32, #tpu.memory_space<vmem>>, %arg6: memref<1x8x32xbf16, #tpu.memory_space<vmem>>, %arg7: memref<4x8x1xf32, #tpu.memory_space<vmem>>, %arg8: memref<4x8x1xf32, #tpu.memory_space<vmem>>, %arg9: memref<4x8x8xf32, #tpu.memory_space<vmem>>) attributes {dimension_semantics = [#tpu.dimension_semantics<parallel>, #tpu.dimension_semantics<parallel>, #tpu.dimension_semantics<arbitrary>], iteration_bounds = array<i64: 2, 1, 1>, scalar_prefetch = 0 : i64, scratch_operands = 3 : i64, tpu.core_type = #tpu.core_type<tc>, window_params = [{transform_indices = @transform_0, window_bounds = array<i64: 1, 8, 32>}, {transform_indices = @transform_1, window_bounds = array<i64: 1, 8, 64>}, {transform_indices = @transform_2, window_bounds = array<i64: 1, 1, 8>}, {transform_indices = @transform_3, window_bounds = array<i64: 1, 8, 32>}]} {
    %c0_i32 = arith.constant 0 : i32
    %0 = arith.cmpi eq, %arg2, %c0_i32 : i32
    %1 = arith.extui %0 : i1 to i32
    %c0_i32_0 = arith.constant 0 : i32
    %2 = arith.cmpi ne, %1, %c0_i32_0 : i32
    scf.if %2 {
      %cst = arith.constant -1.000000e+30 : f32
      %13 = vector.broadcast %cst : f32 to vector<4x8x1xf32>
      %c0 = arith.constant 0 : index
      %c0_6 = arith.constant 0 : index
      %c0_7 = arith.constant 0 : index
      %14 = vector.load %arg7[%c0, %c0_6, %c0_7] : memref<4x8x1xf32, #tpu.memory_space<vmem>>, vector<4x8x1xf32>
      tpu.vector_store %arg7[%c0, %c0_6, %c0_7], %13 {strides = array<i32>} : memref<4x8x1xf32, #tpu.memory_space<vmem>>, vector<4x8x1xf32>,
      %cst_8 = arith.constant 0.000000e+00 : f32
      %15 = vector.broadcast %cst_8 : f32 to vector<4x8x1xf32>
      %c0_9 = arith.constant 0 : index
      %c0_10 = arith.constant 0 : index
      %c0_11 = arith.constant 0 : index
      %16 = vector.load %arg8[%c0_9, %c0_10, %c0_11] : memref<4x8x1xf32, #tpu.memory_space<vmem>>, vector<4x8x1xf32>
      tpu.vector_store %arg8[%c0_9, %c0_10, %c0_11], %15 {strides = array<i32>} : memref<4x8x1xf32, #tpu.memory_space<vmem>>, vector<4x8x1xf32>,
      %cst_12 = arith.constant 0.000000e+00 : f32
      %17 = vector.broadcast %cst_12 : f32 to vector<4x8x8xf32>
      %c0_13 = arith.constant 0 : index
      %c0_14 = arith.constant 0 : index
      %c0_15 = arith.constant 0 : index
      %18 = vector.load %arg9[%c0_13, %c0_14, %c0_15] : memref<4x8x8xf32, #tpu.memory_space<vmem>>, vector<4x8x8xf32>
      tpu.vector_store %arg9[%c0_13, %c0_14, %c0_15], %17 {strides = array<i32>} : memref<4x8x8xf32, #tpu.memory_space<vmem>>, vector<4x8x8xf32>,
    } else {
    }
    %c8_i32 = arith.constant 8 : i32
    %3 = arith.muli %arg1, %c8_i32 : i32
    %c8_i32_1 = arith.constant 8 : i32
    %4 = arith.muli %arg2, %c8_i32_1 : i32
    %c8_i32_2 = arith.constant 8 : i32
    %5 = arith.addi %3, %c8_i32_2 : i32
    %c1_i32 = arith.constant 1 : i32
    %6 = arith.subi %5, %c1_i32 : i32
    %7 = arith.cmpi sle, %4, %6 : i32
    %8 = arith.extui %7 : i1 to i32
    %c0_i32_3 = arith.constant 0 : i32
    %9 = arith.cmpi ne, %8, %c0_i32_3 : i32
    scf.if %9 {
      %c0 = arith.constant 0 : index
      %c0_6 = arith.constant 0 : index
      %c0_7 = arith.constant 0 : index
      %13 = vector.load %arg3[%c0, %c0_6, %c0_7] : memref<1x8x32xbf16, #tpu.memory_space<vmem>>, vector<1x8x32xbf16>
      %14 = vector.shape_cast %13 : vector<1x8x32xbf16> to vector<8x32xbf16>
      %c0_8 = arith.constant 0 : index
      %c0_9 = arith.constant 0 : index
      %c0_10 = arith.constant 0 : index
      %15 = vector.load %arg4[%c0_8, %c0_9, %c0_10] : memref<1x8x64xbf16, #tpu.memory_space<vmem>>, vector<1x8x64xbf16>
      %16 = vector.shape_cast %15 : vector<1x8x64xbf16> to vector<8x64xbf16>
      %c0_11 = arith.constant 0 : index
      %c0_12 = arith.constant 0 : index
      %c0_13 = arith.constant 0 : index
      %17 = vector.load %arg5[%c0_11, %c0_12, %c0_13] : memref<1x1x8xf32, #tpu.memory_space<vmem>>, vector<1x1x8xf32>
      %18 = vector.shape_cast %17 : vector<1x1x8xf32> to vector<1x8xf32>
      %19 = tpu.iota {dimensions = array<i32: 0>} : vector<8x8xi32>
      %20 = vector.broadcast %3 : i32 to vector<8x8xi32>
      %21 = arith.addi %19, %20 : vector<8x8xi32>
      %22 = tpu.iota {dimensions = array<i32: 1>} : vector<8x8xi32>
      %23 = vector.broadcast %4 : i32 to vector<8x8xi32>
      %24 = arith.addi %22, %23 : vector<8x8xi32>
      %25 = arith.cmpi sge, %21, %24 : vector<8x8xi32>
      %cst = arith.constant 5.000000e-01 : f32
      %26 = vector.broadcast %cst : f32 to vector<1x8xf32>
      %27 = arith.cmpf ogt, %18, %26 : vector<1x8xf32>
      %28 = vector.broadcast %27 : vector<1x8xi1> to vector<8x8xi1>
      %29 = arith.andi %25, %28 : vector<8x8xi1>
      %30 = vector.extract_strided_slice %14 {offsets = [0, 0], sizes = [8, 8], strides = [1, 1]} : vector<8x32xbf16> to vector<8x8xbf16>
      %31 = arith.extf %30 : vector<8x8xbf16> to vector<8x8xf32>
      %cst_14 = arith.constant 0.353553385 : f32
      %32 = vector.broadcast %cst_14 : f32 to vector<8x8xf32>
      %33 = arith.mulf %31, %32 : vector<8x8xf32>
      %34 = arith.truncf %33 : vector<8x8xf32> to vector<8x8xbf16>
      %35 = vector.extract_strided_slice %16 {offsets = [0, 0], sizes = [8, 8], strides = [1, 1]} : vector<8x64xbf16> to vector<8x8xbf16>
      %36 = vector.extract_strided_slice %16 {offsets = [0, 32], sizes = [8, 8], strides = [1, 1]} : vector<8x64xbf16> to vector<8x8xbf16>
      %cst_15 = arith.constant dense<0.000000e+00> : vector<8x8xf32>
      %37 = tpu.matmul %34, %35, %cst_15 {dimension_numbers = #tpu.dot_dimension_numbers<[1], [1], [0], [0], [0, 0, 1, 0], [], []>} : vector<8x8xbf16>, vector<8x8xbf16>, vector<8x8xf32> -> vector<8x8xf32>
      %c0_16 = arith.constant 0 : index
      %c0_17 = arith.constant 0 : index
      %c0_18 = arith.constant 0 : index
      %38 = vector.load %arg7[%c0_16, %c0_17, %c0_18] : memref<4x8x1xf32, #tpu.memory_space<vmem>>, vector<1x8x1xf32>
      %39 = vector.shape_cast %38 : vector<1x8x1xf32> to vector<8x1xf32>
      %cst_19 = arith.constant -1.000000e+30 : f32
      %40 = vector.broadcast %cst_19 : f32 to vector<8x8xf32>
      %41 = arith.select %29, %37, %40 : vector<8x8xi1>, vector<8x8xf32>
      %cst_20 = arith.constant dense<0xFF800000> : vector<8xf32>
      %42 = vector.multi_reduction <maximumf>, %41, %cst_20 [1] : vector<8x8xf32> to vector<8xf32>
      %43 = vector.shape_cast %42 : vector<8xf32> to vector<8x1xf32>
      %44 = arith.maximumf %39, %43 : vector<8x1xf32>
      %45 = arith.subf %39, %44 : vector<8x1xf32>
      %46 = math.exp %45 : vector<8x1xf32>
      %47 = vector.broadcast %44 : vector<8x1xf32> to vector<8x8xf32>
      %48 = arith.subf %37, %47 : vector<8x8xf32>
      %49 = math.exp %48 : vector<8x8xf32>
      %cst_21 = arith.constant 0.000000e+00 : f32
      %50 = vector.broadcast %cst_21 : f32 to vector<8x8xf32>
      %51 = arith.select %29, %49, %50 : vector<8x8xi1>, vector<8x8xf32>
      %c0_22 = arith.constant 0 : index
      %c0_23 = arith.constant 0 : index
      %c0_24 = arith.constant 0 : index
      %52 = vector.load %arg8[%c0_22, %c0_23, %c0_24] : memref<4x8x1xf32, #tpu.memory_space<vmem>>, vector<1x8x1xf32>
      %53 = vector.shape_cast %52 : vector<1x8x1xf32> to vector<8x1xf32>
      %54 = arith.mulf %46, %53 : vector<8x1xf32>
      %cst_25 = arith.constant dense<0.000000e+00> : vector<8xf32>
      %55 = vector.multi_reduction <add>, %51, %cst_25 [1] : vector<8x8xf32> to vector<8xf32>
      %56 = vector.shape_cast %55 : vector<8xf32> to vector<8x1xf32>
      %57 = arith.addf %54, %56 : vector<8x1xf32>
      %c0_26 = arith.constant 0 : index
      %c0_27 = arith.constant 0 : index
      %c0_28 = arith.constant 0 : index
      %58 = vector.load %arg8[%c0_26, %c0_27, %c0_28] : memref<4x8x1xf32, #tpu.memory_space<vmem>>, vector<1x8x1xf32>
      %59 = vector.shape_cast %58 : vector<1x8x1xf32> to vector<8x1xf32>
      %60 = vector.shape_cast %57 : vector<8x1xf32> to vector<1x8x1xf32>
      tpu.vector_store %arg8[%c0_26, %c0_27, %c0_28], %60 {strides = array<i32>} : memref<4x8x1xf32, #tpu.memory_space<vmem>>, vector<1x8x1xf32>,
      %c0_29 = arith.constant 0 : index
      %c0_30 = arith.constant 0 : index
      %c0_31 = arith.constant 0 : index
      %61 = vector.load %arg9[%c0_29, %c0_30, %c0_31] : memref<4x8x8xf32, #tpu.memory_space<vmem>>, vector<1x8x8xf32>
      %62 = vector.shape_cast %61 : vector<1x8x8xf32> to vector<8x8xf32>
      %63 = vector.broadcast %46 : vector<8x1xf32> to vector<8x8xf32>
      %64 = arith.mulf %63, %62 : vector<8x8xf32>
      %65 = arith.truncf %51 : vector<8x8xf32> to vector<8x8xbf16>
      %cst_32 = arith.constant dense<0.000000e+00> : vector<8x8xf32>
      %66 = tpu.matmul %65, %36, %cst_32 {dimension_numbers = #tpu.dot_dimension_numbers<[1], [0], [0], [1], [0, 0, 1, 1], [], []>} : vector<8x8xbf16>, vector<8x8xbf16>, vector<8x8xf32> -> vector<8x8xf32>
      %67 = arith.addf %64, %66 : vector<8x8xf32>
      %c0_33 = arith.constant 0 : index
      %c0_34 = arith.constant 0 : index
      %c0_35 = arith.constant 0 : index
      %68 = vector.load %arg9[%c0_33, %c0_34, %c0_35] : memref<4x8x8xf32, #tpu.memory_space<vmem>>, vector<1x8x8xf32>
      %69 = vector.shape_cast %68 : vector<1x8x8xf32> to vector<8x8xf32>
      %70 = vector.shape_cast %67 : vector<8x8xf32> to vector<1x8x8xf32>
      tpu.vector_store %arg9[%c0_33, %c0_34, %c0_35], %70 {strides = array<i32>} : memref<4x8x8xf32, #tpu.memory_space<vmem>>, vector<1x8x8xf32>,
      %c0_36 = arith.constant 0 : index
      %c0_37 = arith.constant 0 : index
      %c0_38 = arith.constant 0 : index
      %71 = vector.load %arg7[%c0_36, %c0_37, %c0_38] : memref<4x8x1xf32, #tpu.memory_space<vmem>>, vector<1x8x1xf32>
      %72 = vector.shape_cast %71 : vector<1x8x1xf32> to vector<8x1xf32>
      %73 = vector.shape_cast %44 : vector<8x1xf32> to vector<1x8x1xf32>
      tpu.vector_store %arg7[%c0_36, %c0_37, %c0_38], %73 {strides = array<i32>} : memref<4x8x1xf32, #tpu.memory_space<vmem>>, vector<1x8x1xf32>,
      %74 = vector.extract_strided_slice %14 {offsets = [0, 8], sizes = [8, 8], strides = [1, 1]} : vector<8x32xbf16> to vector<8x8xbf16>
      %75 = arith.extf %74 : vector<8x8xbf16> to vector<8x8xf32>
      %cst_39 = arith.constant 0.353553385 : f32
      %76 = vector.broadcast %cst_39 : f32 to vector<8x8xf32>
      %77 = arith.mulf %75, %76 : vector<8x8xf32>
      %78 = arith.truncf %77 : vector<8x8xf32> to vector<8x8xbf16>
      %79 = vector.extract_strided_slice %16 {offsets = [0, 8], sizes = [8, 8], strides = [1, 1]} : vector<8x64xbf16> to vector<8x8xbf16>
      %80 = vector.extract_strided_slice %16 {offsets = [0, 40], sizes = [8, 8], strides = [1, 1]} : vector<8x64xbf16> to vector<8x8xbf16>
      %cst_40 = arith.constant dense<0.000000e+00> : vector<8x8xf32>
      %81 = tpu.matmul %78, %79, %cst_40 {dimension_numbers = #tpu.dot_dimension_numbers<[1], [1], [0], [0], [0, 0, 1, 0], [], []>} : vector<8x8xbf16>, vector<8x8xbf16>, vector<8x8xf32> -> vector<8x8xf32>
      %c1 = arith.constant 1 : index
      %c0_41 = arith.constant 0 : index
      %c0_42 = arith.constant 0 : index
      %82 = vector.load %arg7[%c1, %c0_41, %c0_42] : memref<4x8x1xf32, #tpu.memory_space<vmem>>, vector<1x8x1xf32>
      %83 = vector.shape_cast %82 : vector<1x8x1xf32> to vector<8x1xf32>
      %cst_43 = arith.constant -1.000000e+30 : f32
      %84 = vector.broadcast %cst_43 : f32 to vector<8x8xf32>
      %85 = arith.select %29, %81, %84 : vector<8x8xi1>, vector<8x8xf32>
      %cst_44 = arith.constant dense<0xFF800000> : vector<8xf32>
      %86 = vector.multi_reduction <maximumf>, %85, %cst_44 [1] : vector<8x8xf32> to vector<8xf32>
      %87 = vector.shape_cast %86 : vector<8xf32> to vector<8x1xf32>
      %88 = arith.maximumf %83, %87 : vector<8x1xf32>
      %89 = arith.subf %83, %88 : vector<8x1xf32>
      %90 = math.exp %89 : vector<8x1xf32>
      %91 = vector.broadcast %88 : vector<8x1xf32> to vector<8x8xf32>
      %92 = arith.subf %81, %91 : vector<8x8xf32>
      %93 = math.exp %92 : vector<8x8xf32>
      %cst_45 = arith.constant 0.000000e+00 : f32
      %94 = vector.broadcast %cst_45 : f32 to vector<8x8xf32>
      %95 = arith.select %29, %93, %94 : vector<8x8xi1>, vector<8x8xf32>
      %c1_46 = arith.constant 1 : index
      %c0_47 = arith.constant 0 : index
      %c0_48 = arith.constant 0 : index
      %96 = vector.load %arg8[%c1_46, %c0_47, %c0_48] : memref<4x8x1xf32, #tpu.memory_space<vmem>>, vector<1x8x1xf32>
      %97 = vector.shape_cast %96 : vector<1x8x1xf32> to vector<8x1xf32>
      %98 = arith.mulf %90, %97 : vector<8x1xf32>
      %cst_49 = arith.constant dense<0.000000e+00> : vector<8xf32>
      %99 = vector.multi_reduction <add>, %95, %cst_49 [1] : vector<8x8xf32> to vector<8xf32>
      %100 = vector.shape_cast %99 : vector<8xf32> to vector<8x1xf32>
      %101 = arith.addf %98, %100 : vector<8x1xf32>
      %c1_50 = arith.constant 1 : index
      %c0_51 = arith.constant 0 : index
      %c0_52 = arith.constant 0 : index
      %102 = vector.load %arg8[%c1_50, %c0_51, %c0_52] : memref<4x8x1xf32, #tpu.memory_space<vmem>>, vector<1x8x1xf32>
      %103 = vector.shape_cast %102 : vector<1x8x1xf32> to vector<8x1xf32>
      %104 = vector.shape_cast %101 : vector<8x1xf32> to vector<1x8x1xf32>
      tpu.vector_store %arg8[%c1_50, %c0_51, %c0_52], %104 {strides = array<i32>} : memref<4x8x1xf32, #tpu.memory_space<vmem>>, vector<1x8x1xf32>,
      %c1_53 = arith.constant 1 : index
      %c0_54 = arith.constant 0 : index
      %c0_55 = arith.constant 0 : index
      %105 = vector.load %arg9[%c1_53, %c0_54, %c0_55] : memref<4x8x8xf32, #tpu.memory_space<vmem>>, vector<1x8x8xf32>
      %106 = vector.shape_cast %105 : vector<1x8x8xf32> to vector<8x8xf32>
      %107 = vector.broadcast %90 : vector<8x1xf32> to vector<8x8xf32>
      %108 = arith.mulf %107, %106 : vector<8x8xf32>
      %109 = arith.truncf %95 : vector<8x8xf32> to vector<8x8xbf16>
      %cst_56 = arith.constant dense<0.000000e+00> : vector<8x8xf32>
      %110 = tpu.matmul %109, %80, %cst_56 {dimension_numbers = #tpu.dot_dimension_numbers<[1], [0], [0], [1], [0, 0, 1, 1], [], []>} : vector<8x8xbf16>, vector<8x8xbf16>, vector<8x8xf32> -> vector<8x8xf32>
      %111 = arith.addf %108, %110 : vector<8x8xf32>
      %c1_57 = arith.constant 1 : index
      %c0_58 = arith.constant 0 : index
      %c0_59 = arith.constant 0 : index
      %112 = vector.load %arg9[%c1_57, %c0_58, %c0_59] : memref<4x8x8xf32, #tpu.memory_space<vmem>>, vector<1x8x8xf32>
      %113 = vector.shape_cast %112 : vector<1x8x8xf32> to vector<8x8xf32>
      %114 = vector.shape_cast %111 : vector<8x8xf32> to vector<1x8x8xf32>
      tpu.vector_store %arg9[%c1_57, %c0_58, %c0_59], %114 {strides = array<i32>} : memref<4x8x8xf32, #tpu.memory_space<vmem>>, vector<1x8x8xf32>,
      %c1_60 = arith.constant 1 : index
      %c0_61 = arith.constant 0 : index
      %c0_62 = arith.constant 0 : index
      %115 = vector.load %arg7[%c1_60, %c0_61, %c0_62] : memref<4x8x1xf32, #tpu.memory_space<vmem>>, vector<1x8x1xf32>
      %116 = vector.shape_cast %115 : vector<1x8x1xf32> to vector<8x1xf32>
      %117 = vector.shape_cast %88 : vector<8x1xf32> to vector<1x8x1xf32>
      tpu.vector_store %arg7[%c1_60, %c0_61, %c0_62], %117 {strides = array<i32>} : memref<4x8x1xf32, #tpu.memory_space<vmem>>, vector<1x8x1xf32>,
      %118 = vector.extract_strided_slice %14 {offsets = [0, 16], sizes = [8, 8], strides = [1, 1]} : vector<8x32xbf16> to vector<8x8xbf16>
      %119 = arith.extf %118 : vector<8x8xbf16> to vector<8x8xf32>
      %cst_63 = arith.constant 0.353553385 : f32
      %120 = vector.broadcast %cst_63 : f32 to vector<8x8xf32>
      %121 = arith.mulf %119, %120 : vector<8x8xf32>
      %122 = arith.truncf %121 : vector<8x8xf32> to vector<8x8xbf16>
      %123 = vector.extract_strided_slice %16 {offsets = [0, 16], sizes = [8, 8], strides = [1, 1]} : vector<8x64xbf16> to vector<8x8xbf16>
      %124 = vector.extract_strided_slice %16 {offsets = [0, 48], sizes = [8, 8], strides = [1, 1]} : vector<8x64xbf16> to vector<8x8xbf16>
      %cst_64 = arith.constant dense<0.000000e+00> : vector<8x8xf32>
      %125 = tpu.matmul %122, %123, %cst_64 {dimension_numbers = #tpu.dot_dimension_numbers<[1], [1], [0], [0], [0, 0, 1, 0], [], []>} : vector<8x8xbf16>, vector<8x8xbf16>, vector<8x8xf32> -> vector<8x8xf32>
      %c2 = arith.constant 2 : index
      %c0_65 = arith.constant 0 : index
      %c0_66 = arith.constant 0 : index
      %126 = vector.load %arg7[%c2, %c0_65, %c0_66] : memref<4x8x1xf32, #tpu.memory_space<vmem>>, vector<1x8x1xf32>
      %127 = vector.shape_cast %126 : vector<1x8x1xf32> to vector<8x1xf32>
      %cst_67 = arith.constant -1.000000e+30 : f32
      %128 = vector.broadcast %cst_67 : f32 to vector<8x8xf32>
      %129 = arith.select %29, %125, %128 : vector<8x8xi1>, vector<8x8xf32>
      %cst_68 = arith.constant dense<0xFF800000> : vector<8xf32>
      %130 = vector.multi_reduction <maximumf>, %129, %cst_68 [1] : vector<8x8xf32> to vector<8xf32>
      %131 = vector.shape_cast %130 : vector<8xf32> to vector<8x1xf32>
      %132 = arith.maximumf %127, %131 : vector<8x1xf32>
      %133 = arith.subf %127, %132 : vector<8x1xf32>
      %134 = math.exp %133 : vector<8x1xf32>
      %135 = vector.broadcast %132 : vector<8x1xf32> to vector<8x8xf32>
      %136 = arith.subf %125, %135 : vector<8x8xf32>
      %137 = math.exp %136 : vector<8x8xf32>
      %cst_69 = arith.constant 0.000000e+00 : f32
      %138 = vector.broadcast %cst_69 : f32 to vector<8x8xf32>
      %139 = arith.select %29, %137, %138 : vector<8x8xi1>, vector<8x8xf32>
      %c2_70 = arith.constant 2 : index
      %c0_71 = arith.constant 0 : index
      %c0_72 = arith.constant 0 : index
      %140 = vector.load %arg8[%c2_70, %c0_71, %c0_72] : memref<4x8x1xf32, #tpu.memory_space<vmem>>, vector<1x8x1xf32>
      %141 = vector.shape_cast %140 : vector<1x8x1xf32> to vector<8x1xf32>
      %142 = arith.mulf %134, %141 : vector<8x1xf32>
      %cst_73 = arith.constant dense<0.000000e+00> : vector<8xf32>
      %143 = vector.multi_reduction <add>, %139, %cst_73 [1] : vector<8x8xf32> to vector<8xf32>
      %144 = vector.shape_cast %143 : vector<8xf32> to vector<8x1xf32>
      %145 = arith.addf %142, %144 : vector<8x1xf32>
      %c2_74 = arith.constant 2 : index
      %c0_75 = arith.constant 0 : index
      %c0_76 = arith.constant 0 : index
      %146 = vector.load %arg8[%c2_74, %c0_75, %c0_76] : memref<4x8x1xf32, #tpu.memory_space<vmem>>, vector<1x8x1xf32>
      %147 = vector.shape_cast %146 : vector<1x8x1xf32> to vector<8x1xf32>
      %148 = vector.shape_cast %145 : vector<8x1xf32> to vector<1x8x1xf32>
      tpu.vector_store %arg8[%c2_74, %c0_75, %c0_76], %148 {strides = array<i32>} : memref<4x8x1xf32, #tpu.memory_space<vmem>>, vector<1x8x1xf32>,
      %c2_77 = arith.constant 2 : index
      %c0_78 = arith.constant 0 : index
      %c0_79 = arith.constant 0 : index
      %149 = vector.load %arg9[%c2_77, %c0_78, %c0_79] : memref<4x8x8xf32, #tpu.memory_space<vmem>>, vector<1x8x8xf32>
      %150 = vector.shape_cast %149 : vector<1x8x8xf32> to vector<8x8xf32>
      %151 = vector.broadcast %134 : vector<8x1xf32> to vector<8x8xf32>
      %152 = arith.mulf %151, %150 : vector<8x8xf32>
      %153 = arith.truncf %139 : vector<8x8xf32> to vector<8x8xbf16>
      %cst_80 = arith.constant dense<0.000000e+00> : vector<8x8xf32>
      %154 = tpu.matmul %153, %124, %cst_80 {dimension_numbers = #tpu.dot_dimension_numbers<[1], [0], [0], [1], [0, 0, 1, 1], [], []>} : vector<8x8xbf16>, vector<8x8xbf16>, vector<8x8xf32> -> vector<8x8xf32>
      %155 = arith.addf %152, %154 : vector<8x8xf32>
      %c2_81 = arith.constant 2 : index
      %c0_82 = arith.constant 0 : index
      %c0_83 = arith.constant 0 : index
      %156 = vector.load %arg9[%c2_81, %c0_82, %c0_83] : memref<4x8x8xf32, #tpu.memory_space<vmem>>, vector<1x8x8xf32>
      %157 = vector.shape_cast %156 : vector<1x8x8xf32> to vector<8x8xf32>
      %158 = vector.shape_cast %155 : vector<8x8xf32> to vector<1x8x8xf32>
      tpu.vector_store %arg9[%c2_81, %c0_82, %c0_83], %158 {strides = array<i32>} : memref<4x8x8xf32, #tpu.memory_space<vmem>>, vector<1x8x8xf32>,
      %c2_84 = arith.constant 2 : index
      %c0_85 = arith.constant 0 : index
      %c0_86 = arith.constant 0 : index
      %159 = vector.load %arg7[%c2_84, %c0_85, %c0_86] : memref<4x8x1xf32, #tpu.memory_space<vmem>>, vector<1x8x1xf32>
      %160 = vector.shape_cast %159 : vector<1x8x1xf32> to vector<8x1xf32>
      %161 = vector.shape_cast %132 : vector<8x1xf32> to vector<1x8x1xf32>
      tpu.vector_store %arg7[%c2_84, %c0_85, %c0_86], %161 {strides = array<i32>} : memref<4x8x1xf32, #tpu.memory_space<vmem>>, vector<1x8x1xf32>,
      %162 = vector.extract_strided_slice %14 {offsets = [0, 24], sizes = [8, 8], strides = [1, 1]} : vector<8x32xbf16> to vector<8x8xbf16>
      %163 = arith.extf %162 : vector<8x8xbf16> to vector<8x8xf32>
      %cst_87 = arith.constant 0.353553385 : f32
      %164 = vector.broadcast %cst_87 : f32 to vector<8x8xf32>
      %165 = arith.mulf %163, %164 : vector<8x8xf32>
      %166 = arith.truncf %165 : vector<8x8xf32> to vector<8x8xbf16>
      %167 = vector.extract_strided_slice %16 {offsets = [0, 24], sizes = [8, 8], strides = [1, 1]} : vector<8x64xbf16> to vector<8x8xbf16>
      %168 = vector.extract_strided_slice %16 {offsets = [0, 56], sizes = [8, 8], strides = [1, 1]} : vector<8x64xbf16> to vector<8x8xbf16>
      %cst_88 = arith.constant dense<0.000000e+00> : vector<8x8xf32>
      %169 = tpu.matmul %166, %167, %cst_88 {dimension_numbers = #tpu.dot_dimension_numbers<[1], [1], [0], [0], [0, 0, 1, 0], [], []>} : vector<8x8xbf16>, vector<8x8xbf16>, vector<8x8xf32> -> vector<8x8xf32>
      %c3 = arith.constant 3 : index
      %c0_89 = arith.constant 0 : index
      %c0_90 = arith.constant 0 : index
      %170 = vector.load %arg7[%c3, %c0_89, %c0_90] : memref<4x8x1xf32, #tpu.memory_space<vmem>>, vector<1x8x1xf32>
      %171 = vector.shape_cast %170 : vector<1x8x1xf32> to vector<8x1xf32>
      %cst_91 = arith.constant -1.000000e+30 : f32
      %172 = vector.broadcast %cst_91 : f32 to vector<8x8xf32>
      %173 = arith.select %29, %169, %172 : vector<8x8xi1>, vector<8x8xf32>
      %cst_92 = arith.constant dense<0xFF800000> : vector<8xf32>
      %174 = vector.multi_reduction <maximumf>, %173, %cst_92 [1] : vector<8x8xf32> to vector<8xf32>
      %175 = vector.shape_cast %174 : vector<8xf32> to vector<8x1xf32>
      %176 = arith.maximumf %171, %175 : vector<8x1xf32>
      %177 = arith.subf %171, %176 : vector<8x1xf32>
      %178 = math.exp %177 : vector<8x1xf32>
      %179 = vector.broadcast %176 : vector<8x1xf32> to vector<8x8xf32>
      %180 = arith.subf %169, %179 : vector<8x8xf32>
      %181 = math.exp %180 : vector<8x8xf32>
      %cst_93 = arith.constant 0.000000e+00 : f32
      %182 = vector.broadcast %cst_93 : f32 to vector<8x8xf32>
      %183 = arith.select %29, %181, %182 : vector<8x8xi1>, vector<8x8xf32>
      %c3_94 = arith.constant 3 : index
      %c0_95 = arith.constant 0 : index
      %c0_96 = arith.constant 0 : index
      %184 = vector.load %arg8[%c3_94, %c0_95, %c0_96] : memref<4x8x1xf32, #tpu.memory_space<vmem>>, vector<1x8x1xf32>
      %185 = vector.shape_cast %184 : vector<1x8x1xf32> to vector<8x1xf32>
      %186 = arith.mulf %178, %185 : vector<8x1xf32>
      %cst_97 = arith.constant dense<0.000000e+00> : vector<8xf32>
      %187 = vector.multi_reduction <add>, %183, %cst_97 [1] : vector<8x8xf32> to vector<8xf32>
      %188 = vector.shape_cast %187 : vector<8xf32> to vector<8x1xf32>
      %189 = arith.addf %186, %188 : vector<8x1xf32>
      %c3_98 = arith.constant 3 : index
      %c0_99 = arith.constant 0 : index
      %c0_100 = arith.constant 0 : index
      %190 = vector.load %arg8[%c3_98, %c0_99, %c0_100] : memref<4x8x1xf32, #tpu.memory_space<vmem>>, vector<1x8x1xf32>
      %191 = vector.shape_cast %190 : vector<1x8x1xf32> to vector<8x1xf32>
      %192 = vector.shape_cast %189 : vector<8x1xf32> to vector<1x8x1xf32>
      tpu.vector_store %arg8[%c3_98, %c0_99, %c0_100], %192 {strides = array<i32>} : memref<4x8x1xf32, #tpu.memory_space<vmem>>, vector<1x8x1xf32>,
      %c3_101 = arith.constant 3 : index
      %c0_102 = arith.constant 0 : index
      %c0_103 = arith.constant 0 : index
      %193 = vector.load %arg9[%c3_101, %c0_102, %c0_103] : memref<4x8x8xf32, #tpu.memory_space<vmem>>, vector<1x8x8xf32>
      %194 = vector.shape_cast %193 : vector<1x8x8xf32> to vector<8x8xf32>
      %195 = vector.broadcast %178 : vector<8x1xf32> to vector<8x8xf32>
      %196 = arith.mulf %195, %194 : vector<8x8xf32>
      %197 = arith.truncf %183 : vector<8x8xf32> to vector<8x8xbf16>
      %cst_104 = arith.constant dense<0.000000e+00> : vector<8x8xf32>
      %198 = tpu.matmul %197, %168, %cst_104 {dimension_numbers = #tpu.dot_dimension_numbers<[1], [0], [0], [1], [0, 0, 1, 1], [], []>} : vector<8x8xbf16>, vector<8x8xbf16>, vector<8x8xf32> -> vector<8x8xf32>
      %199 = arith.addf %196, %198 : vector<8x8xf32>
      %c3_105 = arith.constant 3 : index
      %c0_106 = arith.constant 0 : index
      %c0_107 = arith.constant 0 : index
      %200 = vector.load %arg9[%c3_105, %c0_106, %c0_107] : memref<4x8x8xf32, #tpu.memory_space<vmem>>, vector<1x8x8xf32>
      %201 = vector.shape_cast %200 : vector<1x8x8xf32> to vector<8x8xf32>
      %202 = vector.shape_cast %199 : vector<8x8xf32> to vector<1x8x8xf32>
      tpu.vector_store %arg9[%c3_105, %c0_106, %c0_107], %202 {strides = array<i32>} : memref<4x8x8xf32, #tpu.memory_space<vmem>>, vector<1x8x8xf32>,
      %c3_108 = arith.constant 3 : index
      %c0_109 = arith.constant 0 : index
      %c0_110 = arith.constant 0 : index
      %203 = vector.load %arg7[%c3_108, %c0_109, %c0_110] : memref<4x8x1xf32, #tpu.memory_space<vmem>>, vector<1x8x1xf32>
      %204 = vector.shape_cast %203 : vector<1x8x1xf32> to vector<8x1xf32>
      %205 = vector.shape_cast %176 : vector<8x1xf32> to vector<1x8x1xf32>
      tpu.vector_store %arg7[%c3_108, %c0_109, %c0_110], %205 {strides = array<i32>} : memref<4x8x1xf32, #tpu.memory_space<vmem>>, vector<1x8x1xf32>,
    } else {
    }
    %c0_i32_4 = arith.constant 0 : i32
    %10 = arith.cmpi eq, %arg2, %c0_i32_4 : i32
    %11 = arith.extui %10 : i1 to i32
    %c0_i32_5 = arith.constant 0 : i32
    %12 = arith.cmpi ne, %11, %c0_i32_5 : i32
    scf.if %12 {
      %c0 = arith.constant 0 : index
      %c0_6 = arith.constant 0 : index
      %c0_7 = arith.constant 0 : index
      %13 = vector.load %arg8[%c0, %c0_6, %c0_7] : memref<4x8x1xf32, #tpu.memory_space<vmem>>, vector<1x8x1xf32>
      %14 = vector.shape_cast %13 : vector<1x8x1xf32> to vector<8x1xf32>
      %15 = tpu.reciprocal %14 {approx = true} : vector<8x1xf32> -> vector<8x1xf32>
      %cst = arith.constant 0.000000e+00 : f32
      %16 = vector.broadcast %cst : f32 to vector<8x1xf32>
      %17 = arith.cmpf ogt, %14, %16 : vector<8x1xf32>
      %c0_8 = arith.constant 0 : index
      %c0_9 = arith.constant 0 : index
      %c0_10 = arith.constant 0 : index
      %18 = vector.load %arg9[%c0_8, %c0_9, %c0_10] : memref<4x8x8xf32, #tpu.memory_space<vmem>>, vector<1x8x8xf32>
      %19 = vector.shape_cast %18 : vector<1x8x8xf32> to vector<8x8xf32>
      %20 = vector.broadcast %15 : vector<8x1xf32> to vector<8x8xf32>
      %21 = arith.mulf %19, %20 : vector<8x8xf32>
      %cst_11 = arith.constant 0.000000e+00 : f32
      %22 = vector.shape_cast %17 : vector<8x1xi1> to vector<8x1xi1>
      %23 = vector.broadcast %22 : vector<8x1xi1> to vector<8x8xi1>
      %24 = vector.broadcast %cst_11 : f32 to vector<8x8xf32>
      %25 = arith.select %23, %21, %24 : vector<8x8xi1>, vector<8x8xf32>
      %c1 = arith.constant 1 : index
      %c0_12 = arith.constant 0 : index
      %c0_13 = arith.constant 0 : index
      %26 = vector.load %arg8[%c1, %c0_12, %c0_13] : memref<4x8x1xf32, #tpu.memory_space<vmem>>, vector<1x8x1xf32>
      %27 = vector.shape_cast %26 : vector<1x8x1xf32> to vector<8x1xf32>
      %28 = tpu.reciprocal %27 {approx = true} : vector<8x1xf32> -> vector<8x1xf32>
      %cst_14 = arith.constant 0.000000e+00 : f32
      %29 = vector.broadcast %cst_14 : f32 to vector<8x1xf32>
      %30 = arith.cmpf ogt, %27, %29 : vector<8x1xf32>
      %c1_15 = arith.constant 1 : index
      %c0_16 = arith.constant 0 : index
      %c0_17 = arith.constant 0 : index
      %31 = vector.load %arg9[%c1_15, %c0_16, %c0_17] : memref<4x8x8xf32, #tpu.memory_space<vmem>>, vector<1x8x8xf32>
      %32 = vector.shape_cast %31 : vector<1x8x8xf32> to vector<8x8xf32>
      %33 = vector.broadcast %28 : vector<8x1xf32> to vector<8x8xf32>
      %34 = arith.mulf %32, %33 : vector<8x8xf32>
      %cst_18 = arith.constant 0.000000e+00 : f32
      %35 = vector.shape_cast %30 : vector<8x1xi1> to vector<8x1xi1>
      %36 = vector.broadcast %35 : vector<8x1xi1> to vector<8x8xi1>
      %37 = vector.broadcast %cst_18 : f32 to vector<8x8xf32>
      %38 = arith.select %36, %34, %37 : vector<8x8xi1>, vector<8x8xf32>
      %c2 = arith.constant 2 : index
      %c0_19 = arith.constant 0 : index
      %c0_20 = arith.constant 0 : index
      %39 = vector.load %arg8[%c2, %c0_19, %c0_20] : memref<4x8x1xf32, #tpu.memory_space<vmem>>, vector<1x8x1xf32>
      %40 = vector.shape_cast %39 : vector<1x8x1xf32> to vector<8x1xf32>
      %41 = tpu.reciprocal %40 {approx = true} : vector<8x1xf32> -> vector<8x1xf32>
      %cst_21 = arith.constant 0.000000e+00 : f32
      %42 = vector.broadcast %cst_21 : f32 to vector<8x1xf32>
      %43 = arith.cmpf ogt, %40, %42 : vector<8x1xf32>
      %c2_22 = arith.constant 2 : index
      %c0_23 = arith.constant 0 : index
      %c0_24 = arith.constant 0 : index
      %44 = vector.load %arg9[%c2_22, %c0_23, %c0_24] : memref<4x8x8xf32, #tpu.memory_space<vmem>>, vector<1x8x8xf32>
      %45 = vector.shape_cast %44 : vector<1x8x8xf32> to vector<8x8xf32>
      %46 = vector.broadcast %41 : vector<8x1xf32> to vector<8x8xf32>
      %47 = arith.mulf %45, %46 : vector<8x8xf32>
      %cst_25 = arith.constant 0.000000e+00 : f32
      %48 = vector.shape_cast %43 : vector<8x1xi1> to vector<8x1xi1>
      %49 = vector.broadcast %48 : vector<8x1xi1> to vector<8x8xi1>
      %50 = vector.broadcast %cst_25 : f32 to vector<8x8xf32>
      %51 = arith.select %49, %47, %50 : vector<8x8xi1>, vector<8x8xf32>
      %c3 = arith.constant 3 : index
      %c0_26 = arith.constant 0 : index
      %c0_27 = arith.constant 0 : index
      %52 = vector.load %arg8[%c3, %c0_26, %c0_27] : memref<4x8x1xf32, #tpu.memory_space<vmem>>, vector<1x8x1xf32>
      %53 = vector.shape_cast %52 : vector<1x8x1xf32> to vector<8x1xf32>
      %54 = tpu.reciprocal %53 {approx = true} : vector<8x1xf32> -> vector<8x1xf32>
      %cst_28 = arith.constant 0.000000e+00 : f32
      %55 = vector.broadcast %cst_28 : f32 to vector<8x1xf32>
      %56 = arith.cmpf ogt, %53, %55 : vector<8x1xf32>
      %c3_29 = arith.constant 3 : index
      %c0_30 = arith.constant 0 : index
      %c0_31 = arith.constant 0 : index
      %57 = vector.load %arg9[%c3_29, %c0_30, %c0_31] : memref<4x8x8xf32, #tpu.memory_space<vmem>>, vector<1x8x8xf32>
      %58 = vector.shape_cast %57 : vector<1x8x8xf32> to vector<8x8xf32>
      %59 = vector.broadcast %54 : vector<8x1xf32> to vector<8x8xf32>
      %60 = arith.mulf %58, %59 : vector<8x8xf32>
      %cst_32 = arith.constant 0.000000e+00 : f32
      %61 = vector.shape_cast %56 : vector<8x1xi1> to vector<8x1xi1>
      %62 = vector.broadcast %61 : vector<8x1xi1> to vector<8x8xi1>
      %63 = vector.broadcast %cst_32 : f32 to vector<8x8xf32>
      %64 = arith.select %62, %60, %63 : vector<8x8xi1>, vector<8x8xf32>
      %65 = tpu.concatenate %25, %38, %51, %64 in 1 : vector<8x8xf32>, vector<8x8xf32>, vector<8x8xf32>, vector<8x8xf32> -> vector<8x32xf32>
      %66 = vector.shape_cast %65 : vector<8x32xf32> to vector<1x8x32xf32>
      %67 = arith.truncf %66 : vector<1x8x32xf32> to vector<1x8x32xbf16>
      %c0_33 = arith.constant 0 : index
      %c0_34 = arith.constant 0 : index
      %c0_35 = arith.constant 0 : index
      %68 = vector.load %arg6[%c0_33, %c0_34, %c0_35] : memref<1x8x32xbf16, #tpu.memory_space<vmem>>, vector<1x8x32xbf16>
      tpu.vector_store %arg6[%c0_33, %c0_34, %c0_35], %67 {strides = array<i32>} : memref<1x8x32xbf16, #tpu.memory_space<vmem>>, vector<1x8x32xbf16>,
    } else {
    }
    return
  }
  func.func @transform_0(%arg0: i32, %arg1: i32, %arg2: i32) -> (i32, i32, i32) {
    %c0_i32 = arith.constant 0 : i32
    %c0_i32_0 = arith.constant 0 : i32
    return %arg0, %arg1, %c0_i32 : i32, i32, i32
  }
  func.func @transform_1(%arg0: i32, %arg1: i32, %arg2: i32) -> (i32, i32, i32) {
    %c0_i32 = arith.constant 0 : i32
    %c0_i32_0 = arith.constant 0 : i32
    return %arg0, %arg2, %c0_i32 : i32, i32, i32
  }
  func.func @transform_2(%arg0: i32, %arg1: i32, %arg2: i32) -> (i32, i32, i32) {
    %c0_i32 = arith.constant 0 : i32
    %c0_i32_0 = arith.constant 0 : i32
    return %arg0, %c0_i32, %arg2 : i32, i32, i32
  }
  func.func @transform_3(%arg0: i32, %arg1: i32, %arg2: i32) -> (i32, i32, i32) {
    %c0_i32 = arith.constant 0 : i32
    %c0_i32_0 = arith.constant 0 : i32
    return %arg0, %arg1, %c0_i32 : i32, i32, i32
  }
}

module attributes {stable_mosaic.version = 11 : i64} {
  func.func @_ln_kernel(%arg0: i32, %arg1: memref<16x32xbf16, #tpu.memory_space<vmem>>, %arg2: memref<1x32xf32, #tpu.memory_space<vmem>>, %arg3: memref<1x32xf32, #tpu.memory_space<vmem>>, %arg4: memref<16x32xbf16, #tpu.memory_space<vmem>>) attributes {dimension_semantics = [#tpu.dimension_semantics<parallel>], iteration_bounds = array<i64: 1>, scalar_prefetch = 0 : i64, scratch_operands = 0 : i64, tpu.core_type = #tpu.core_type<tc>, window_params = [{transform_indices = @transform_0, window_bounds = array<i64: 16, 32>}, {pipeline_mode = #tpu.pipeline_mode<synchronous>, transform_indices = @transform_1, window_bounds = array<i64: 1, 32>}, {pipeline_mode = #tpu.pipeline_mode<synchronous>, transform_indices = @transform_2, window_bounds = array<i64: 1, 32>}, {transform_indices = @transform_3, window_bounds = array<i64: 16, 32>}]} {
    %c0 = arith.constant 0 : index
    %c0_0 = arith.constant 0 : index
    %0 = vector.load %arg1[%c0, %c0_0] : memref<16x32xbf16, #tpu.memory_space<vmem>>, vector<16x32xbf16>
    %1 = arith.extf %0 : vector<16x32xbf16> to vector<16x32xf32>
    %cst = arith.constant dense<0.000000e+00> : vector<16xf32>
    %2 = vector.multi_reduction <add>, %1, %cst [1] : vector<16x32xf32> to vector<16xf32>
    %3 = vector.shape_cast %2 : vector<16xf32> to vector<16x1xf32>
    %cst_1 = arith.constant 3.200000e+01 : f32
    %4 = vector.broadcast %cst_1 : f32 to vector<16x1xf32>
    %5 = arith.divf %3, %4 : vector<16x1xf32>
    %6 = vector.broadcast %5 : vector<16x1xf32> to vector<16x32xf32>
    %7 = arith.subf %1, %6 : vector<16x32xf32>
    %8 = arith.mulf %7, %7 : vector<16x32xf32>
    %cst_2 = arith.constant dense<0.000000e+00> : vector<16xf32>
    %9 = vector.multi_reduction <add>, %8, %cst_2 [1] : vector<16x32xf32> to vector<16xf32>
    %10 = vector.shape_cast %9 : vector<16xf32> to vector<16x1xf32>
    %cst_3 = arith.constant 3.200000e+01 : f32
    %11 = vector.broadcast %cst_3 : f32 to vector<16x1xf32>
    %12 = arith.divf %10, %11 : vector<16x1xf32>
    %13 = vector.broadcast %5 : vector<16x1xf32> to vector<16x32xf32>
    %14 = arith.subf %1, %13 : vector<16x32xf32>
    %cst_4 = arith.constant 9.99999974E-6 : f32
    %15 = vector.broadcast %cst_4 : f32 to vector<16x1xf32>
    %16 = arith.addf %12, %15 : vector<16x1xf32>
    %17 = math.rsqrt %16 : vector<16x1xf32>
    %18 = vector.broadcast %17 : vector<16x1xf32> to vector<16x32xf32>
    %19 = arith.mulf %14, %18 : vector<16x32xf32>
    %c0_5 = arith.constant 0 : index
    %c0_6 = arith.constant 0 : index
    %20 = vector.load %arg2[%c0_5, %c0_6] : memref<1x32xf32, #tpu.memory_space<vmem>>, vector<1x32xf32>
    %21 = vector.broadcast %20 : vector<1x32xf32> to vector<16x32xf32>
    %22 = arith.mulf %19, %21 : vector<16x32xf32>
    %c0_7 = arith.constant 0 : index
    %c0_8 = arith.constant 0 : index
    %23 = vector.load %arg3[%c0_7, %c0_8] : memref<1x32xf32, #tpu.memory_space<vmem>>, vector<1x32xf32>
    %24 = vector.broadcast %23 : vector<1x32xf32> to vector<16x32xf32>
    %25 = arith.addf %22, %24 : vector<16x32xf32>
    %26 = arith.truncf %25 : vector<16x32xf32> to vector<16x32xbf16>
    %c0_9 = arith.constant 0 : index
    %c0_10 = arith.constant 0 : index
    %27 = vector.load %arg4[%c0_9, %c0_10] : memref<16x32xbf16, #tpu.memory_space<vmem>>, vector<16x32xbf16>
    tpu.vector_store %arg4[%c0_9, %c0_10], %26 {strides = array<i32>} : memref<16x32xbf16, #tpu.memory_space<vmem>>, vector<16x32xbf16>,
    return
  }
  func.func @transform_0(%arg0: i32) -> (i32, i32) {
    %c0_i32 = arith.constant 0 : i32
    %c0_i32_0 = arith.constant 0 : i32
    return %arg0, %c0_i32 : i32, i32
  }
  func.func @transform_1(%arg0: i32) -> (i32, i32) {
    %c0_i32 = arith.constant 0 : i32
    %c0_i32_0 = arith.constant 0 : i32
    %c0_i32_1 = arith.constant 0 : i32
    return %c0_i32, %c0_i32_0 : i32, i32
  }
  func.func @transform_2(%arg0: i32) -> (i32, i32) {
    %c0_i32 = arith.constant 0 : i32
    %c0_i32_0 = arith.constant 0 : i32
    %c0_i32_1 = arith.constant 0 : i32
    return %c0_i32, %c0_i32_0 : i32, i32
  }
  func.func @transform_3(%arg0: i32) -> (i32, i32) {
    %c0_i32 = arith.constant 0 : i32
    %c0_i32_0 = arith.constant 0 : i32
    return %arg0, %c0_i32 : i32, i32
  }
}

module attributes {stable_mosaic.version = 11 : i64} {
  func.func @_fused_linear_kernel(%arg0: i32, %arg1: i32, %arg2: memref<16x128xbf16, #tpu.memory_space<vmem>>, %arg3: memref<128x32xbf16, #tpu.memory_space<vmem>>, %arg4: memref<1x32xf32, #tpu.memory_space<vmem>>, %arg5: memref<16x32xbf16, #tpu.memory_space<vmem>>, %arg6: memref<16x32xbf16, #tpu.memory_space<vmem>>) attributes {dimension_semantics = [#tpu.dimension_semantics<parallel>, #tpu.dimension_semantics<parallel>], iteration_bounds = array<i64: 1, 1>, scalar_prefetch = 0 : i64, scratch_operands = 0 : i64, tpu.core_type = #tpu.core_type<tc>, window_params = [{transform_indices = @transform_0, window_bounds = array<i64: 16, 128>}, {transform_indices = @transform_1, window_bounds = array<i64: 128, 32>}, {transform_indices = @transform_2, window_bounds = array<i64: 1, 32>}, {transform_indices = @transform_3, window_bounds = array<i64: 16, 32>}, {transform_indices = @transform_4, window_bounds = array<i64: 16, 32>}]} {
    %c0 = arith.constant 0 : index
    %c0_0 = arith.constant 0 : index
    %0 = vector.load %arg2[%c0, %c0_0] : memref<16x128xbf16, #tpu.memory_space<vmem>>, vector<16x128xbf16>
    %c0_1 = arith.constant 0 : index
    %c0_2 = arith.constant 0 : index
    %1 = vector.load %arg3[%c0_1, %c0_2] : memref<128x32xbf16, #tpu.memory_space<vmem>>, vector<128x32xbf16>
    %cst = arith.constant dense<0.000000e+00> : vector<16x32xf32>
    %2 = tpu.matmul %0, %1, %cst {dimension_numbers = #tpu.dot_dimension_numbers<[1], [0], [0], [1], [0, 0, 1, 1], [], []>} : vector<16x128xbf16>, vector<128x32xbf16>, vector<16x32xf32> -> vector<16x32xf32>
    %c0_3 = arith.constant 0 : index
    %c0_4 = arith.constant 0 : index
    %3 = vector.load %arg4[%c0_3, %c0_4] : memref<1x32xf32, #tpu.memory_space<vmem>>, vector<1x32xf32>
    %4 = vector.broadcast %3 : vector<1x32xf32> to vector<16x32xf32>
    %5 = arith.addf %2, %4 : vector<16x32xf32>
    %c0_5 = arith.constant 0 : index
    %c0_6 = arith.constant 0 : index
    %6 = vector.load %arg5[%c0_5, %c0_6] : memref<16x32xbf16, #tpu.memory_space<vmem>>, vector<16x32xbf16>
    %7 = arith.extf %6 : vector<16x32xbf16> to vector<16x32xf32>
    %8 = arith.addf %5, %7 : vector<16x32xf32>
    %9 = arith.truncf %8 : vector<16x32xf32> to vector<16x32xbf16>
    %c0_7 = arith.constant 0 : index
    %c0_8 = arith.constant 0 : index
    %10 = vector.load %arg6[%c0_7, %c0_8] : memref<16x32xbf16, #tpu.memory_space<vmem>>, vector<16x32xbf16>
    tpu.vector_store %arg6[%c0_7, %c0_8], %9 {strides = array<i32>} : memref<16x32xbf16, #tpu.memory_space<vmem>>, vector<16x32xbf16>,
    return
  }
  func.func @transform_0(%arg0: i32, %arg1: i32) -> (i32, i32) {
    %c0_i32 = arith.constant 0 : i32
    %c0_i32_0 = arith.constant 0 : i32
    return %arg0, %c0_i32 : i32, i32
  }
  func.func @transform_1(%arg0: i32, %arg1: i32) -> (i32, i32) {
    %c0_i32 = arith.constant 0 : i32
    %c0_i32_0 = arith.constant 0 : i32
    return %c0_i32, %arg1 : i32, i32
  }
  func.func @transform_2(%arg0: i32, %arg1: i32) -> (i32, i32) {
    %c0_i32 = arith.constant 0 : i32
    %c0_i32_0 = arith.constant 0 : i32
    return %c0_i32, %arg1 : i32, i32
  }
  func.func @transform_3(%arg0: i32, %arg1: i32) -> (i32, i32) {
    %c0_i32 = arith.constant 0 : i32
    return %arg0, %arg1 : i32, i32
  }
  func.func @transform_4(%arg0: i32, %arg1: i32) -> (i32, i32) {
    %c0_i32 = arith.constant 0 : i32
    return %arg0, %arg1 : i32, i32
  }
}

module attributes {stable_mosaic.version = 11 : i64} {
  func.func @_fused_linear_kernel(%arg0: i32, %arg1: i32, %arg2: memref<16x32xbf16, #tpu.memory_space<vmem>>, %arg3: memref<32x64xbf16, #tpu.memory_space<vmem>>, %arg4: memref<16x64xf32, #tpu.memory_space<vmem>>) attributes {dimension_semantics = [#tpu.dimension_semantics<parallel>, #tpu.dimension_semantics<parallel>], iteration_bounds = array<i64: 1, 1>, scalar_prefetch = 0 : i64, scratch_operands = 0 : i64, tpu.core_type = #tpu.core_type<tc>, window_params = [{transform_indices = @transform_0, window_bounds = array<i64: 16, 32>}, {transform_indices = @transform_1, window_bounds = array<i64: 32, 64>}, {transform_indices = @transform_2, window_bounds = array<i64: 16, 64>}]} {
    %c0 = arith.constant 0 : index
    %c0_0 = arith.constant 0 : index
    %0 = vector.load %arg2[%c0, %c0_0] : memref<16x32xbf16, #tpu.memory_space<vmem>>, vector<16x32xbf16>
    %c0_1 = arith.constant 0 : index
    %c0_2 = arith.constant 0 : index
    %1 = vector.load %arg3[%c0_1, %c0_2] : memref<32x64xbf16, #tpu.memory_space<vmem>>, vector<32x64xbf16>
    %cst = arith.constant dense<0.000000e+00> : vector<16x64xf32>
    %2 = tpu.matmul %0, %1, %cst {dimension_numbers = #tpu.dot_dimension_numbers<[1], [0], [0], [1], [0, 0, 1, 1], [], []>} : vector<16x32xbf16>, vector<32x64xbf16>, vector<16x64xf32> -> vector<16x64xf32>
    %c0_3 = arith.constant 0 : index
    %c0_4 = arith.constant 0 : index
    %3 = vector.load %arg4[%c0_3, %c0_4] : memref<16x64xf32, #tpu.memory_space<vmem>>, vector<16x64xf32>
    tpu.vector_store %arg4[%c0_3, %c0_4], %2 {strides = array<i32>} : memref<16x64xf32, #tpu.memory_space<vmem>>, vector<16x64xf32>,
    return
  }
  func.func @transform_0(%arg0: i32, %arg1: i32) -> (i32, i32) {
    %c0_i32 = arith.constant 0 : i32
    %c0_i32_0 = arith.constant 0 : i32
    return %arg0, %c0_i32 : i32, i32
  }
  func.func @transform_1(%arg0: i32, %arg1: i32) -> (i32, i32) {
    %c0_i32 = arith.constant 0 : i32
    %c0_i32_0 = arith.constant 0 : i32
    return %c0_i32, %arg1 : i32, i32
  }
  func.func @transform_2(%arg0: i32, %arg1: i32) -> (i32, i32) {
    %c0_i32 = arith.constant 0 : i32
    return %arg0, %arg1 : i32, i32
  }
}

</mosaic_0001>

<llo_original>
// kernel: chat_model_forward.12
$region0: #{chat_model_forward.12}
  #allocation0 [shape = 'u32[]', space=smem, size = 0x4, offset = 0x4, fixed_abs, tag = 'smem constant byte address 0x4 - core index']
  #allocation1 [shape = 'u32[144,128]{1,0:T(1,128)}', space=vmem, size = 0x12000, scoped, tag = 'internal scratch']
  %s0 = inlined_call_operand.vmem [shape: bf16[16,32], index: 0, kind: input, shape index: {}]
  %s1 = inlined_call_operand.vmem [shape: bf16[32,96], index: 1, kind: input, shape index: {}]
  %s2 = inlined_call_operand.vmem [shape: f32[1,96], index: 2, kind: input, shape index: {}]
  %s3 = inlined_call_operand.vmem [shape: f32[1,32], index: 3, kind: input, shape index: {}]
  %s4 = inlined_call_operand.vmem [shape: f32[1,32], index: 4, kind: input, shape index: {}]
  %s5 = inlined_call_operand.vmem [shape: bf16[16,96], index: 5, kind: output, shape index: {}]
  %s6 = sld [smem:[#allocation0]]
  $region30: #{chat_model_forward.12} parent=0
    _
  %s8 = ssub.s32 1, %s6
  %s9 = scalar_select 0, %s8, %s6
  // Predicated region
  $region2: #{chat_model_forward.12} parent=0 // pred_check
    _
  $region3: #{chat_model_forward.12} parent=0 // pred_check_branch
    %11 = sbr.rel (0) target = $region5
  $region4: #{chat_model_forward.12} parent=0 // pred_region
    _
  $region5: #{chat_model_forward.12} parent=0 // pred_fallthru
    _
  // Predicated region
  $region6: #{chat_model_forward.12} parent=0 // pred_check
    _
  $region7: #{chat_model_forward.12} parent=0 // pred_check_branch
    %13 = sbr.rel (0) target = $region9
  $region8: #{chat_model_forward.12} parent=0 // pred_region
    _
  $region9: #{chat_model_forward.12} parent=0 // pred_fallthru
    _
  // Predicated region
  $region10: #{chat_model_forward.12} parent=0 // pred_check
    _
  $region11: #{chat_model_forward.12} parent=0 // pred_check_branch
    %15 = sbr.rel (0) target = $region13
  $region12: #{chat_model_forward.12} parent=0 // pred_region
    _
  $region13: #{chat_model_forward.12} parent=0 // pred_fallthru
    _
  // Predicated region
  $region14: #{chat_model_forward.12} parent=0 // pred_check
    _
  $region15: #{chat_model_forward.12} parent=0 // pred_check_branch
    %17 = sbr.rel (0) target = $region17
  $region16: #{chat_model_forward.12} parent=0 // pred_region
    _
  $region17: #{chat_model_forward.12} parent=0 // pred_fallthru
    _
  // Predicated region
  $region18: #{chat_model_forward.12} parent=0 // pred_check
    _
  $region19: #{chat_model_forward.12} parent=0 // pred_check_branch
    %19 = sbr.rel (0) target = $region21
  $region20: #{chat_model_forward.12} parent=0 // pred_region
    _
  $region21: #{chat_model_forward.12} parent=0 // pred_fallthru
    _
  %v21 = vld [vmem:[%s0] sm:$0xf]
  %v22 = vld [vmem:[%s0 + $0x4] sm:$0xf]
  %v23 = vunpack.c.l.bf16 %v21
  %v24 = vunpack.c.l.bf16 %v22
  %vm25 = vcmask 261120
  %v26 = vsel %vm25, %v23, 0.0
  %27 = vadd.xlane.f32.xlu0 %v26
  %v28 = vpop.xlane.xlu0 %27
  %v29 = vsel %vm25, %v24, 0.0
  %30 = vadd.xlane.f32.xlu0 %v29
  %v31 = vpop.xlane.xlu0 %30
  %v32 = vrcp.pop 32.0
  %v33 = vmul.f32 %v28, %v32
  %v34 = vmul.f32 %v31, %v32
  %v35 = vsub.f32 %v23, %v33
  %v36 = vsub.f32 %v24, %v34
  %v37 = vmul.f32 %v35, %v35
  %v38 = vmul.f32 %v36, %v36
  %v39 = vsel %vm25, %v37, 0.0
  %40 = vadd.xlane.f32.xlu0 %v39
  %v41 = vpop.xlane.xlu0 %40
  %v42 = vsel %vm25, %v38, 0.0
  %43 = vadd.xlane.f32.xlu0 %v42
  %v44 = vpop.xlane.xlu0 %43
  %v45 = vmul.f32 %v41, %v32
  %v46 = vmul.f32 %v44, %v32
  %v47 = vadd.f32 %v45, 1e-05
  %v48 = vadd.f32 %v46, 1e-05
  %v49 = vrsqrt.pop %v47
  %v50 = vrsqrt.pop %v48
  %v51 = vmul.f32 %v35, %v49
  %v52 = vmul.f32 %v36, %v50
  %v53 = vld [vmem:[%s3] sm:$0x1]
  %v55 = vlaneseq
  %v56 = vshrl.u32 %v55, 7
  %v57 = vsub.s32 0, %v56
  %v58 = vrot.slane %v53, %v57
  %v60 = vmul.f32 %v51, %v58
  %v61 = vmul.f32 %v52, %v58
  %v62 = vld [vmem:[%s4] sm:$0x1]
  %v64 = vlaneseq
  %v65 = vshrl.u32 %v64, 7
  %v66 = vsub.s32 0, %v65
  %v67 = vrot.slane %v62, %v66
  %v69 = vadd.f32 %v60, %v67
  %v70 = vadd.f32 %v61, %v67
  %v71 = vpack.c.bf16 %v70, %v69
  %v72 = vld [vmem:[%s1] sm:$0xf]
  %v73 = vld [vmem:[%s1 + $0x4] sm:$0xf]
  %v74 = vld [vmem:[%s1 + $0x8] sm:$0xf]
  %v75 = vld [vmem:[%s1 + $0xc] sm:$0xf]
  %v76 = vld [vmem:[%s2] sm:$0x1]
  %v78 = vlaneseq
  %v79 = vshrl.u32 %v78, 7
  %v80 = vsub.s32 0, %v79
  %v81 = vrot.slane %v76, %v80
  %v87 = vunpack.c.l.b16 %v72
  %v88 = vunpack.c.l.b16 %v73
  %v89 = vunpack.c.l.b16 %v74
  %v90 = vunpack.c.l.b16 %v75
  %v91 = vpack.c.b16 %v88, %v87
  %v92 = vpack.c.b16 %v90, %v89
  %v96 = vsel %vm25, %v71, 0
  %98 = vmatprep.subr.bf16.mxu0 0
  %99 = vmatpush1.bf16.msra.mxu0 %v91
  %100 = vmatprep.subr.bf16.mxu0 0
  %101 = vmatpush1.bf16.msra.mxu0 %v92
  %102 = vmatprep.subr.bf16.mxu0 0
  %103 = vmatpush1.bf16.msra.mxu0 0
  %104 = vmatprep.subr.bf16.mxu0 0
  %105 = vmatpush1.bf16.msra.mxu0 0
  %106 = vmatprep.subr.bf16.mxu0 0
  %107 = vmatpush1.bf16.msra.mxu0 0
  %108 = vmatprep.subr.bf16.mxu0 0
  %109 = vmatpush1.bf16.msra.mxu0 0
  %110 = vmatprep.subr.bf16.mxu0 0
  %111 = vmatpush1.bf16.msra.mxu0 0
  %112 = vmatprep.subr.bf16.mxu0 0
  %113 = vmatpush1.bf16.msra.mxu0 0
  %114 = vmatprep.subr.bf16.mxu0 0
  %115 = vmatpush1.bf16.msra.mxu0 0
  %116 = vmatprep.subr.bf16.mxu0 0
  %117 = vmatpush1.bf16.msra.mxu0 0
  %118 = vmatprep.subr.bf16.mxu0 0
  %119 = vmatpush1.bf16.msra.mxu0 0
  %120 = vmatprep.subr.bf16.mxu0 0
  %121 = vmatpush1.bf16.msra.mxu0 0
  %122 = vmatprep.subr.bf16.mxu0 0
  %123 = vmatpush1.bf16.msra.mxu0 0
  %124 = vmatprep.subr.bf16.mxu0 0
  %125 = vmatpush1.bf16.msra.mxu0 0
  %126 = vmatprep.subr.bf16.mxu0 0
  %127 = vmatpush1.bf16.msra.mxu0 0
  %128 = vmatprep.subr.bf16.mxu0 0
  %129 = vmatpush1.bf16.msra.mxu0 0
  %130 = vmatprep.mubr.bf16.mxu0 0
  %131 = vmatmul.mubr.bf16.gmra.mrb[0].mxu0 %v96
  %v132 = vpop.f32.mrb[0].mxu0
  %v133 = vadd.f32 %v81, %v132
  %v134 = vpop.f32.mrb[0].mxu0
  %v135 = vpop.f32.mrb[0].mxu0
  %v136 = vadd.f32 %v81, %v135
  %v137 = vpop.f32.mrb[0].mxu0
  %138 = vdwg.mxu0
  %v139 = vpack.c.bf16 %v136, %v133
  %v141 = vunpack.c.l.b16 %v139
  %v142 = vunpack.c.h.b16 %v139
  %v143 = vpack.c.b16 %v141, %v141
  %v144 = vpack.c.b16 %v142, %v142
  %vm147 = vcmask 781312
  %148 = vst.msk [vmem:[%s5] sm:$0xf] %vm147, %v143
  %149 = vst.msk [vmem:[%s5 + $0x4] sm:$0xf] %vm147, %v144
  // Predicated region
  $region22: #{chat_model_forward.12} parent=0 // pred_check
    _
  $region23: #{chat_model_forward.12} parent=0 // pred_check_branch
    %151 = sbr.rel (0) target = $region25
  $region24: #{chat_model_forward.12} parent=0 // pred_region
    _
  $region25: #{chat_model_forward.12} parent=0 // pred_fallthru
    _
  // Predicated region
  $region26: #{chat_model_forward.12} parent=0 // pred_check
    _
  $region27: #{chat_model_forward.12} parent=0 // pred_check_branch
    %153 = sbr.rel (0) target = $region29
  $region28: #{chat_model_forward.12} parent=0 // pred_region
    _
  $region29: #{chat_model_forward.12} parent=0 // pred_fallthru
    _

// kernel: chat_model_forward.14
$region0: #{chat_model_forward.14}
  #allocation0 [shape = 'u32[]', space=smem, size = 0x4, offset = 0x4, fixed_abs, tag = 'smem constant byte address 0x4 - core index']
  #allocation1 [shape = 'u32[144,128]{1,0:T(1,128)}', space=vmem, size = 0x12000, scoped, tag = 'internal scratch']
  %s0 = inlined_call_operand.vmem [shape: bf16[16,32], index: 0, kind: input, shape index: {}]
  %s1 = inlined_call_operand.vmem [shape: bf16[32,32], index: 1, kind: input, shape index: {}]
  %s2 = inlined_call_operand.vmem [shape: f32[1,32], index: 2, kind: input, shape index: {}]
  %s3 = inlined_call_operand.vmem [shape: bf16[16,32], index: 3, kind: input, shape index: {}]
  %s4 = inlined_call_operand.vmem [shape: bf16[16,32], index: 4, kind: output, shape index: {}]
  %s5 = sld [smem:[#allocation0]]
  $region26: #{chat_model_forward.14} parent=0
    _
  %s7 = ssub.s32 1, %s5
  %s8 = scalar_select 0, %s7, %s5
  // Predicated region
  $region2: #{chat_model_forward.14} parent=0 // pred_check
    _
  $region3: #{chat_model_forward.14} parent=0 // pred_check_branch
    %10 = sbr.rel (0) target = $region5
  $region4: #{chat_model_forward.14} parent=0 // pred_region
    _
  $region5: #{chat_model_forward.14} parent=0 // pred_fallthru
    _
  // Predicated region
  $region6: #{chat_model_forward.14} parent=0 // pred_check
    _
  $region7: #{chat_model_forward.14} parent=0 // pred_check_branch
    %12 = sbr.rel (0) target = $region9
  $region8: #{chat_model_forward.14} parent=0 // pred_region
    _
  $region9: #{chat_model_forward.14} parent=0 // pred_fallthru
    _
  // Predicated region
  $region10: #{chat_model_forward.14} parent=0 // pred_check
    _
  $region11: #{chat_model_forward.14} parent=0 // pred_check_branch
    %14 = sbr.rel (0) target = $region13
  $region12: #{chat_model_forward.14} parent=0 // pred_region
    _
  $region13: #{chat_model_forward.14} parent=0 // pred_fallthru
    _
  // Predicated region
  $region14: #{chat_model_forward.14} parent=0 // pred_check
    _
  $region15: #{chat_model_forward.14} parent=0 // pred_check_branch
    %16 = sbr.rel (0) target = $region17
  $region16: #{chat_model_forward.14} parent=0 // pred_region
    _
  $region17: #{chat_model_forward.14} parent=0 // pred_fallthru
    _
  %v18 = vld [vmem:[%s0] sm:$0xf]
  %v19 = vld [vmem:[%s0 + $0x4] sm:$0xf]
  %v20 = vld [vmem:[%s1] sm:$0xf]
  %v21 = vld [vmem:[%s1 + $0x4] sm:$0xf]
  %v22 = vld [vmem:[%s1 + $0x8] sm:$0xf]
  %v23 = vld [vmem:[%s1 + $0xc] sm:$0xf]
  %v24 = vld [vmem:[%s2] sm:$0x1]
  %v26 = vlaneseq
  %v27 = vshrl.u32 %v26, 7
  %v28 = vsub.s32 0, %v27
  %v29 = vrot.slane %v24, %v28
  %v33 = vunpack.c.l.b16 %v18
  %v34 = vunpack.c.l.b16 %v19
  %v35 = vpack.c.b16 %v34, %v33
  %v40 = vunpack.c.l.b16 %v20
  %v41 = vunpack.c.l.b16 %v21
  %v42 = vunpack.c.l.b16 %v22
  %v43 = vunpack.c.l.b16 %v23
  %v44 = vpack.c.b16 %v41, %v40
  %v45 = vpack.c.b16 %v43, %v42
  %vm48 = vcmask 261120
  %v50 = vsel %vm48, %v35, 0
  %52 = vmatprep.subr.bf16.mxu0 0
  %53 = vmatpush1.bf16.msra.mxu0 %v44
  %54 = vmatprep.subr.bf16.mxu0 0
  %55 = vmatpush1.bf16.msra.mxu0 %v45
  %56 = vmatprep.subr.bf16.mxu0 0
  %57 = vmatpush1.bf16.msra.mxu0 0
  %58 = vmatprep.subr.bf16.mxu0 0
  %59 = vmatpush1.bf16.msra.mxu0 0
  %60 = vmatprep.subr.bf16.mxu0 0
  %61 = vmatpush1.bf16.msra.mxu0 0
  %62 = vmatprep.subr.bf16.mxu0 0
  %63 = vmatpush1.bf16.msra.mxu0 0
  %64 = vmatprep.subr.bf16.mxu0 0
  %65 = vmatpush1.bf16.msra.mxu0 0
  %66 = vmatprep.subr.bf16.mxu0 0
  %67 = vmatpush1.bf16.msra.mxu0 0
  %68 = vmatprep.subr.bf16.mxu0 0
  %69 = vmatpush1.bf16.msra.mxu0 0
  %70 = vmatprep.subr.bf16.mxu0 0
  %71 = vmatpush1.bf16.msra.mxu0 0
  %72 = vmatprep.subr.bf16.mxu0 0
  %73 = vmatpush1.bf16.msra.mxu0 0
  %74 = vmatprep.subr.bf16.mxu0 0
  %75 = vmatpush1.bf16.msra.mxu0 0
  %76 = vmatprep.subr.bf16.mxu0 0
  %77 = vmatpush1.bf16.msra.mxu0 0
  %78 = vmatprep.subr.bf16.mxu0 0
  %79 = vmatpush1.bf16.msra.mxu0 0
  %80 = vmatprep.subr.bf16.mxu0 0
  %81 = vmatpush1.bf16.msra.mxu0 0
  %82 = vmatprep.subr.bf16.mxu0 0
  %83 = vmatpush1.bf16.msra.mxu0 0
  %84 = vmatprep.mubr.bf16.mxu0 0
  %85 = vmatmul.mubr.bf16.gmra.mrb[0].mxu0 %v50
  %v86 = vpop.f32.mrb[0].mxu0
  %v87 = vadd.f32 %v29, %v86
  %v88 = vpop.f32.mrb[0].mxu0
  %v89 = vpop.f32.mrb[0].mxu0
  %v90 = vadd.f32 %v29, %v89
  %v91 = vpop.f32.mrb[0].mxu0
  %92 = vdwg.mxu0
  %v93 = vld [vmem:[%s3] sm:$0xf]
  %v94 = vld [vmem:[%s3 + $0x4] sm:$0xf]
  %v95 = vunpack.c.l.bf16 %v93
  %v96 = vunpack.c.l.bf16 %v94
  %v97 = vadd.f32 %v87, %v95
  %v98 = vadd.f32 %v90, %v96
  %v99 = vpack.c.bf16 %v98, %v97
  %v101 = vunpack.c.l.b16 %v99
  %v102 = vunpack.c.h.b16 %v99
  %v103 = vpack.c.b16 %v101, %v101
  %v104 = vpack.c.b16 %v102, %v102
  %vm107 = vcmask 257024
  %108 = vst.msk [vmem:[%s4] sm:$0xf] %vm107, %v103
  %109 = vst.msk [vmem:[%s4 + $0x4] sm:$0xf] %vm107, %v104
  // Predicated region
  $region18: #{chat_model_forward.14} parent=0 // pred_check
    _
  $region19: #{chat_model_forward.14} parent=0 // pred_check_branch
    %111 = sbr.rel (0) target = $region21
  $region20: #{chat_model_forward.14} parent=0 // pred_region
    _
  $region21: #{chat_model_forward.14} parent=0 // pred_fallthru
    _
  // Predicated region
  $region22: #{chat_model_forward.14} parent=0 // pred_check
    _
  $region23: #{chat_model_forward.14} parent=0 // pred_check_branch
    %113 = sbr.rel (0) target = $region25
  $region24: #{chat_model_forward.14} parent=0 // pred_region
    _
  $region25: #{chat_model_forward.14} parent=0 // pred_fallthru
    _

// kernel: chat_model_forward.15
$region0: #{chat_model_forward.15}
  #allocation0 [shape = 'u32[]', space=smem, size = 0x4, offset = 0x4, fixed_abs, tag = 'smem constant byte address 0x4 - core index']
  #allocation1 [shape = 'u32[144,128]{1,0:T(1,128)}', space=vmem, size = 0x12000, scoped, tag = 'internal scratch']
  %s0 = inlined_call_operand.vmem [shape: bf16[16,32], index: 0, kind: input, shape index: {}]
  %s1 = inlined_call_operand.vmem [shape: bf16[32,128], index: 1, kind: input, shape index: {}]
  %s2 = inlined_call_operand.vmem [shape: f32[1,128], index: 2, kind: input, shape index: {}]
  %s3 = inlined_call_operand.vmem [shape: f32[1,32], index: 3, kind: input, shape index: {}]
  %s4 = inlined_call_operand.vmem [shape: f32[1,32], index: 4, kind: input, shape index: {}]
  %s5 = inlined_call_operand.vmem [shape: bf16[16,128], index: 5, kind: output, shape index: {}]
  %s6 = sld [smem:[#allocation0]]
  $region30: #{chat_model_forward.15} parent=0
    _
  %s8 = ssub.s32 1, %s6
  %s9 = scalar_select 0, %s8, %s6
  // Predicated region
  $region2: #{chat_model_forward.15} parent=0 // pred_check
    _
  $region3: #{chat_model_forward.15} parent=0 // pred_check_branch
    %11 = sbr.rel (0) target = $region5
  $region4: #{chat_model_forward.15} parent=0 // pred_region
    _
  $region5: #{chat_model_forward.15} parent=0 // pred_fallthru
    _
  // Predicated region
  $region6: #{chat_model_forward.15} parent=0 // pred_check
    _
  $region7: #{chat_model_forward.15} parent=0 // pred_check_branch
    %13 = sbr.rel (0) target = $region9
  $region8: #{chat_model_forward.15} parent=0 // pred_region
    _
  $region9: #{chat_model_forward.15} parent=0 // pred_fallthru
    _
  // Predicated region
  $region10: #{chat_model_forward.15} parent=0 // pred_check
    _
  $region11: #{chat_model_forward.15} parent=0 // pred_check_branch
    %15 = sbr.rel (0) target = $region13
  $region12: #{chat_model_forward.15} parent=0 // pred_region
    _
  $region13: #{chat_model_forward.15} parent=0 // pred_fallthru
    _
  // Predicated region
  $region14: #{chat_model_forward.15} parent=0 // pred_check
    _
  $region15: #{chat_model_forward.15} parent=0 // pred_check_branch
    %17 = sbr.rel (0) target = $region17
  $region16: #{chat_model_forward.15} parent=0 // pred_region
    _
  $region17: #{chat_model_forward.15} parent=0 // pred_fallthru
    _
  // Predicated region
  $region18: #{chat_model_forward.15} parent=0 // pred_check
    _
  $region19: #{chat_model_forward.15} parent=0 // pred_check_branch
    %19 = sbr.rel (0) target = $region21
  $region20: #{chat_model_forward.15} parent=0 // pred_region
    _
  $region21: #{chat_model_forward.15} parent=0 // pred_fallthru
    _
  %v21 = vld [vmem:[%s0] sm:$0xf]
  %v22 = vld [vmem:[%s0 + $0x4] sm:$0xf]
  %v23 = vunpack.c.l.bf16 %v21
  %v24 = vunpack.c.l.bf16 %v22
  %vm25 = vcmask 261120
  %v26 = vsel %vm25, %v23, 0.0
  %27 = vadd.xlane.f32.xlu0 %v26
  %v28 = vpop.xlane.xlu0 %27
  %v29 = vsel %vm25, %v24, 0.0
  %30 = vadd.xlane.f32.xlu0 %v29
  %v31 = vpop.xlane.xlu0 %30
  %v32 = vrcp.pop 32.0
  %v33 = vmul.f32 %v28, %v32
  %v34 = vmul.f32 %v31, %v32
  %v35 = vsub.f32 %v23, %v33
  %v36 = vsub.f32 %v24, %v34
  %v37 = vmul.f32 %v35, %v35
  %v38 = vmul.f32 %v36, %v36
  %v39 = vsel %vm25, %v37, 0.0
  %40 = vadd.xlane.f32.xlu0 %v39
  %v41 = vpop.xlane.xlu0 %40
  %v42 = vsel %vm25, %v38, 0.0
  %43 = vadd.xlane.f32.xlu0 %v42
  %v44 = vpop.xlane.xlu0 %43
  %v45 = vmul.f32 %v41, %v32
  %v46 = vmul.f32 %v44, %v32
  %v47 = vadd.f32 %v45, 1e-05
  %v48 = vadd.f32 %v46, 1e-05
  %v49 = vrsqrt.pop %v47
  %v50 = vrsqrt.pop %v48
  %v51 = vmul.f32 %v35, %v49
  %v52 = vmul.f32 %v36, %v50
  %v53 = vld [vmem:[%s3] sm:$0x1]
  %v55 = vlaneseq
  %v56 = vshrl.u32 %v55, 7
  %v57 = vsub.s32 0, %v56
  %v58 = vrot.slane %v53, %v57
  %v60 = vmul.f32 %v51, %v58
  %v61 = vmul.f32 %v52, %v58
  %v62 = vld [vmem:[%s4] sm:$0x1]
  %v64 = vlaneseq
  %v65 = vshrl.u32 %v64, 7
  %v66 = vsub.s32 0, %v65
  %v67 = vrot.slane %v62, %v66
  %v69 = vadd.f32 %v60, %v67
  %v70 = vadd.f32 %v61, %v67
  %v71 = vpack.c.bf16 %v70, %v69
  %v72 = vld [vmem:[%s1] sm:$0xf]
  %v73 = vld [vmem:[%s1 + $0x4] sm:$0xf]
  %v74 = vld [vmem:[%s1 + $0x8] sm:$0xf]
  %v75 = vld [vmem:[%s1 + $0xc] sm:$0xf]
  %v76 = vld [vmem:[%s2] sm:$0x1]
  %v78 = vlaneseq
  %v79 = vshrl.u32 %v78, 7
  %v80 = vsub.s32 0, %v79
  %v81 = vrot.slane %v76, %v80
  %v87 = vunpack.c.l.b16 %v72
  %v88 = vunpack.c.l.b16 %v73
  %v89 = vunpack.c.l.b16 %v74
  %v90 = vunpack.c.l.b16 %v75
  %v91 = vpack.c.b16 %v88, %v87
  %v92 = vpack.c.b16 %v90, %v89
  %v96 = vsel %vm25, %v71, 0
  %98 = vmatprep.subr.bf16.mxu0 0
  %99 = vmatpush1.bf16.msra.mxu0 %v91
  %100 = vmatprep.subr.bf16.mxu0 0
  %101 = vmatpush1.bf16.msra.mxu0 %v92
  %102 = vmatprep.subr.bf16.mxu0 0
  %103 = vmatpush1.bf16.msra.mxu0 0
  %104 = vmatprep.subr.bf16.mxu0 0
  %105 = vmatpush1.bf16.msra.mxu0 0
  %106 = vmatprep.subr.bf16.mxu0 0
  %107 = vmatpush1.bf16.msra.mxu0 0
  %108 = vmatprep.subr.bf16.mxu0 0
  %109 = vmatpush1.bf16.msra.mxu0 0
  %110 = vmatprep.subr.bf16.mxu0 0
  %111 = vmatpush1.bf16.msra.mxu0 0
  %112 = vmatprep.subr.bf16.mxu0 0
  %113 = vmatpush1.bf16.msra.mxu0 0
  %114 = vmatprep.subr.bf16.mxu0 0
  %115 = vmatpush1.bf16.msra.mxu0 0
  %116 = vmatprep.subr.bf16.mxu0 0
  %117 = vmatpush1.bf16.msra.mxu0 0
  %118 = vmatprep.subr.bf16.mxu0 0
  %119 = vmatpush1.bf16.msra.mxu0 0
  %120 = vmatprep.subr.bf16.mxu0 0
  %121 = vmatpush1.bf16.msra.mxu0 0
  %122 = vmatprep.subr.bf16.mxu0 0
  %123 = vmatpush1.bf16.msra.mxu0 0
  %124 = vmatprep.subr.bf16.mxu0 0
  %125 = vmatpush1.bf16.msra.mxu0 0
  %126 = vmatprep.subr.bf16.mxu0 0
  %127 = vmatpush1.bf16.msra.mxu0 0
  %128 = vmatprep.subr.bf16.mxu0 0
  %129 = vmatpush1.bf16.msra.mxu0 0
  %130 = vmatprep.mubr.bf16.mxu0 0
  %131 = vmatmul.mubr.bf16.gmra.mrb[0].mxu0 %v96
  %v132 = vpop.f32.mrb[0].mxu0
  %v133 = vadd.f32 %v81, %v132
  %v134 = vpop.f32.mrb[0].mxu0
  %v135 = vpop.f32.mrb[0].mxu0
  %v136 = vadd.f32 %v81, %v135
  %v137 = vpop.f32.mrb[0].mxu0
  %138 = vdwg.mxu0
  %v139 = vmul.f32 %v133, %v133
  %v140 = vmul.f32 %v136, %v136
  %v141 = vmul.f32 %v133, %v139
  %v142 = vmul.f32 %v136, %v140
  %v143 = vmul.f32 %v141, 0.044715
  %v144 = vmul.f32 %v142, 0.044715
  %v145 = vadd.f32 %v133, %v143
  %v146 = vadd.f32 %v136, %v144
  %v147 = vmul.f32 %v145, 0.7978846
  %v148 = vmul.f32 %v146, 0.7978846
  %v149 = vtanh.pop %v147
  %v150 = vtanh.pop %v148
  %v151 = vadd.f32 %v149, 1.0
  %v152 = vadd.f32 %v150, 1.0
  %v153 = vmul.f32 %v151, 0.5
  %v154 = vmul.f32 %v152, 0.5
  %v155 = vmul.f32 %v133, %v153
  %v156 = vmul.f32 %v136, %v154
  %v157 = vpack.c.bf16 %v156, %v155
  %v159 = vunpack.c.l.b16 %v157
  %v160 = vunpack.c.h.b16 %v157
  %v161 = vpack.c.b16 %v159, %v159
  %v162 = vpack.c.b16 %v160, %v160
  %165 = vst [vmem:[%s5] sm:$0xf] %v161
  %166 = vst [vmem:[%s5 + $0x4] sm:$0xf] %v162
  // Predicated region
  $region22: #{chat_model_forward.15} parent=0 // pred_check
    _
  $region23: #{chat_model_forward.15} parent=0 // pred_check_branch
    %168 = sbr.rel (0) target = $region25
  $region24: #{chat_model_forward.15} parent=0 // pred_region
    _
  $region25: #{chat_model_forward.15} parent=0 // pred_fallthru
    _
  // Predicated region
  $region26: #{chat_model_forward.15} parent=0 // pred_check
    _
  $region27: #{chat_model_forward.15} parent=0 // pred_check_branch
    %170 = sbr.rel (0) target = $region29
  $region28: #{chat_model_forward.15} parent=0 // pred_region
    _
  $region29: #{chat_model_forward.15} parent=0 // pred_fallthru
    _

// kernel: chat_model_forward.13
$region0: #{chat_model_forward.13}
  #allocation0 [shape = 'u32[]', space=smem, size = 0x4, offset = 0x4, fixed_abs, tag = 'smem constant byte address 0x4 - core index']
  #allocation1 [shape = 'u32[144,128]{1,0:T(1,128)}', space=vmem, size = 0x12000, scoped, tag = 'internal scratch']
  #allocation2 [shape = 'f32[4,8,1]{2,1,0:T(8,128)}', space=vmem, size = 0x4000, scoped, tag = 'scratch operand']
  #allocation3 [shape = 'f32[4,8,1]{2,1,0:T(8,128)}', space=vmem, size = 0x4000, scoped, tag = 'scratch operand']
  #allocation4 [shape = 'f32[4,8,8]{2,1,0:T(8,128)}', space=vmem, size = 0x4000, scoped, tag = 'scratch operand']
  %s0 = inlined_call_operand.vmem [shape: bf16[2,8,32], index: 0, kind: input, shape index: {}]
  %s1 = inlined_call_operand.vmem [shape: bf16[2,8,64], index: 1, kind: input, shape index: {}]
  %s2 = inlined_call_operand.vmem [shape: f32[2,1,8], index: 2, kind: input, shape index: {}]
  %s3 = inlined_call_operand.vmem [shape: bf16[2,8,32], index: 3, kind: output, shape index: {}]
  %s4 = sld [smem:[#allocation0]]
  $region57: #{chat_model_forward.13} parent=0
    _
  %s6 = ssub.s32 1, %s4
  %s7 = scalar_select 0, %s6, %s4
  loop: start=0, step=1, limit=4
  $region2: #{chat_model_forward.13} parent=0 // loop_pre_header
    _
  $region3: #{chat_model_forward.13} parent=0 // loop_header
    %s9 = sphi 0, %s13
    %p10 = scmp.ge.s32.totalorder %s9, 4
    %s16 = sphi 0, %s35
    %s17 = sphi 0, %s31
    %s18 = sphi 0, %s27
    %s19 = sphi 0, %s16
    %s20 = sphi 0, %s17
    %s21 = sphi 0, %s18
    %s22 = sphi 0, %s19
    %s23 = sphi 0, %s20
    %s24 = sphi 0, %s21
    %s40 = sphi 0, %s42
    %s43 = sphi 0, %s40
    %s44 = sphi 0, %s43
    %s60 = sphi 0, %s44
    %s68 = sphi 0, %s70
    %s71 = sphi 0, %s68
    %s72 = sphi 0, %s71
    %s88 = sphi 0, %s72
    %s96 = sphi 0, %s98
    %s99 = sphi 0, %s96
    %s100 = sphi 0, %s99
    %s116 = sphi 0, %s100
    %s124 = sphi 0, %s126
    %s127 = sphi 0, %s124
    %s128 = sphi 0, %s127
    %s144 = sphi 0, %s128
  $region4: #{chat_model_forward.13} parent=0 // loop_header_branch
    %12 = sbr.rel (%p10) target = $region8
  $region5: #{chat_model_forward.13} parent=0 // loop_body
    %s14 = ssub.s32 %s9, 1
    %s15 = ssub.s32 %s9, 2
    %s25 = sadd.s32 1, %s18
    %p26 = scmp.ge.s32.totalorder %s25, 1
    %s27 = scalar_select %p26, 0, %s25
    %s28 = sadd.s32 1, %s17
    %s29 = scalar_select %p26, %s28, %s17
    %p30 = scmp.ge.s32.totalorder %s29, 1
    %s31 = scalar_select %p30, 0, %s29
    %s32 = sadd.s32 1, %s16
    %s33 = scalar_select %p30, %s32, %s16
    %p34 = scmp.ge.s32.totalorder %s33, 2
    %s35 = scalar_select %p34, 0, %s33
    %s36 = ssub.s32 %s16, %s35
    %s37 = ssub.s32 %s17, %s31
    %s38 = sor.u32 %s36, %s37
    %p39 = scmp.eq.s32.totalorder %s38, 0
    %s41 = sadd.s32 %s40, 1
    %s42 = scalar_select %p39, %s40, %s41
    %p45 = pneg %p39
    %p46 = scmp.eq.s32.totalorder %s9, 1
    %p47 = por %p45, %p46
    %p48 = scmp.ne.s32.totalorder %s40, %s43
    %p49 = scmp.eq.s32.totalorder %s9, 0
    %p50 = por %p48, %p49
    %p51 = scmp.ne.s32.totalorder %s40, %s43
    %p52 = scmp.eq.s32.totalorder %s14, 1
    %p53 = por %p51, %p52
    %p54 = scmp.ne.s32.totalorder %s43, %s44
    %p55 = scmp.eq.s32.totalorder %s14, 0
    %p56 = por %p54, %p55
    %p57 = scmp.ne.s32.totalorder %s43, %s44
    %p58 = scmp.eq.s32.totalorder %s15, 1
    %p59 = por %p57, %p58
    %p61 = scmp.ne.s32.totalorder %s44, %s60
    %p62 = scmp.eq.s32.totalorder %s15, 0
    %p63 = por %p61, %p62
    %s64 = ssub.s32 %s16, %s35
    %s65 = ssub.s32 %s18, %s27
    %s66 = sor.u32 %s64, %s65
    %p67 = scmp.eq.s32.totalorder %s66, 0
    %s69 = sadd.s32 %s68, 1
    %s70 = scalar_select %p67, %s68, %s69
    %p73 = pneg %p67
    %p74 = scmp.eq.s32.totalorder %s9, 1
    %p75 = por %p73, %p74
    %p76 = scmp.ne.s32.totalorder %s68, %s71
    %p77 = scmp.eq.s32.totalorder %s9, 0
    %p78 = por %p76, %p77
    %p79 = scmp.ne.s32.totalorder %s68, %s71
    %p80 = scmp.eq.s32.totalorder %s14, 1
    %p81 = por %p79, %p80
    %p82 = scmp.ne.s32.totalorder %s71, %s72
    %p83 = scmp.eq.s32.totalorder %s14, 0
    %p84 = por %p82, %p83
    %p85 = scmp.ne.s32.totalorder %s71, %s72
    %p86 = scmp.eq.s32.totalorder %s15, 1
    %p87 = por %p85, %p86
    %p89 = scmp.ne.s32.totalorder %s72, %s88
    %p90 = scmp.eq.s32.totalorder %s15, 0
    %p91 = por %p89, %p90
    %s92 = ssub.s32 %s16, %s35
    %s93 = ssub.s32 %s18, %s27
    %s94 = sor.u32 %s92, %s93
    %p95 = scmp.eq.s32.totalorder %s94, 0
    %s97 = sadd.s32 %s96, 1
    %s98 = scalar_select %p95, %s96, %s97
    %p101 = pneg %p95
    %p102 = scmp.eq.s32.totalorder %s9, 1
    %p103 = por %p101, %p102
    %p104 = scmp.ne.s32.totalorder %s96, %s99
    %p105 = scmp.eq.s32.totalorder %s9, 0
    %p106 = por %p104, %p105
    %p107 = scmp.ne.s32.totalorder %s96, %s99
    %p108 = scmp.eq.s32.totalorder %s14, 1
    %p109 = por %p107, %p108
    %p110 = scmp.ne.s32.totalorder %s99, %s100
    %p111 = scmp.eq.s32.totalorder %s14, 0
    %p112 = por %p110, %p111
    %p113 = scmp.ne.s32.totalorder %s99, %s100
    %p114 = scmp.eq.s32.totalorder %s15, 1
    %p115 = por %p113, %p114
    %p117 = scmp.ne.s32.totalorder %s100, %s116
    %p118 = scmp.eq.s32.totalorder %s15, 0
    %p119 = por %p117, %p118
    %s120 = ssub.s32 %s16, %s35
    %s121 = ssub.s32 %s17, %s31
    %s122 = sor.u32 %s120, %s121
    %p123 = scmp.eq.s32.totalorder %s122, 0
    %s125 = sadd.s32 %s124, 1
    %s126 = scalar_select %p123, %s124, %s125
    %p129 = pneg %p123
    %p130 = scmp.eq.s32.totalorder %s9, 1
    %p131 = por %p129, %p130
    %p132 = scmp.ne.s32.totalorder %s124, %s127
    %p133 = scmp.eq.s32.totalorder %s9, 0
    %p134 = por %p132, %p133
    %p135 = scmp.ne.s32.totalorder %s124, %s127
    %p136 = scmp.eq.s32.totalorder %s14, 1
    %p137 = por %p135, %p136
    %p138 = scmp.ne.s32.totalorder %s127, %s128
    %p139 = scmp.eq.s32.totalorder %s14, 0
    %p140 = por %p138, %p139
    %p141 = scmp.ne.s32.totalorder %s127, %s128
    %p142 = scmp.eq.s32.totalorder %s15, 1
    %p143 = por %p141, %p142
    %p145 = scmp.ne.s32.totalorder %s128, %s144
    %p146 = scmp.eq.s32.totalorder %s15, 0
    %p147 = por %p145, %p146
    %p148 = scmp.le.s32.totalorder 1, %s9
    %p149 = scmp.lt.s32.totalorder %s9, 3
    %p150 = pnand %p148, %p149
    %p151 = pneg %p150
    // Predicated region
    $region9: #{chat_model_forward.13} parent=5 // pred_check
      _
    $region10: #{chat_model_forward.13} parent=5 // pred_check_branch
      %153 = sbr.rel (%p150) target = $region12
    $region11: #{chat_model_forward.13} parent=5 // pred_region
      %s154 = ssub.s32 %s9, 1
    $region12: #{chat_model_forward.13} parent=5 // pred_fallthru
      _
    %p155 = scmp.lt.s32.totalorder %s9, 2
    // Predicated region
    $region13: #{chat_model_forward.13} parent=5 // pred_check
      %p156 = pneg %p155
    $region14: #{chat_model_forward.13} parent=5 // pred_check_branch
      %158 = sbr.rel (%p156) target = $region16
    $region15: #{chat_model_forward.13} parent=5 // pred_region
      // Predicated region
      $region17: #{chat_model_forward.13} parent=15 // pred_check
        %p159 = pneg %p50
      $region18: #{chat_model_forward.13} parent=15 // pred_check_branch
        %161 = sbr.rel (%p159) target = $region20
      $region19: #{chat_model_forward.13} parent=15 // pred_region
        %p162 = scmp.lt.s32.totalorder %s16, 1
        %s163 = scalar_select %p162, %s16, 1
        %p164 = scmp.lt.s32.totalorder %s17, 0
        %s165 = scalar_select %p164, %s17, 0
        %s166 = sadd.s32 %s165, %s163
        %s167 = smul.addr %s166, 4
        %s168 = scalar_lea.vmem %s0, %s167
      $region20: #{chat_model_forward.13} parent=15 // pred_fallthru
        _
      // Predicated region
      $region21: #{chat_model_forward.13} parent=15 // pred_check
        %p169 = pneg %p78
      $region22: #{chat_model_forward.13} parent=15 // pred_check_branch
        %171 = sbr.rel (%p169) target = $region24
      $region23: #{chat_model_forward.13} parent=15 // pred_region
        %p172 = scmp.lt.s32.totalorder %s16, 1
        %s173 = scalar_select %p172, %s16, 1
        %p174 = scmp.lt.s32.totalorder %s18, 0
        %s175 = scalar_select %p174, %s18, 0
        %s176 = sadd.s32 %s175, %s173
        %s177 = smul.addr %s176, 4
        %s178 = scalar_lea.vmem %s1, %s177
      $region24: #{chat_model_forward.13} parent=15 // pred_fallthru
        _
      // Predicated region
      $region25: #{chat_model_forward.13} parent=15 // pred_check
        %p179 = pneg %p106
      $region26: #{chat_model_forward.13} parent=15 // pred_check_branch
        %181 = sbr.rel (%p179) target = $region28
      $region27: #{chat_model_forward.13} parent=15 // pred_region
        %p182 = scmp.lt.s32.totalorder %s16, 1
        %s183 = scalar_select %p182, %s16, 1
        %p184 = scmp.lt.s32.totalorder %s18, 0
        %s185 = scalar_select %p184, %s18, 0
        %s186 = sadd.s32 %s185, %s183
        %s187 = scalar_lea.vmem %s2, %s186
      $region28: #{chat_model_forward.13} parent=15 // pred_fallthru
        _
    $region16: #{chat_model_forward.13} parent=5 // pred_fallthru
      _
    %p188 = scmp.le.s32.totalorder 1, %s9
    %p189 = scmp.lt.s32.totalorder %s9, 3
    %p190 = pnand %p188, %p189
    %p191 = pneg %p190
    // Predicated region
    $region29: #{chat_model_forward.13} parent=5 // pred_check
      _
    $region30: #{chat_model_forward.13} parent=5 // pred_check_branch
      %193 = sbr.rel (%p190) target = $region32
    $region31: #{chat_model_forward.13} parent=5 // pred_region
      %s194 = ssub.s32 %s9, 1
      %p195 = scmp.lt.s32.totalorder %s19, 1
      %s196 = scalar_select %p195, %s19, 1
      %p197 = scmp.lt.s32.totalorder %s20, 0
      %s198 = scalar_select %p197, %s20, 0
      %s199 = sadd.s32 %s198, %s196
      %s200 = smul.addr %s199, 4
      %s201 = scalar_lea.vmem %s0, %s200
      %p202 = pneg %p56
      %p203 = pneg %p53
      %p204 = scmp.lt.s32.totalorder %s19, 1
      %s205 = scalar_select %p204, %s19, 1
      %p206 = scmp.lt.s32.totalorder %s21, 0
      %s207 = scalar_select %p206, %s21, 0
      %s208 = sadd.s32 %s207, %s205
      %s209 = smul.addr %s208, 4
      %s210 = scalar_lea.vmem %s1, %s209
      %p211 = pneg %p84
      %p212 = pneg %p81
      %p213 = scmp.lt.s32.totalorder %s19, 1
      %s214 = scalar_select %p213, %s19, 1
      %p215 = scmp.lt.s32.totalorder %s21, 0
      %s216 = scalar_select %p215, %s21, 0
      %s217 = sadd.s32 %s216, %s214
      %s218 = scalar_lea.vmem %s2, %s217
      %p219 = pneg %p112
      %p220 = pneg %p109
      %p221 = pneg %p140
      %p222 = pneg %p137
      %p223 = scmp.lt.s32.totalorder %s19, 1
      %s224 = scalar_select %p223, %s19, 1
      %p225 = scmp.lt.s32.totalorder %s20, 0
      %s226 = scalar_select %p225, %s20, 0
      %s227 = sadd.s32 %s226, %s224
      %s228 = smul.addr %s227, 4
      %s229 = scalar_lea.vmem %s3, %s228
      %p230 = scmp.lt.s32.totalorder %s19, 1
      %s231 = scalar_select %p230, %s19, 1
      %p232 = scmp.lt.s32.totalorder %s20, 0
      %s233 = scalar_select %p232, %s20, 0
      %s234 = sadd.s32 %s233, %s231
      %s235 = smul.addr %s234, 4
      %s236 = scalar_lea.vmem %s0, %s235
      %p237 = scmp.lt.s32.totalorder %s19, 1
      %s238 = scalar_select %p237, %s19, 1
      %p239 = scmp.lt.s32.totalorder %s21, 0
      %s240 = scalar_select %p239, %s21, 0
      %s241 = sadd.s32 %s240, %s238
      %s242 = smul.addr %s241, 4
      %s243 = scalar_lea.vmem %s1, %s242
      %p244 = scmp.lt.s32.totalorder %s19, 1
      %s245 = scalar_select %p244, %s19, 1
      %p246 = scmp.lt.s32.totalorder %s21, 0
      %s247 = scalar_select %p246, %s21, 0
      %s248 = sadd.s32 %s247, %s245
      %s249 = scalar_lea.vmem %s2, %s248
      %p250 = scmp.lt.s32.totalorder %s19, 1
      %s251 = scalar_select %p250, %s19, 1
      %p252 = scmp.lt.s32.totalorder %s20, 0
      %s253 = scalar_select %p252, %s20, 0
      %s254 = sadd.s32 %s253, %s251
      %s255 = smul.addr %s254, 4
      %s256 = scalar_lea.vmem %s3, %s255
      %p258 = scmp.eq.s32.totalorder %s21, 0
      // Predicated region
      $region33: #{chat_model_forward.13} parent=31 // pred_check
        %p259 = pneg %p258
      $region34: #{chat_model_forward.13} parent=31 // pred_check_branch
        %261 = sbr.rel (%p259) target = $region36
      $region35: #{chat_model_forward.13} parent=31 // pred_region
        %vm262 = vcmask 7168
        %263 = vst.msk [vmem:[#allocation2] sm:$0xff] %vm262, -1e+30
        %264 = vst.msk [vmem:[#allocation2 + $0x8] sm:$0xff] %vm262, -1e+30
        %265 = vst.msk [vmem:[#allocation2 + $0x10] sm:$0xff] %vm262, -1e+30
        %266 = vst.msk [vmem:[#allocation2 + $0x18] sm:$0xff] %vm262, -1e+30
        %267 = vst.msk [vmem:[#allocation3] sm:$0xff] %vm262, 0.0
        %268 = vst.msk [vmem:[#allocation3 + $0x8] sm:$0xff] %vm262, 0.0
        %269 = vst.msk [vmem:[#allocation3 + $0x10] sm:$0xff] %vm262, 0.0
        %270 = vst.msk [vmem:[#allocation3 + $0x18] sm:$0xff] %vm262, 0.0
        %vm271 = vcmask 64512
        %272 = vst.msk [vmem:[#allocation4] sm:$0xff] %vm271, 0.0
        %273 = vst.msk [vmem:[#allocation4 + $0x8] sm:$0xff] %vm271, 0.0
        %274 = vst.msk [vmem:[#allocation4 + $0x10] sm:$0xff] %vm271, 0.0
        %275 = vst.msk [vmem:[#allocation4 + $0x18] sm:$0xff] %vm271, 0.0
      $region36: #{chat_model_forward.13} parent=31 // pred_fallthru
        _
      %s276 = smul.u32 %s20, 8
      %s277 = smul.u32 %s21, 8
      %s278 = sadd.s32 %s276, 7
      %p279 = scmp.le.s32.totalorder %s277, %s278
      // Predicated region
      $region37: #{chat_model_forward.13} parent=31 // pred_check
        %p280 = pneg %p279
      $region38: #{chat_model_forward.13} parent=31 // pred_check_branch
        %282 = sbr.rel (%p280) target = $region40
      $region39: #{chat_model_forward.13} parent=31 // pred_region
        %v283 = vld [vmem:[%s236] sm:$0xf]
        %v284 = vld [vmem:[%s243] sm:$0xf]
        %v285 = vld [vmem:[%s249] sm:$0x1]
        %v286 = vlaneseq
        %v287 = vshrl.u32 %v286, 7
        %v288 = vstv %s276
        %v289 = vadd.s32 %v287, %v288
        %v290 = vlaneseq
        %v291 = vand.u32 %v290, 127
        %v292 = vstv %s277
        %v293 = vadd.s32 %v291, %v292
        %vm294 = vcmp.ge.s32.totalorder %v289, %v293
        %vm295 = vcmp.gt.f32.partialorder %v285, 0.5
        %v296 = vsel %vm295, 1, 0
        %v297 = vlaneseq
        %v298 = vshrl.u32 %v297, 7
        %v299 = vsub.s32 0, %v298
        %v300 = vrot.slane %v296, %v299
        %vm301 = vcmp.eq.s32.totalorder %v300, 1
        %vm302 = vmand %vm294, %vm301
        %v303 = vunpack.c.l.bf16 %v283
        %v304 = vmul.f32 %v303, 0.35355338
        %v305 = vpack.c.bf16 %v304, %v304
        %vm306 = vcmask 64512
        %v308 = vsel %vm306, %v305, 0
        %v311 = vsel %vm306, %v284, 0
        %313 = vmatprep.subr.bf16.mxu0 0
        %314 = vmatpush1.bf16.xpose.msra.mxu0 %v311
        %315 = vmatprep.subr.bf16.mxu0 0
        %316 = vmatpush1.bf16.xpose.msra.mxu0 0
        %317 = vmatprep.subr.bf16.mxu0 0
        %318 = vmatpush1.bf16.xpose.msra.mxu0 0
        %319 = vmatprep.subr.bf16.mxu0 0
        %320 = vmatpush1.bf16.xpose.msra.mxu0 0
        %321 = vmatprep.subr.bf16.mxu0 0
        %322 = vmatpush1.bf16.xpose.msra.mxu0 0
        %323 = vmatprep.subr.bf16.mxu0 0
        %324 = vmatpush1.bf16.xpose.msra.mxu0 0
        %325 = vmatprep.subr.bf16.mxu0 0
        %326 = vmatpush1.bf16.xpose.msra.mxu0 0
        %327 = vmatprep.subr.bf16.mxu0 0
        %328 = vmatpush1.bf16.xpose.msra.mxu0 0
        %329 = vmatprep.subr.bf16.mxu0 0
        %330 = vmatpush1.bf16.xpose.msra.mxu0 0
        %331 = vmatprep.subr.bf16.mxu0 0
        %332 = vmatpush1.bf16.xpose.msra.mxu0 0
        %333 = vmatprep.subr.bf16.mxu0 0
        %334 = vmatpush1.bf16.xpose.msra.mxu0 0
        %335 = vmatprep.subr.bf16.mxu0 0
        %336 = vmatpush1.bf16.xpose.msra.mxu0 0
        %337 = vmatprep.subr.bf16.mxu0 0
        %338 = vmatpush1.bf16.xpose.msra.mxu0 0
        %339 = vmatprep.subr.bf16.mxu0 0
        %340 = vmatpush1.bf16.xpose.msra.mxu0 0
        %341 = vmatprep.subr.bf16.mxu0 0
        %342 = vmatpush1.bf16.xpose.msra.mxu0 0
        %343 = vmatprep.subr.bf16.mxu0 0
        %344 = vmatpush1.bf16.xpose.msra.mxu0 0
        %345 = vmatprep.mubr.bf16.mxu0 0
        %346 = vmatmul.mubr.bf16.gmra.mrb[0].mxu0 %v308
        %v347 = vpop.f32.mrb[0].mxu0
        %v348 = vadd.f32 0.0, %v347
        %v349 = vpop.f32.mrb[0].mxu0
        %v350 = vpop.f32.mrb[0].mxu0
        %v351 = vpop.f32.mrb[0].mxu0
        %352 = vdwg.mxu0
        %v353 = vld [vmem:[#allocation2] sm:$0xff]
        %v354 = vsel %vm302, %v348, -1e+30
        %v355 = vsel %vm306, %v354, -inf
        %356 = vmax.xlane.f32.xlu0 %v355
        %v357 = vpop.xlane.xlu0 %356
        %v358 = vmax.f32 %v353, %v357
        %v359 = vsub.f32 %v353, %v358
        %v360 = vmul.f32 %v359, 1.442695
        %v361 = vpow.pop %v360
        %363 = vset.pattern.permute.xlu0 0
        %364 = vperm.xlu0 %363, %v358
        %v365 = vpop.permute.xlu0 %364
        %v367 = vsub.f32 %v348, %v365
        %v368 = vmul.f32 %v367, 1.442695
        %v369 = vpow.pop %v368
        %v370 = vsel %vm302, %v369, 0.0
        %v371 = vld [vmem:[#allocation3] sm:$0xff]
        %v372 = vmul.f32 %v361, %v371
        %v373 = vsel %vm306, %v370, 0.0
        %374 = vadd.xlane.f32.xlu0 %v373
        %v375 = vpop.xlane.xlu0 %374
        %v376 = vadd.f32 %v372, %v375
        %vm377 = vcmask 7168
        %378 = vst.msk [vmem:[#allocation3] sm:$0xff] %vm377, %v376
        %v379 = vld [vmem:[#allocation4] sm:$0xff]
        %381 = vset.pattern.permute.xlu0 0
        %382 = vperm.xlu0 %381, %v361
        %v383 = vpop.permute.xlu0 %382
        %v385 = vmul.f32 %v383, %v379
        %v386 = vpack.c.bf16 %v370, %v370
        %v388 = vunpack.c.l.b16 %v284
        %v389 = vpack.c.b16 %v388, %v388
        %390 = vrot.lane.b32.xlu0 %v389, 96
        %v391 = vpop.permute.xlu0 %390
        %v393 = vsel %vm306, %v386, 0
        %vm395 = vcmask 1043456
        %v397 = vsel %vm395, %v391, 0
        %399 = vmatprep.subr.bf16.mxu0 0
        %400 = vmatpush1.bf16.msra.mxu0 %v397
        %401 = vmatprep.subr.bf16.mxu0 0
        %402 = vmatpush1.bf16.msra.mxu0 0
        %403 = vmatprep.subr.bf16.mxu0 0
        %404 = vmatpush1.bf16.msra.mxu0 0
        %405 = vmatprep.subr.bf16.mxu0 0
        %406 = vmatpush1.bf16.msra.mxu0 0
        %407 = vmatprep.subr.bf16.mxu0 0
        %408 = vmatpush1.bf16.msra.mxu0 0
        %409 = vmatprep.subr.bf16.mxu0 0
        %410 = vmatpush1.bf16.msra.mxu0 0
        %411 = vmatprep.subr.bf16.mxu0 0
        %412 = vmatpush1.bf16.msra.mxu0 0
        %413 = vmatprep.subr.bf16.mxu0 0
        %414 = vmatpush1.bf16.msra.mxu0 0
        %415 = vmatprep.subr.bf16.mxu0 0
        %416 = vmatpush1.bf16.msra.mxu0 0
        %417 = vmatprep.subr.bf16.mxu0 0
        %418 = vmatpush1.bf16.msra.mxu0 0
        %419 = vmatprep.subr.bf16.mxu0 0
        %420 = vmatpush1.bf16.msra.mxu0 0
        %421 = vmatprep.subr.bf16.mxu0 0
        %422 = vmatpush1.bf16.msra.mxu0 0
        %423 = vmatprep.subr.bf16.mxu0 0
        %424 = vmatpush1.bf16.msra.mxu0 0
        %425 = vmatprep.subr.bf16.mxu0 0
        %426 = vmatpush1.bf16.msra.mxu0 0
        %427 = vmatprep.subr.bf16.mxu0 0
        %428 = vmatpush1.bf16.msra.mxu0 0
        %429 = vmatprep.subr.bf16.mxu0 0
        %430 = vmatpush1.bf16.msra.mxu0 0
        %431 = vmatprep.mubr.bf16.mxu0 0
        %432 = vmatmul.mubr.bf16.gmra.mrb[0].mxu0 %v393
        %v433 = vpop.f32.mrb[0].mxu0
        %v434 = vadd.f32 0.0, %v433
        %v435 = vpop.f32.mrb[0].mxu0
        %v436 = vpop.f32.mrb[0].mxu0
        %v437 = vpop.f32.mrb[0].mxu0
        %438 = vdwg.mxu0
        %v439 = vadd.f32 %v385, %v434
        %440 = vst.msk [vmem:[#allocation4] sm:$0xff] %vm306, %v439
        %441 = vst.msk [vmem:[#allocation2] sm:$0xff] %vm377, %v358
        %443 = vrot.lane.b32.xlu0 %v305, 120
        %v444 = vpop.permute.xlu0 %443
        %445 = vrot.lane.b32.xlu0 %v389, 120
        %v446 = vpop.permute.xlu0 %445
        %v448 = vsel %vm306, %v444, 0
        %v451 = vsel %vm306, %v446, 0
        %453 = vmatprep.subr.bf16.mxu0 0
        %454 = vmatpush1.bf16.xpose.msra.mxu0 %v451
        %455 = vmatprep.subr.bf16.mxu0 0
        %456 = vmatpush1.bf16.xpose.msra.mxu0 0
        %457 = vmatprep.subr.bf16.mxu0 0
        %458 = vmatpush1.bf16.xpose.msra.mxu0 0
        %459 = vmatprep.subr.bf16.mxu0 0
        %460 = vmatpush1.bf16.xpose.msra.mxu0 0
        %461 = vmatprep.subr.bf16.mxu0 0
        %462 = vmatpush1.bf16.xpose.msra.mxu0 0
        %463 = vmatprep.subr.bf16.mxu0 0
        %464 = vmatpush1.bf16.xpose.msra.mxu0 0
        %465 = vmatprep.subr.bf16.mxu0 0
        %466 = vmatpush1.bf16.xpose.msra.mxu0 0
        %467 = vmatprep.subr.bf16.mxu0 0
        %468 = vmatpush1.bf16.xpose.msra.mxu0 0
        %469 = vmatprep.subr.bf16.mxu0 0
        %470 = vmatpush1.bf16.xpose.msra.mxu0 0
        %471 = vmatprep.subr.bf16.mxu0 0
        %472 = vmatpush1.bf16.xpose.msra.mxu0 0
        %473 = vmatprep.subr.bf16.mxu0 0
        %474 = vmatpush1.bf16.xpose.msra.mxu0 0
        %475 = vmatprep.subr.bf16.mxu0 0
        %476 = vmatpush1.bf16.xpose.msra.mxu0 0
        %477 = vmatprep.subr.bf16.mxu0 0
        %478 = vmatpush1.bf16.xpose.msra.mxu0 0
        %479 = vmatprep.subr.bf16.mxu0 0
        %480 = vmatpush1.bf16.xpose.msra.mxu0 0
        %481 = vmatprep.subr.bf16.mxu0 0
        %482 = vmatpush1.bf16.xpose.msra.mxu0 0
        %483 = vmatprep.subr.bf16.mxu0 0
        %484 = vmatpush1.bf16.xpose.msra.mxu0 0
        %485 = vmatprep.mubr.bf16.mxu0 0
        %486 = vmatmul.mubr.bf16.gmra.mrb[0].mxu0 %v448
        %v487 = vpop.f32.mrb[0].mxu0
        %v488 = vadd.f32 0.0, %v487
        %v489 = vpop.f32.mrb[0].mxu0
        %v490 = vpop.f32.mrb[0].mxu0
        %v491 = vpop.f32.mrb[0].mxu0
        %492 = vdwg.mxu0
        %s493 = scalar_lea.vmem [#allocation2], 8
        %v494 = vld [vmem:[%s493] sm:$0xff]
        %v495 = vsel %vm302, %v488, -1e+30
        %v496 = vsel %vm306, %v495, -inf
        %497 = vmax.xlane.f32.xlu0 %v496
        %v498 = vpop.xlane.xlu0 %497
        %v499 = vmax.f32 %v494, %v498
        %v500 = vsub.f32 %v494, %v499
        %v501 = vmul.f32 %v500, 1.442695
        %v502 = vpow.pop %v501
        %504 = vset.pattern.permute.xlu0 0
        %505 = vperm.xlu0 %504, %v499
        %v506 = vpop.permute.xlu0 %505
        %v508 = vsub.f32 %v488, %v506
        %v509 = vmul.f32 %v508, 1.442695
        %v510 = vpow.pop %v509
        %v511 = vsel %vm302, %v510, 0.0
        %s512 = scalar_lea.vmem [#allocation3], 8
        %v513 = vld [vmem:[%s512] sm:$0xff]
        %v514 = vmul.f32 %v502, %v513
        %v515 = vsel %vm306, %v511, 0.0
        %516 = vadd.xlane.f32.xlu0 %v515
        %v517 = vpop.xlane.xlu0 %516
        %v518 = vadd.f32 %v514, %v517
        %519 = vst.msk [vmem:[%s512] sm:$0xff] %vm377, %v518
        %s520 = scalar_lea.vmem [#allocation4], 8
        %v521 = vld [vmem:[%s520] sm:$0xff]
        %523 = vset.pattern.permute.xlu0 0
        %524 = vperm.xlu0 %523, %v502
        %v525 = vpop.permute.xlu0 %524
        %v527 = vmul.f32 %v525, %v521
        %v528 = vpack.c.bf16 %v511, %v511
        %529 = vrot.lane.b32.xlu0 %v389, 88
        %v530 = vpop.permute.xlu0 %529
        %v532 = vsel %vm306, %v528, 0
        %v535 = vsel %vm395, %v530, 0
        %537 = vmatprep.subr.bf16.mxu0 0
        %538 = vmatpush1.bf16.msra.mxu0 %v535
        %539 = vmatprep.subr.bf16.mxu0 0
        %540 = vmatpush1.bf16.msra.mxu0 0
        %541 = vmatprep.subr.bf16.mxu0 0
        %542 = vmatpush1.bf16.msra.mxu0 0
        %543 = vmatprep.subr.bf16.mxu0 0
        %544 = vmatpush1.bf16.msra.mxu0 0
        %545 = vmatprep.subr.bf16.mxu0 0
        %546 = vmatpush1.bf16.msra.mxu0 0
        %547 = vmatprep.subr.bf16.mxu0 0
        %548 = vmatpush1.bf16.msra.mxu0 0
        %549 = vmatprep.subr.bf16.mxu0 0
        %550 = vmatpush1.bf16.msra.mxu0 0
        %551 = vmatprep.subr.bf16.mxu0 0
        %552 = vmatpush1.bf16.msra.mxu0 0
        %553 = vmatprep.subr.bf16.mxu0 0
        %554 = vmatpush1.bf16.msra.mxu0 0
        %555 = vmatprep.subr.bf16.mxu0 0
        %556 = vmatpush1.bf16.msra.mxu0 0
        %557 = vmatprep.subr.bf16.mxu0 0
        %558 = vmatpush1.bf16.msra.mxu0 0
        %559 = vmatprep.subr.bf16.mxu0 0
        %560 = vmatpush1.bf16.msra.mxu0 0
        %561 = vmatprep.subr.bf16.mxu0 0
        %562 = vmatpush1.bf16.msra.mxu0 0
        %563 = vmatprep.subr.bf16.mxu0 0
        %564 = vmatpush1.bf16.msra.mxu0 0
        %565 = vmatprep.subr.bf16.mxu0 0
        %566 = vmatpush1.bf16.msra.mxu0 0
        %567 = vmatprep.subr.bf16.mxu0 0
        %568 = vmatpush1.bf16.msra.mxu0 0
        %569 = vmatprep.mubr.bf16.mxu0 0
        %570 = vmatmul.mubr.bf16.gmra.mrb[0].mxu0 %v532
        %v571 = vpop.f32.mrb[0].mxu0
        %v572 = vadd.f32 0.0, %v571
        %v573 = vpop.f32.mrb[0].mxu0
        %v574 = vpop.f32.mrb[0].mxu0
        %v575 = vpop.f32.mrb[0].mxu0
        %576 = vdwg.mxu0
        %v577 = vadd.f32 %v527, %v572
        %578 = vst.msk [vmem:[%s520] sm:$0xff] %vm306, %v577
        %579 = vst.msk [vmem:[%s493] sm:$0xff] %vm377, %v499
        %580 = vrot.lane.b32.xlu0 %v305, 112
        %v581 = vpop.permute.xlu0 %580
        %582 = vrot.lane.b32.xlu0 %v389, 112
        %v583 = vpop.permute.xlu0 %582
        %v585 = vsel %vm306, %v581, 0
        %v588 = vsel %vm306, %v583, 0
        %590 = vmatprep.subr.bf16.mxu0 0
        %591 = vmatpush1.bf16.xpose.msra.mxu0 %v588
        %592 = vmatprep.subr.bf16.mxu0 0
        %593 = vmatpush1.bf16.xpose.msra.mxu0 0
        %594 = vmatprep.subr.bf16.mxu0 0
        %595 = vmatpush1.bf16.xpose.msra.mxu0 0
        %596 = vmatprep.subr.bf16.mxu0 0
        %597 = vmatpush1.bf16.xpose.msra.mxu0 0
        %598 = vmatprep.subr.bf16.mxu0 0
        %599 = vmatpush1.bf16.xpose.msra.mxu0 0
        %600 = vmatprep.subr.bf16.mxu0 0
        %601 = vmatpush1.bf16.xpose.msra.mxu0 0
        %602 = vmatprep.subr.bf16.mxu0 0
        %603 = vmatpush1.bf16.xpose.msra.mxu0 0
        %604 = vmatprep.subr.bf16.mxu0 0
        %605 = vmatpush1.bf16.xpose.msra.mxu0 0
        %606 = vmatprep.subr.bf16.mxu0 0
        %607 = vmatpush1.bf16.xpose.msra.mxu0 0
        %608 = vmatprep.subr.bf16.mxu0 0
        %609 = vmatpush1.bf16.xpose.msra.mxu0 0
        %610 = vmatprep.subr.bf16.mxu0 0
        %611 = vmatpush1.bf16.xpose.msra.mxu0 0
        %612 = vmatprep.subr.bf16.mxu0 0
        %613 = vmatpush1.bf16.xpose.msra.mxu0 0
        %614 = vmatprep.subr.bf16.mxu0 0
        %615 = vmatpush1.bf16.xpose.msra.mxu0 0
        %616 = vmatprep.subr.bf16.mxu0 0
        %617 = vmatpush1.bf16.xpose.msra.mxu0 0
        %618 = vmatprep.subr.bf16.mxu0 0
        %619 = vmatpush1.bf16.xpose.msra.mxu0 0
        %620 = vmatprep.subr.bf16.mxu0 0
        %621 = vmatpush1.bf16.xpose.msra.mxu0 0
        %622 = vmatprep.mubr.bf16.mxu0 0
        %623 = vmatmul.mubr.bf16.gmra.mrb[0].mxu0 %v585
        %v624 = vpop.f32.mrb[0].mxu0
        %v625 = vadd.f32 0.0, %v624
        %v626 = vpop.f32.mrb[0].mxu0
        %v627 = vpop.f32.mrb[0].mxu0
        %v628 = vpop.f32.mrb[0].mxu0
        %629 = vdwg.mxu0
        %s630 = scalar_lea.vmem [#allocation2], 16
        %v631 = vld [vmem:[%s630] sm:$0xff]
        %v632 = vsel %vm302, %v625, -1e+30
        %v633 = vsel %vm306, %v632, -inf
        %634 = vmax.xlane.f32.xlu0 %v633
        %v635 = vpop.xlane.xlu0 %634
        %v636 = vmax.f32 %v631, %v635
        %v637 = vsub.f32 %v631, %v636
        %v638 = vmul.f32 %v637, 1.442695
        %v639 = vpow.pop %v638
        %641 = vset.pattern.permute.xlu0 0
        %642 = vperm.xlu0 %641, %v636
        %v643 = vpop.permute.xlu0 %642
        %v645 = vsub.f32 %v625, %v643
        %v646 = vmul.f32 %v645, 1.442695
        %v647 = vpow.pop %v646
        %v648 = vsel %vm302, %v647, 0.0
        %s649 = scalar_lea.vmem [#allocation3], 16
        %v650 = vld [vmem:[%s649] sm:$0xff]
        %v651 = vmul.f32 %v639, %v650
        %v652 = vsel %vm306, %v648, 0.0
        %653 = vadd.xlane.f32.xlu0 %v652
        %v654 = vpop.xlane.xlu0 %653
        %v655 = vadd.f32 %v651, %v654
        %656 = vst.msk [vmem:[%s649] sm:$0xff] %vm377, %v655
        %s657 = scalar_lea.vmem [#allocation4], 16
        %v658 = vld [vmem:[%s657] sm:$0xff]
        %660 = vset.pattern.permute.xlu0 0
        %661 = vperm.xlu0 %660, %v639
        %v662 = vpop.permute.xlu0 %661
        %v664 = vmul.f32 %v662, %v658
        %v665 = vpack.c.bf16 %v648, %v648
        %666 = vrot.lane.b32.xlu0 %v389, 80
        %v667 = vpop.permute.xlu0 %666
        %v669 = vsel %vm306, %v665, 0
        %v672 = vsel %vm395, %v667, 0
        %674 = vmatprep.subr.bf16.mxu0 0
        %675 = vmatpush1.bf16.msra.mxu0 %v672
        %676 = vmatprep.subr.bf16.mxu0 0
        %677 = vmatpush1.bf16.msra.mxu0 0
        %678 = vmatprep.subr.bf16.mxu0 0
        %679 = vmatpush1.bf16.msra.mxu0 0
        %680 = vmatprep.subr.bf16.mxu0 0
        %681 = vmatpush1.bf16.msra.mxu0 0
        %682 = vmatprep.subr.bf16.mxu0 0
        %683 = vmatpush1.bf16.msra.mxu0 0
        %684 = vmatprep.subr.bf16.mxu0 0
        %685 = vmatpush1.bf16.msra.mxu0 0
        %686 = vmatprep.subr.bf16.mxu0 0
        %687 = vmatpush1.bf16.msra.mxu0 0
        %688 = vmatprep.subr.bf16.mxu0 0
        %689 = vmatpush1.bf16.msra.mxu0 0
        %690 = vmatprep.subr.bf16.mxu0 0
        %691 = vmatpush1.bf16.msra.mxu0 0
        %692 = vmatprep.subr.bf16.mxu0 0
        %693 = vmatpush1.bf16.msra.mxu0 0
        %694 = vmatprep.subr.bf16.mxu0 0
        %695 = vmatpush1.bf16.msra.mxu0 0
        %696 = vmatprep.subr.bf16.mxu0 0
        %697 = vmatpush1.bf16.msra.mxu0 0
        %698 = vmatprep.subr.bf16.mxu0 0
        %699 = vmatpush1.bf16.msra.mxu0 0
        %700 = vmatprep.subr.bf16.mxu0 0
        %701 = vmatpush1.bf16.msra.mxu0 0
        %702 = vmatprep.subr.bf16.mxu0 0
        %703 = vmatpush1.bf16.msra.mxu0 0
        %704 = vmatprep.subr.bf16.mxu0 0
        %705 = vmatpush1.bf16.msra.mxu0 0
        %706 = vmatprep.mubr.bf16.mxu0 0
        %707 = vmatmul.mubr.bf16.gmra.mrb[0].mxu0 %v669
        %v708 = vpop.f32.mrb[0].mxu0
        %v709 = vadd.f32 0.0, %v708
        %v710 = vpop.f32.mrb[0].mxu0
        %v711 = vpop.f32.mrb[0].mxu0
        %v712 = vpop.f32.mrb[0].mxu0
        %713 = vdwg.mxu0
        %v714 = vadd.f32 %v664, %v709
        %715 = vst.msk [vmem:[%s657] sm:$0xff] %vm306, %v714
        %716 = vst.msk [vmem:[%s630] sm:$0xff] %vm377, %v636
        %717 = vrot.lane.b32.xlu0 %v305, 104
        %v718 = vpop.permute.xlu0 %717
        %719 = vrot.lane.b32.xlu0 %v389, 104
        %v720 = vpop.permute.xlu0 %719
        %v722 = vsel %vm306, %v718, 0
        %v725 = vsel %vm306, %v720, 0
        %727 = vmatprep.subr.bf16.mxu0 0
        %728 = vmatpush1.bf16.xpose.msra.mxu0 %v725
        %729 = vmatprep.subr.bf16.mxu0 0
        %730 = vmatpush1.bf16.xpose.msra.mxu0 0
        %731 = vmatprep.subr.bf16.mxu0 0
        %732 = vmatpush1.bf16.xpose.msra.mxu0 0
        %733 = vmatprep.subr.bf16.mxu0 0
        %734 = vmatpush1.bf16.xpose.msra.mxu0 0
        %735 = vmatprep.subr.bf16.mxu0 0
        %736 = vmatpush1.bf16.xpose.msra.mxu0 0
        %737 = vmatprep.subr.bf16.mxu0 0
        %738 = vmatpush1.bf16.xpose.msra.mxu0 0
        %739 = vmatprep.subr.bf16.mxu0 0
        %740 = vmatpush1.bf16.xpose.msra.mxu0 0
        %741 = vmatprep.subr.bf16.mxu0 0
        %742 = vmatpush1.bf16.xpose.msra.mxu0 0
        %743 = vmatprep.subr.bf16.mxu0 0
        %744 = vmatpush1.bf16.xpose.msra.mxu0 0
        %745 = vmatprep.subr.bf16.mxu0 0
        %746 = vmatpush1.bf16.xpose.msra.mxu0 0
        %747 = vmatprep.subr.bf16.mxu0 0
        %748 = vmatpush1.bf16.xpose.msra.mxu0 0
        %749 = vmatprep.subr.bf16.mxu0 0
        %750 = vmatpush1.bf16.xpose.msra.mxu0 0
        %751 = vmatprep.subr.bf16.mxu0 0
        %752 = vmatpush1.bf16.xpose.msra.mxu0 0
        %753 = vmatprep.subr.bf16.mxu0 0
        %754 = vmatpush1.bf16.xpose.msra.mxu0 0
        %755 = vmatprep.subr.bf16.mxu0 0
        %756 = vmatpush1.bf16.xpose.msra.mxu0 0
        %757 = vmatprep.subr.bf16.mxu0 0
        %758 = vmatpush1.bf16.xpose.msra.mxu0 0
        %759 = vmatprep.mubr.bf16.mxu0 0
        %760 = vmatmul.mubr.bf16.gmra.mrb[0].mxu0 %v722
        %v761 = vpop.f32.mrb[0].mxu0
        %v762 = vadd.f32 0.0, %v761
        %v763 = vpop.f32.mrb[0].mxu0
        %v764 = vpop.f32.mrb[0].mxu0
        %v765 = vpop.f32.mrb[0].mxu0
        %766 = vdwg.mxu0
        %s767 = scalar_lea.vmem [#allocation2], 24
        %v768 = vld [vmem:[%s767] sm:$0xff]
        %v769 = vsel %vm302, %v762, -1e+30
        %v770 = vsel %vm306, %v769, -inf
        %771 = vmax.xlane.f32.xlu0 %v770
        %v772 = vpop.xlane.xlu0 %771
        %v773 = vmax.f32 %v768, %v772
        %v774 = vsub.f32 %v768, %v773
        %v775 = vmul.f32 %v774, 1.442695
        %v776 = vpow.pop %v775
        %778 = vset.pattern.permute.xlu0 0
        %779 = vperm.xlu0 %778, %v773
        %v780 = vpop.permute.xlu0 %779
        %v782 = vsub.f32 %v762, %v780
        %v783 = vmul.f32 %v782, 1.442695
        %v784 = vpow.pop %v783
        %v785 = vsel %vm302, %v784, 0.0
        %s786 = scalar_lea.vmem [#allocation3], 24
        %v787 = vld [vmem:[%s786] sm:$0xff]
        %v788 = vmul.f32 %v776, %v787
        %v789 = vsel %vm306, %v785, 0.0
        %790 = vadd.xlane.f32.xlu0 %v789
        %v791 = vpop.xlane.xlu0 %790
        %v792 = vadd.f32 %v788, %v791
        %793 = vst.msk [vmem:[%s786] sm:$0xff] %vm377, %v792
        %s794 = scalar_lea.vmem [#allocation4], 24
        %v795 = vld [vmem:[%s794] sm:$0xff]
        %797 = vset.pattern.permute.xlu0 0
        %798 = vperm.xlu0 %797, %v776
        %v799 = vpop.permute.xlu0 %798
        %v801 = vmul.f32 %v799, %v795
        %v802 = vpack.c.bf16 %v785, %v785
        %803 = vrot.lane.b32.xlu0 %v389, 72
        %v804 = vpop.permute.xlu0 %803
        %v806 = vsel %vm306, %v802, 0
        %v809 = vsel %vm395, %v804, 0
        %811 = vmatprep.subr.bf16.mxu0 0
        %812 = vmatpush1.bf16.msra.mxu0 %v809
        %813 = vmatprep.subr.bf16.mxu0 0
        %814 = vmatpush1.bf16.msra.mxu0 0
        %815 = vmatprep.subr.bf16.mxu0 0
        %816 = vmatpush1.bf16.msra.mxu0 0
        %817 = vmatprep.subr.bf16.mxu0 0
        %818 = vmatpush1.bf16.msra.mxu0 0
        %819 = vmatprep.subr.bf16.mxu0 0
        %820 = vmatpush1.bf16.msra.mxu0 0
        %821 = vmatprep.subr.bf16.mxu0 0
        %822 = vmatpush1.bf16.msra.mxu0 0
        %823 = vmatprep.subr.bf16.mxu0 0
        %824 = vmatpush1.bf16.msra.mxu0 0
        %825 = vmatprep.subr.bf16.mxu0 0
        %826 = vmatpush1.bf16.msra.mxu0 0
        %827 = vmatprep.subr.bf16.mxu0 0
        %828 = vmatpush1.bf16.msra.mxu0 0
        %829 = vmatprep.subr.bf16.mxu0 0
        %830 = vmatpush1.bf16.msra.mxu0 0
        %831 = vmatprep.subr.bf16.mxu0 0
        %832 = vmatpush1.bf16.msra.mxu0 0
        %833 = vmatprep.subr.bf16.mxu0 0
        %834 = vmatpush1.bf16.msra.mxu0 0
        %835 = vmatprep.subr.bf16.mxu0 0
        %836 = vmatpush1.bf16.msra.mxu0 0
        %837 = vmatprep.subr.bf16.mxu0 0
        %838 = vmatpush1.bf16.msra.mxu0 0
        %839 = vmatprep.subr.bf16.mxu0 0
        %840 = vmatpush1.bf16.msra.mxu0 0
        %841 = vmatprep.subr.bf16.mxu0 0
        %842 = vmatpush1.bf16.msra.mxu0 0
        %843 = vmatprep.mubr.bf16.mxu0 0
        %844 = vmatmul.mubr.bf16.gmra.mrb[0].mxu0 %v806
        %v845 = vpop.f32.mrb[0].mxu0
        %v846 = vadd.f32 0.0, %v845
        %v847 = vpop.f32.mrb[0].mxu0
        %v848 = vpop.f32.mrb[0].mxu0
        %v849 = vpop.f32.mrb[0].mxu0
        %850 = vdwg.mxu0
        %v851 = vadd.f32 %v801, %v846
        %852 = vst.msk [vmem:[%s794] sm:$0xff] %vm306, %v851
        %853 = vst.msk [vmem:[%s767] sm:$0xff] %vm377, %v773
      $region40: #{chat_model_forward.13} parent=31 // pred_fallthru
        _
      // Predicated region
      $region41: #{chat_model_forward.13} parent=31 // pred_check
        %p854 = pneg %p258
      $region42: #{chat_model_forward.13} parent=31 // pred_check_branch
        %856 = sbr.rel (%p854) target = $region44
      $region43: #{chat_model_forward.13} parent=31 // pred_region
        %v857 = vld [vmem:[#allocation3] sm:$0xff]
        %v858 = vrcp.pop %v857
        %vm859 = vcmp.gt.f32.partialorder %v857, 0.0
        %v860 = vld [vmem:[#allocation4] sm:$0xff]
        %862 = vset.pattern.permute.xlu0 0
        %863 = vperm.xlu0 %862, %v858
        %v864 = vpop.permute.xlu0 %863
        %v866 = vmul.f32 %v860, %v864
        %v867 = vsel %vm859, 1, 0
        %868 = vset.pattern.permute.xlu0 0
        %869 = vperm.xlu0 %868, %v867
        %v870 = vpop.permute.xlu0 %869
        %vm871 = vcmp.eq.s32.totalorder %v870, 1
        %v872 = vsel %vm871, %v866, 0.0
        %s873 = scalar_lea.vmem [#allocation3], 8
        %v874 = vld [vmem:[%s873] sm:$0xff]
        %v875 = vrcp.pop %v874
        %vm876 = vcmp.gt.f32.partialorder %v874, 0.0
        %s877 = scalar_lea.vmem [#allocation4], 8
        %v878 = vld [vmem:[%s877] sm:$0xff]
        %880 = vset.pattern.permute.xlu0 0
        %881 = vperm.xlu0 %880, %v875
        %v882 = vpop.permute.xlu0 %881
        %v884 = vmul.f32 %v878, %v882
        %v885 = vsel %vm876, 1, 0
        %886 = vset.pattern.permute.xlu0 0
        %887 = vperm.xlu0 %886, %v885
        %v888 = vpop.permute.xlu0 %887
        %vm889 = vcmp.eq.s32.totalorder %v888, 1
        %v890 = vsel %vm889, %v884, 0.0
        %s891 = scalar_lea.vmem [#allocation3], 16
        %v892 = vld [vmem:[%s891] sm:$0xff]
        %v893 = vrcp.pop %v892
        %vm894 = vcmp.gt.f32.partialorder %v892, 0.0
        %s895 = scalar_lea.vmem [#allocation4], 16
        %v896 = vld [vmem:[%s895] sm:$0xff]
        %898 = vset.pattern.permute.xlu0 0
        %899 = vperm.xlu0 %898, %v893
        %v900 = vpop.permute.xlu0 %899
        %v902 = vmul.f32 %v896, %v900
        %v903 = vsel %vm894, 1, 0
        %904 = vset.pattern.permute.xlu0 0
        %905 = vperm.xlu0 %904, %v903
        %v906 = vpop.permute.xlu0 %905
        %vm907 = vcmp.eq.s32.totalorder %v906, 1
        %v908 = vsel %vm907, %v902, 0.0
        %s909 = scalar_lea.vmem [#allocation3], 24
        %v910 = vld [vmem:[%s909] sm:$0xff]
        %v911 = vrcp.pop %v910
        %vm912 = vcmp.gt.f32.partialorder %v910, 0.0
        %s913 = scalar_lea.vmem [#allocation4], 24
        %v914 = vld [vmem:[%s913] sm:$0xff]
        %916 = vset.pattern.permute.xlu0 0
        %917 = vperm.xlu0 %916, %v911
        %v918 = vpop.permute.xlu0 %917
        %v920 = vmul.f32 %v914, %v918
        %v921 = vsel %vm912, 1, 0
        %922 = vset.pattern.permute.xlu0 0
        %923 = vperm.xlu0 %922, %v921
        %v924 = vpop.permute.xlu0 %923
        %vm925 = vcmp.eq.s32.totalorder %v924, 1
        %v926 = vsel %vm925, %v920, 0.0
        %928 = vrot.lane.b32.xlu0 %v890, 8
        %v929 = vpop.permute.xlu0 %928
        %932 = vrot.lane.b32.xlu0 %v908, 16
        %v933 = vpop.permute.xlu0 %932
        %936 = vrot.lane.b32.xlu0 %v926, 24
        %v937 = vpop.permute.xlu0 %936
        %vm939 = vcmask 64512
        %v940 = vsel %vm939, %v872, %v929
        %vm941 = vcmask 130048
        %v942 = vsel %vm941, %v940, %v933
        %vm943 = vcmask 195584
        %v944 = vsel %vm943, %v942, %v937
        %v945 = vpack.c.bf16 %v944, %v944
        %vm946 = vcmask 257024
        %947 = vst.msk [vmem:[%s256] sm:$0xf] %vm946, %v945
      $region44: #{chat_model_forward.13} parent=31 // pred_fallthru
        _
      %p948 = scmp.lt.s32.totalorder %s19, 1
      %s949 = scalar_select %p948, %s19, 1
      %p950 = scmp.lt.s32.totalorder %s20, 0
      %s951 = scalar_select %p950, %s20, 0
      %s952 = sadd.s32 %s951, %s949
      %s953 = smul.addr %s952, 4
      %s954 = scalar_lea.vmem %s3, %s953
      // Predicated region
      $region45: #{chat_model_forward.13} parent=31 // pred_check
        %p955 = pneg %p137
      $region46: #{chat_model_forward.13} parent=31 // pred_check_branch
        %957 = sbr.rel (%p955) target = $region48
      $region47: #{chat_model_forward.13} parent=31 // pred_region
        _
      $region48: #{chat_model_forward.13} parent=31 // pred_fallthru
        _
    $region32: #{chat_model_forward.13} parent=5 // pred_fallthru
      _
    %p958 = scmp.le.s32.totalorder 2, %s9
    // Predicated region
    $region49: #{chat_model_forward.13} parent=5 // pred_check
      %p959 = pneg %p958
    $region50: #{chat_model_forward.13} parent=5 // pred_check_branch
      %961 = sbr.rel (%p959) target = $region52
    $region51: #{chat_model_forward.13} parent=5 // pred_region
      %s962 = ssub.s32 %s9, 2
      // Predicated region
      $region53: #{chat_model_forward.13} parent=51 // pred_check
        %p963 = pneg %p143
      $region54: #{chat_model_forward.13} parent=51 // pred_check_branch
        %965 = sbr.rel (%p963) target = $region56
      $region55: #{chat_model_forward.13} parent=51 // pred_region
        %p966 = scmp.lt.s32.totalorder %s22, 1
        %s967 = scalar_select %p966, %s22, 1
        %p968 = scmp.lt.s32.totalorder %s23, 0
        %s969 = scalar_select %p968, %s23, 0
        %s970 = sadd.s32 %s969, %s967
        %s971 = smul.addr %s970, 4
        %s972 = scalar_lea.vmem %s3, %s971
      $region56: #{chat_model_forward.13} parent=51 // pred_fallthru
        _
    $region52: #{chat_model_forward.13} parent=5 // pred_fallthru
      _
  $region6: #{chat_model_forward.13} parent=0 // loop_footer
    %s13 = sadd.s32 1, %s9
  $region7: #{chat_model_forward.13} parent=0 // loop_footer_branch
    %8 = sbr.rel target = $region3
  $region8: #{chat_model_forward.13} parent=0 // loop_exit
    _

// kernel: chat_model_forward.22
$region0: #{chat_model_forward.22}
  #allocation0 [shape = 'u32[]', space=smem, size = 0x4, offset = 0x4, fixed_abs, tag = 'smem constant byte address 0x4 - core index']
  #allocation1 [shape = 'u32[144,128]{1,0:T(1,128)}', space=vmem, size = 0x12000, scoped, tag = 'internal scratch']
  %s0 = inlined_call_operand.vmem [shape: bf16[16,32], index: 0, kind: input, shape index: {}]
  %s1 = inlined_call_operand.vmem [shape: f32[1,32], index: 1, kind: input, shape index: {}]
  %s2 = inlined_call_operand.vmem [shape: f32[1,32], index: 2, kind: input, shape index: {}]
  %s3 = inlined_call_operand.vmem [shape: bf16[16,32], index: 3, kind: output, shape index: {}]
  %s4 = sld [smem:[#allocation0]]
  $region22: #{chat_model_forward.22} parent=0
    _
  %s6 = ssub.s32 1, %s4
  %s7 = scalar_select 0, %s6, %s4
  // Predicated region
  $region2: #{chat_model_forward.22} parent=0 // pred_check
    _
  $region3: #{chat_model_forward.22} parent=0 // pred_check_branch
    %9 = sbr.rel (0) target = $region5
  $region4: #{chat_model_forward.22} parent=0 // pred_region
    _
  $region5: #{chat_model_forward.22} parent=0 // pred_fallthru
    _
  // Predicated region
  $region6: #{chat_model_forward.22} parent=0 // pred_check
    _
  $region7: #{chat_model_forward.22} parent=0 // pred_check_branch
    %11 = sbr.rel (0) target = $region9
  $region8: #{chat_model_forward.22} parent=0 // pred_region
    _
  $region9: #{chat_model_forward.22} parent=0 // pred_fallthru
    _
  // Predicated region
  $region10: #{chat_model_forward.22} parent=0 // pred_check
    _
  $region11: #{chat_model_forward.22} parent=0 // pred_check_branch
    %13 = sbr.rel (0) target = $region13
  $region12: #{chat_model_forward.22} parent=0 // pred_region
    _
  $region13: #{chat_model_forward.22} parent=0 // pred_fallthru
    _
  %v14 = vld [vmem:[%s0] sm:$0xf]
  %v15 = vld [vmem:[%s0 + $0x4] sm:$0xf]
  %v16 = vunpack.c.l.bf16 %v14
  %v17 = vunpack.c.l.bf16 %v15
  %vm18 = vcmask 261120
  %v19 = vsel %vm18, %v16, 0.0
  %20 = vadd.xlane.f32.xlu0 %v19
  %v21 = vpop.xlane.xlu0 %20
  %v22 = vsel %vm18, %v17, 0.0
  %23 = vadd.xlane.f32.xlu0 %v22
  %v24 = vpop.xlane.xlu0 %23
  %v25 = vrcp.pop 32.0
  %v26 = vmul.f32 %v21, %v25
  %v27 = vmul.f32 %v24, %v25
  %v28 = vsub.f32 %v16, %v26
  %v29 = vsub.f32 %v17, %v27
  %v30 = vmul.f32 %v28, %v28
  %v31 = vmul.f32 %v29, %v29
  %v32 = vsel %vm18, %v30, 0.0
  %33 = vadd.xlane.f32.xlu0 %v32
  %v34 = vpop.xlane.xlu0 %33
  %v35 = vsel %vm18, %v31, 0.0
  %36 = vadd.xlane.f32.xlu0 %v35
  %v37 = vpop.xlane.xlu0 %36
  %v38 = vmul.f32 %v34, %v25
  %v39 = vmul.f32 %v37, %v25
  %v40 = vadd.f32 %v38, 1e-05
  %v41 = vadd.f32 %v39, 1e-05
  %v42 = vrsqrt.pop %v40
  %v43 = vrsqrt.pop %v41
  %v44 = vmul.f32 %v28, %v42
  %v45 = vmul.f32 %v29, %v43
  %v46 = vld [vmem:[%s1] sm:$0x1]
  %v48 = vlaneseq
  %v49 = vshrl.u32 %v48, 7
  %v50 = vsub.s32 0, %v49
  %v51 = vrot.slane %v46, %v50
  %v53 = vmul.f32 %v44, %v51
  %v54 = vmul.f32 %v45, %v51
  %v55 = vld [vmem:[%s2] sm:$0x1]
  %v57 = vlaneseq
  %v58 = vshrl.u32 %v57, 7
  %v59 = vsub.s32 0, %v58
  %v60 = vrot.slane %v55, %v59
  %v62 = vadd.f32 %v53, %v60
  %v63 = vadd.f32 %v54, %v60
  %v64 = vpack.c.bf16 %v63, %v62
  %v66 = vunpack.c.l.b16 %v64
  %v67 = vunpack.c.h.b16 %v64
  %v68 = vpack.c.b16 %v66, %v66
  %v69 = vpack.c.b16 %v67, %v67
  %vm72 = vcmask 257024
  %73 = vst.msk [vmem:[%s3] sm:$0xf] %vm72, %v68
  %74 = vst.msk [vmem:[%s3 + $0x4] sm:$0xf] %vm72, %v69
  // Predicated region
  $region14: #{chat_model_forward.22} parent=0 // pred_check
    _
  $region15: #{chat_model_forward.22} parent=0 // pred_check_branch
    %76 = sbr.rel (0) target = $region17
  $region16: #{chat_model_forward.22} parent=0 // pred_region
    _
  $region17: #{chat_model_forward.22} parent=0 // pred_fallthru
    _
  // Predicated region
  $region18: #{chat_model_forward.22} parent=0 // pred_check
    _
  $region19: #{chat_model_forward.22} parent=0 // pred_check_branch
    %78 = sbr.rel (0) target = $region21
  $region20: #{chat_model_forward.22} parent=0 // pred_region
    _
  $region21: #{chat_model_forward.22} parent=0 // pred_fallthru
    _

// kernel: chat_model_forward.16
$region0: #{chat_model_forward.16}
  #allocation0 [shape = 'u32[]', space=smem, size = 0x4, offset = 0x4, fixed_abs, tag = 'smem constant byte address 0x4 - core index']
  #allocation1 [shape = 'u32[144,128]{1,0:T(1,128)}', space=vmem, size = 0x12000, scoped, tag = 'internal scratch']
  %s0 = inlined_call_operand.vmem [shape: bf16[16,128], index: 0, kind: input, shape index: {}]
  %s1 = inlined_call_operand.vmem [shape: bf16[128,32], index: 1, kind: input, shape index: {}]
  %s2 = inlined_call_operand.vmem [shape: f32[1,32], index: 2, kind: input, shape index: {}]
  %s3 = inlined_call_operand.vmem [shape: bf16[16,32], index: 3, kind: input, shape index: {}]
  %s4 = inlined_call_operand.vmem [shape: bf16[16,32], index: 4, kind: output, shape index: {}]
  %s5 = sld [smem:[#allocation0]]
  $region26: #{chat_model_forward.16} parent=0
    _
  %s7 = ssub.s32 1, %s5
  %s8 = scalar_select 0, %s7, %s5
  // Predicated region
  $region2: #{chat_model_forward.16} parent=0 // pred_check
    _
  $region3: #{chat_model_forward.16} parent=0 // pred_check_branch
    %10 = sbr.rel (0) target = $region5
  $region4: #{chat_model_forward.16} parent=0 // pred_region
    _
  $region5: #{chat_model_forward.16} parent=0 // pred_fallthru
    _
  // Predicated region
  $region6: #{chat_model_forward.16} parent=0 // pred_check
    _
  $region7: #{chat_model_forward.16} parent=0 // pred_check_branch
    %12 = sbr.rel (0) target = $region9
  $region8: #{chat_model_forward.16} parent=0 // pred_region
    _
  $region9: #{chat_model_forward.16} parent=0 // pred_fallthru
    _
  // Predicated region
  $region10: #{chat_model_forward.16} parent=0 // pred_check
    _
  $region11: #{chat_model_forward.16} parent=0 // pred_check_branch
    %14 = sbr.rel (0) target = $region13
  $region12: #{chat_model_forward.16} parent=0 // pred_region
    _
  $region13: #{chat_model_forward.16} parent=0 // pred_fallthru
    _
  // Predicated region
  $region14: #{chat_model_forward.16} parent=0 // pred_check
    _
  $region15: #{chat_model_forward.16} parent=0 // pred_check_branch
    %16 = sbr.rel (0) target = $region17
  $region16: #{chat_model_forward.16} parent=0 // pred_region
    _
  $region17: #{chat_model_forward.16} parent=0 // pred_fallthru
    _
  %v18 = vld [vmem:[%s0] sm:$0xf]
  %v19 = vld [vmem:[%s0 + $0x4] sm:$0xf]
  %v20 = vld [vmem:[%s1] sm:$0xf]
  %v21 = vld [vmem:[%s1 + $0x4] sm:$0xf]
  %v22 = vld [vmem:[%s1 + $0x8] sm:$0xf]
  %v23 = vld [vmem:[%s1 + $0xc] sm:$0xf]
  %v24 = vld [vmem:[%s1 + $0x10] sm:$0xf]
  %v25 = vld [vmem:[%s1 + $0x14] sm:$0xf]
  %v26 = vld [vmem:[%s1 + $0x18] sm:$0xf]
  %v27 = vld [vmem:[%s1 + $0x1c] sm:$0xf]
  %v28 = vld [vmem:[%s1 + $0x20] sm:$0xf]
  %v29 = vld [vmem:[%s1 + $0x24] sm:$0xf]
  %v30 = vld [vmem:[%s1 + $0x28] sm:$0xf]
  %v31 = vld [vmem:[%s1 + $0x2c] sm:$0xf]
  %v32 = vld [vmem:[%s1 + $0x30] sm:$0xf]
  %v33 = vld [vmem:[%s1 + $0x34] sm:$0xf]
  %v34 = vld [vmem:[%s1 + $0x38] sm:$0xf]
  %v35 = vld [vmem:[%s1 + $0x3c] sm:$0xf]
  %v36 = vld [vmem:[%s2] sm:$0x1]
  %v38 = vlaneseq
  %v39 = vshrl.u32 %v38, 7
  %v40 = vsub.s32 0, %v39
  %v41 = vrot.slane %v36, %v40
  %v45 = vunpack.c.l.b16 %v18
  %v46 = vunpack.c.l.b16 %v19
  %v47 = vpack.c.b16 %v46, %v45
  %v65 = vunpack.c.l.b16 %v20
  %v66 = vunpack.c.l.b16 %v21
  %v67 = vunpack.c.l.b16 %v22
  %v68 = vunpack.c.l.b16 %v23
  %v69 = vunpack.c.l.b16 %v24
  %v70 = vunpack.c.l.b16 %v25
  %v71 = vunpack.c.l.b16 %v26
  %v72 = vunpack.c.l.b16 %v27
  %v73 = vunpack.c.l.b16 %v28
  %v74 = vunpack.c.l.b16 %v29
  %v75 = vunpack.c.l.b16 %v30
  %v76 = vunpack.c.l.b16 %v31
  %v77 = vunpack.c.l.b16 %v32
  %v78 = vunpack.c.l.b16 %v33
  %v79 = vunpack.c.l.b16 %v34
  %v80 = vunpack.c.l.b16 %v35
  %v81 = vpack.c.b16 %v66, %v65
  %v82 = vpack.c.b16 %v68, %v67
  %v83 = vpack.c.b16 %v70, %v69
  %v84 = vpack.c.b16 %v72, %v71
  %v85 = vpack.c.b16 %v74, %v73
  %v86 = vpack.c.b16 %v76, %v75
  %v87 = vpack.c.b16 %v78, %v77
  %v88 = vpack.c.b16 %v80, %v79
  %97 = vmatprep.subr.bf16.mxu0 0
  %98 = vmatpush1.bf16.msra.mxu0 %v81
  %99 = vmatprep.subr.bf16.mxu0 0
  %100 = vmatpush1.bf16.msra.mxu0 %v82
  %101 = vmatprep.subr.bf16.mxu0 0
  %102 = vmatpush1.bf16.msra.mxu0 %v83
  %103 = vmatprep.subr.bf16.mxu0 0
  %104 = vmatpush1.bf16.msra.mxu0 %v84
  %105 = vmatprep.subr.bf16.mxu0 0
  %106 = vmatpush1.bf16.msra.mxu0 %v85
  %107 = vmatprep.subr.bf16.mxu0 0
  %108 = vmatpush1.bf16.msra.mxu0 %v86
  %109 = vmatprep.subr.bf16.mxu0 0
  %110 = vmatpush1.bf16.msra.mxu0 %v87
  %111 = vmatprep.subr.bf16.mxu0 0
  %112 = vmatpush1.bf16.msra.mxu0 %v88
  %113 = vmatprep.subr.bf16.mxu0 0
  %114 = vmatpush1.bf16.msra.mxu0 0
  %115 = vmatprep.subr.bf16.mxu0 0
  %116 = vmatpush1.bf16.msra.mxu0 0
  %117 = vmatprep.subr.bf16.mxu0 0
  %118 = vmatpush1.bf16.msra.mxu0 0
  %119 = vmatprep.subr.bf16.mxu0 0
  %120 = vmatpush1.bf16.msra.mxu0 0
  %121 = vmatprep.subr.bf16.mxu0 0
  %122 = vmatpush1.bf16.msra.mxu0 0
  %123 = vmatprep.subr.bf16.mxu0 0
  %124 = vmatpush1.bf16.msra.mxu0 0
  %125 = vmatprep.subr.bf16.mxu0 0
  %126 = vmatpush1.bf16.msra.mxu0 0
  %127 = vmatprep.subr.bf16.mxu0 0
  %128 = vmatpush1.bf16.msra.mxu0 0
  %129 = vmatprep.mubr.bf16.mxu0 0
  %130 = vmatmul.mubr.bf16.gmra.mrb[0].mxu0 %v47
  %v131 = vpop.f32.mrb[0].mxu0
  %v132 = vadd.f32 %v41, %v131
  %v133 = vpop.f32.mrb[0].mxu0
  %v134 = vpop.f32.mrb[0].mxu0
  %v135 = vadd.f32 %v41, %v134
  %v136 = vpop.f32.mrb[0].mxu0
  %137 = vdwg.mxu0
  %v138 = vld [vmem:[%s3] sm:$0xf]
  %v139 = vld [vmem:[%s3 + $0x4] sm:$0xf]
  %v140 = vunpack.c.l.bf16 %v138
  %v141 = vunpack.c.l.bf16 %v139
  %v142 = vadd.f32 %v132, %v140
  %v143 = vadd.f32 %v135, %v141
  %v144 = vpack.c.bf16 %v143, %v142
  %v146 = vunpack.c.l.b16 %v144
  %v147 = vunpack.c.h.b16 %v144
  %v148 = vpack.c.b16 %v146, %v146
  %v149 = vpack.c.b16 %v147, %v147
  %vm152 = vcmask 257024
  %153 = vst.msk [vmem:[%s4] sm:$0xf] %vm152, %v148
  %154 = vst.msk [vmem:[%s4 + $0x4] sm:$0xf] %vm152, %v149
  // Predicated region
  $region18: #{chat_model_forward.16} parent=0 // pred_check
    _
  $region19: #{chat_model_forward.16} parent=0 // pred_check_branch
    %156 = sbr.rel (0) target = $region21
  $region20: #{chat_model_forward.16} parent=0 // pred_region
    _
  $region21: #{chat_model_forward.16} parent=0 // pred_fallthru
    _
  // Predicated region
  $region22: #{chat_model_forward.16} parent=0 // pred_check
    _
  $region23: #{chat_model_forward.16} parent=0 // pred_check_branch
    %158 = sbr.rel (0) target = $region25
  $region24: #{chat_model_forward.16} parent=0 // pred_region
    _
  $region25: #{chat_model_forward.16} parent=0 // pred_fallthru
    _

// kernel: chat_model_forward.23
$region0: #{chat_model_forward.23}
  #allocation0 [shape = 'u32[]', space=smem, size = 0x4, offset = 0x4, fixed_abs, tag = 'smem constant byte address 0x4 - core index']
  #allocation1 [shape = 'u32[144,128]{1,0:T(1,128)}', space=vmem, size = 0x12000, scoped, tag = 'internal scratch']
  %s0 = inlined_call_operand.vmem [shape: bf16[16,32], index: 0, kind: input, shape index: {}]
  %s1 = inlined_call_operand.vmem [shape: bf16[32,64], index: 1, kind: input, shape index: {}]
  %s2 = inlined_call_operand.hbm [shape: f32[16,64], index: 2, kind: output, shape index: {}]
  %s3 = sld [smem:[#allocation0]]
  $region18: #{chat_model_forward.23} parent=0
    _
  %s5 = ssub.s32 1, %s3
  %s6 = scalar_select 0, %s5, %s3
  $region1: #{chat_model_forward.23} parent=0
    #allocation2 [shape = 'u8[8192]{0}', space=vmem, size = 0x2000, scoped, tag = 'output window, operand 0, single buffered']
    #allocation3 [shape = 's32[1]{0}', space=sflag, size = 0x4, scoped, tag = 'scoped memory for chat_model_forward.23']
    %7 = vsyncpa [#allocation3], 0
    // Predicated region
    $region2: #{chat_model_forward.23} parent=1 // pred_check
      _
    $region3: #{chat_model_forward.23} parent=1 // pred_check_branch
      %9 = sbr.rel (0) target = $region5
    $region4: #{chat_model_forward.23} parent=1 // pred_region
      _
    $region5: #{chat_model_forward.23} parent=1 // pred_fallthru
      _
    // Predicated region
    $region6: #{chat_model_forward.23} parent=1 // pred_check
      _
    $region7: #{chat_model_forward.23} parent=1 // pred_check_branch
      %11 = sbr.rel (0) target = $region9
    $region8: #{chat_model_forward.23} parent=1 // pred_region
      _
    $region9: #{chat_model_forward.23} parent=1 // pred_fallthru
      _
    %v13 = vld [vmem:[%s0] sm:$0xf]
    %v14 = vld [vmem:[%s0 + $0x4] sm:$0xf]
    %v15 = vld [vmem:[%s1] sm:$0xf]
    %v16 = vld [vmem:[%s1 + $0x4] sm:$0xf]
    %v17 = vld [vmem:[%s1 + $0x8] sm:$0xf]
    %v18 = vld [vmem:[%s1 + $0xc] sm:$0xf]
    %v21 = vunpack.c.l.b16 %v13
    %v22 = vunpack.c.l.b16 %v14
    %v23 = vpack.c.b16 %v22, %v21
    %v28 = vunpack.c.l.b16 %v15
    %v29 = vunpack.c.l.b16 %v16
    %v30 = vunpack.c.l.b16 %v17
    %v31 = vunpack.c.l.b16 %v18
    %v32 = vpack.c.b16 %v29, %v28
    %v33 = vpack.c.b16 %v31, %v30
    %vm36 = vcmask 261120
    %v38 = vsel %vm36, %v23, 0
    %40 = vmatprep.subr.bf16.mxu0 0
    %41 = vmatpush1.bf16.msra.mxu0 %v32
    %42 = vmatprep.subr.bf16.mxu0 0
    %43 = vmatpush1.bf16.msra.mxu0 %v33
    %44 = vmatprep.subr.bf16.mxu0 0
    %45 = vmatpush1.bf16.msra.mxu0 0
    %46 = vmatprep.subr.bf16.mxu0 0
    %47 = vmatpush1.bf16.msra.mxu0 0
    %48 = vmatprep.subr.bf16.mxu0 0
    %49 = vmatpush1.bf16.msra.mxu0 0
    %50 = vmatprep.subr.bf16.mxu0 0
    %51 = vmatpush1.bf16.msra.mxu0 0
    %52 = vmatprep.subr.bf16.mxu0 0
    %53 = vmatpush1.bf16.msra.mxu0 0
    %54 = vmatprep.subr.bf16.mxu0 0
    %55 = vmatpush1.bf16.msra.mxu0 0
    %56 = vmatprep.subr.bf16.mxu0 0
    %57 = vmatpush1.bf16.msra.mxu0 0
    %58 = vmatprep.subr.bf16.mxu0 0
    %59 = vmatpush1.bf16.msra.mxu0 0
    %60 = vmatprep.subr.bf16.mxu0 0
    %61 = vmatpush1.bf16.msra.mxu0 0
    %62 = vmatprep.subr.bf16.mxu0 0
    %63 = vmatpush1.bf16.msra.mxu0 0
    %64 = vmatprep.subr.bf16.mxu0 0
    %65 = vmatpush1.bf16.msra.mxu0 0
    %66 = vmatprep.subr.bf16.mxu0 0
    %67 = vmatpush1.bf16.msra.mxu0 0
    %68 = vmatprep.subr.bf16.mxu0 0
    %69 = vmatpush1.bf16.msra.mxu0 0
    %70 = vmatprep.subr.bf16.mxu0 0
    %71 = vmatpush1.bf16.msra.mxu0 0
    %72 = vmatprep.mubr.bf16.mxu0 0
    %73 = vmatmul.mubr.bf16.gmra.mrb[0].mxu0 %v38
    %v74 = vpop.f32.mrb[0].mxu0
    %v75 = vadd.f32 0.0, %v74
    %v76 = vpop.f32.mrb[0].mxu0
    %v77 = vpop.f32.mrb[0].mxu0
    %v78 = vadd.f32 0.0, %v77
    %v79 = vpop.f32.mrb[0].mxu0
    %80 = vdwg.mxu0
    %vm81 = vcmask 523264
    %82 = vst.msk [vmem:[#allocation2] sm:$0xff] %vm81, %v75
    %83 = vst.msk [vmem:[#allocation2 + $0x8] sm:$0xff] %vm81, %v78
    // Predicated region
    $region10: #{chat_model_forward.23} parent=1 // pred_check
      _
    $region11: #{chat_model_forward.23} parent=1 // pred_check_branch
      %85 = sbr.rel (0) target = $region13
    $region12: #{chat_model_forward.23} parent=1 // pred_region
      %s87 = ssub.s32 256, 256
      %88 = vsyncadd [#allocation3], %s87
      %s89 = sshll.u32 [#allocation2], 4
      %s90 = int_to_ptr.vmem [resolvable:$true] %s89
      %95 = dma.vmem_to_hbm [thread:$0]  %s90, 256, %s2, [#allocation3], 128, 128, 8
    $region13: #{chat_model_forward.23} parent=1 // pred_fallthru
      _
    // Predicated region
    $region14: #{chat_model_forward.23} parent=1 // pred_check
      _
    $region15: #{chat_model_forward.23} parent=1 // pred_check_branch
      %97 = sbr.rel (0) target = $region17
    $region16: #{chat_model_forward.23} parent=1 // pred_region
      %98 = dma.done [#allocation3], 256
    $region17: #{chat_model_forward.23} parent=1 // pred_fallthru
      _
    %99 = vsyncpa [#allocation3], 1

</llo_original>
